<compile_context>
chip_gen: v6e
topology: v6e:2x2x1
jax: 0.10.0
libtpu: 0.0.40
codegen_flags: <defaults>
</compile_context>

<pallas_src>
import functools

import jax
import jax.numpy as jnp
from jax.experimental import pallas as pl
from jax.experimental.pallas import tpu as pltpu

BN_EPS = 1e-5
MXU_DTYPE = jnp.bfloat16   # MXU operands + HBM intermediates; accumulation/BN stats stay f32.


# --------------------------------------------------------------------------- #
# Pallas kernels
# --------------------------------------------------------------------------- #
def _conv3x3_stats_kernel(*refs, taps, proj, tr, wo, with_proj):
    """Row-tiled 3x3 conv (9 shifted MXU matmuls) + per-tile channel sum/sum-sq.

    Optionally also computes the fused 1x1 projection shortcut (+ its stats)
    from the same phase data already resident in VMEM.
    """
    if with_proj:
        ph_ref, w_ref, ws_ref, y_ref, st_ref, sc_ref, sct_ref = refs
    else:
        ph_ref, w_ref, y_ref, st_ref = refs

    cin = ph_ref.shape[-1]
    cout = y_ref.shape[-1]
    mt = tr * wo
    row_lo = pl.program_id(1) * tr          # first output row of this tile

    def tap_slice(p, dh, dw):
        # (tr, wo, cin) window of phase p, flattened to (tr*wo, cin) bf16.
        return ph_ref[p, pl.ds(row_lo + dh, tr), dw:dw + wo, :].reshape(mt, cin)

    acc = jnp.zeros((mt, cout), jnp.float32)
    for t, (p, dh, dw) in enumerate(taps):
        acc = acc + jnp.dot(tap_slice(p, dh, dw), w_ref[t],
                            preferred_element_type=jnp.float32)

    y_ref[0] = acc.astype(y_ref.dtype)      # bf16 store; stats taken from f32 acc
    zpad = jnp.zeros((6, cout), jnp.float32)
    st_ref[0] = jnp.concatenate(
        [jnp.sum(acc, axis=0, keepdims=True),
         jnp.sum(acc * acc, axis=0, keepdims=True),
         zpad], axis=0)

    if with_proj:
        p, dh, dw = proj
        sc = jnp.dot(tap_slice(p, dh, dw), ws_ref[...],
                     preferred_element_type=jnp.float32)
        sc_ref[0] = sc.astype(sc_ref.dtype)
        sct_ref[0] = jnp.concatenate(
            [jnp.sum(sc, axis=0, keepdims=True),
             jnp.sum(sc * sc, axis=0, keepdims=True),
             zpad], axis=0)


def _bn_relu_pad_kernel(y_ref, sc_ref, sh_ref, o_ref, *, ho, wo):
    """BN1 + ReLU fused with the spatial zero-pad conv2 needs.

    Output block is the full padded image; halo rows/cols are explicitly zeroed
    so the BN shift never leaks into the conv padding.
    """
    c = y_ref.shape[-1]
    y = y_ref[0].reshape(ho, wo, c).astype(jnp.float32)
    v = jnp.maximum(y * sc_ref[...] + sh_ref[...], 0.0).astype(o_ref.dtype)
    o_ref[...] = jnp.zeros_like(o_ref)            # zero halo
    o_ref[0, 1:1 + ho, 1:1 + wo, :] = v           # BN+ReLU interior


def _bn_add_relu_kernel(y_ref, r_ref, s2_ref, h2_ref, sr_ref, hr_ref, o_ref):
    # Final epilogue: BN2(y) + BN_sc(residual), ReLU.  bf16 in / bf16 out, f32 math.
    y = y_ref[...].astype(jnp.float32) * s2_ref[...] + h2_ref[...]
    r = r_ref[...].astype(jnp.float32) * sr_ref[...] + hr_ref[...]
    o_ref[...] = jnp.maximum(y + r, 0.0).astype(o_ref.dtype)


# --------------------------------------------------------------------------- #
# pallas_call wrappers
# --------------------------------------------------------------------------- #
def _pick_row_tile(ho, wo, target=512):
    """Largest divisor row-tile of ho with tr*wo <= target and 8-aligned rows."""
    if ho * wo <= target:
        return ho
    best = ho
    for tr in range(1, ho):
        if ho % tr == 0 and (tr * wo) % 8 == 0 and tr * wo <= target:
            best = tr
    return best


def _conv3x3_call(phases, w, stride, ho, wo, cout_p, ws=None):
    """phases: (N*stride^2, Hph, Wph, Cin_p) bf16; w: (9, Cin_p, Cout_p) bf16."""
    n_phase = stride * stride
    n_total, hph, wph, cin_p = phases.shape
    n = n_total // n_phase
    tr = _pick_row_tile(ho, wo)
    n_rt = ho // tr

    taps = tuple(((kh % stride) * stride + (kw % stride), kh // stride, kw // stride)
                 for kh in range(3) for kw in range(3))
    proj = ((1 % stride) * stride + (1 % stride), 1 // stride, 1 // stride)
    with_proj = ws is not None

    kern = functools.partial(_conv3x3_stats_kernel, taps=taps, proj=proj,
                             tr=tr, wo=wo, with_proj=with_proj)

    ph_spec = pl.BlockSpec((n_phase, hph, wph, cin_p), lambda i, r: (i, 0, 0, 0))
    w_spec = pl.BlockSpec((9, cin_p, cout_p), lambda i, r: (0, 0, 0))
    y_spec = pl.BlockSpec((1, tr * wo, cout_p), lambda i, r: (i, r, 0))
    st_spec = pl.BlockSpec((1, 8, cout_p), lambda i, r: (i * n_rt + r, 0, 0))

    in_specs = [ph_spec, w_spec]
    args = [phases, w]
    out_shape = [jax.ShapeDtypeStruct((n, ho * wo, cout_p), MXU_DTYPE),
                 jax.ShapeDtypeStruct((n * n_rt, 8, cout_p), jnp.float32)]
    out_specs = [y_spec, st_spec]
    if with_proj:
        in_specs.append(pl.BlockSpec((cin_p, cout_p), lambda i, r: (0, 0)))
        args.append(ws)
        out_shape += [jax.ShapeDtypeStruct((n, ho * wo, cout_p), MXU_DTYPE),
                      jax.ShapeDtypeStruct((n * n_rt, 8, cout_p), jnp.float32)]
        out_specs += [y_spec, st_spec]

    return pl.pallas_call(
        kern,
        out_shape=tuple(out_shape),
        grid=(n, n_rt),
        in_specs=in_specs,
        out_specs=tuple(out_specs),
        compiler_params=pltpu.CompilerParams(
            dimension_semantics=("parallel", "parallel")),
    )(*args)


def _bn_relu_pad_call(y_raw, scale, shift, ho, wo):
    """(n, ho*wo, C) bf16 -> (n, ho+2, wo+2, C) bf16 padded image (BN+ReLU interior)."""
    n, _, c = y_raw.shape
    kern = functools.partial(_bn_relu_pad_kernel, ho=ho, wo=wo)
    return pl.pallas_call(
        kern,
        out_shape=jax.ShapeDtypeStruct((n, ho + 2, wo + 2, c), MXU_DTYPE),
        grid=(n,),
        in_specs=[pl.BlockSpec((1, ho * wo, c), lambda i: (i, 0, 0)),
                  pl.BlockSpec((1, c), lambda i: (0, 0)),
                  pl.BlockSpec((1, c), lambda i: (0, 0))],
        out_specs=pl.BlockSpec((1, ho + 2, wo + 2, c), lambda i: (i, 0, 0, 0)),
        compiler_params=pltpu.CompilerParams(dimension_semantics=("parallel",)),
    )(y_raw, scale, shift)


def _bn_add_relu_call(y_raw, res, s2, h2, sr, hr):
    m, c = y_raw.shape
    tm = min(1024, m)                       # large lane/row-dense tiles, ragged tail masked
    row = pl.BlockSpec((tm, c), lambda i: (i, 0))
    vec = pl.BlockSpec((1, c), lambda i: (0, 0))
    return pl.pallas_call(
        _bn_add_relu_kernel,
        out_shape=jax.ShapeDtypeStruct((m, c), MXU_DTYPE),
        grid=(pl.cdiv(m, tm),),
        in_specs=[row, row, vec, vec, vec, vec],
        out_specs=row,
        compiler_params=pltpu.CompilerParams(dimension_semantics=("parallel",)),
    )(y_raw, res, s2, h2, sr, hr)


# --------------------------------------------------------------------------- #
# JAX glue (layout plumbing only -- no heavy compute here)
# --------------------------------------------------------------------------- #
def _rup128(c):
    return ((c + 127) // 128) * 128


def _pad_vec(v, cp):
    return jnp.pad(v, (0, cp - v.shape[0])).astype(jnp.float32)


def _w3x3_mat(w, cin_p, cout_p):
    cout, cin = w.shape[0], w.shape[1]
    wt = jnp.transpose(w, (2, 3, 1, 0)).reshape(9, cin, cout)     # tap = kh*3+kw
    wt = jnp.pad(wt, ((0, 0), (0, cin_p - cin), (0, cout_p - cout)))
    return wt.astype(MXU_DTYPE)


def _w1x1_mat(w, cin_p, cout_p):
    cout, cin = w.shape[0], w.shape[1]
    wt = jnp.transpose(w[:, :, 0, 0], (1, 0))
    wt = jnp.pad(wt, ((0, cin_p - cin), (0, cout_p - cout)))
    return wt.astype(MXU_DTYPE)


def _make_phases(x_nhwc, stride, ho, wo):
    """Polyphase decomposition of the zero-padded (pad=1) input.

    Returns (N*stride*stride, Hph, Wph, C): tap (kh, kw) of the conv reads
    phase (kh%stride, kw%stride) at offset (kh//stride, kw//stride).
    """
    n, h, w, c = x_nhwc.shape
    off = 2 // stride
    hph, wph = ho + off, wo + off
    hext, wext = stride * hph, stride * wph       # every phase slice stays in-bounds
    xp = jnp.zeros((n, hext, wext, c), x_nhwc.dtype)
    xp = xp.at[:, 1:1 + h, 1:1 + w, :].set(x_nhwc)
    phases = []
    for pa in range(stride):
        for pb in range(stride):
            phases.append(xp[:, pa::stride, pb::stride, :][:, :hph, :wph, :])
    return jnp.stack(phases, axis=1).reshape(n * stride * stride, hph, wph, c)


def _bn_scale_shift(stats, m, gamma, beta):
    """stats: (tiles, 8, Cp) with row0=sum, row1=sum_sq -> per-channel scale/shift."""
    s = jnp.sum(stats[:, 0, :], axis=0)
    ss = jnp.sum(stats[:, 1, :], axis=0)
    mean = s / m
    var = jnp.maximum(ss / m - mean * mean, 0.0)   # f32, clamped
    scale = gamma * jax.lax.rsqrt(var + BN_EPS)
    shift = beta - mean * scale
    return scale[None, :].astype(jnp.float32), shift[None, :].astype(jnp.float32)


def init_basic_block_params(key, in_channels, out_channels, stride):
    ks = jax.random.split(key, 8)
    p = {
        "w1": 0.1 * jax.random.normal(ks[0], (out_channels, in_channels, 3, 3), jnp.float32),
        "g1": jax.random.uniform(ks[1], (out_channels,), jnp.float32, 0.5, 1.5),
        "b1": 0.1 * jax.random.normal(ks[2], (out_channels,), jnp.float32),
        "w2": 0.1 * jax.random.normal(ks[3], (out_channels, out_channels, 3, 3), jnp.float32),
        "g2": jax.random.uniform(ks[4], (out_channels,), jnp.float32, 0.5, 1.5),
        "b2": 0.1 * jax.random.normal(ks[5], (out_channels,), jnp.float32),
    }
    if stride != 1 or in_channels != out_channels:
        p["ws"] = 0.1 * jax.random.normal(ks[6], (out_channels, in_channels, 1, 1), jnp.float32)
        p["gs"] = jax.random.uniform(ks[7], (out_channels,), jnp.float32, 0.5, 1.5)
        p["bs"] = jnp.zeros((out_channels,), jnp.float32)
    return p


def basic_block_forward_nhwc(x_nhwc, params, *, stride):
    """BasicBlock.forward with NHWC, channel-padded, bf16 inter-block interface.

    Accepts (N, H, W, Cin) or (N, H, W, Cin_p); returns (N, Ho, Wo, Cout_p) bf16.
    """
    cin = params["w1"].shape[1]
    cout = params["w1"].shape[0]
    cin_p, cout_p = _rup128(cin), _rup128(cout)
    n, h, w, cx = x_nhwc.shape
    has_proj = (stride != 1) or (cin != cout)

    ho = (h - 1) // stride + 1
    wo = (w - 1) // stride + 1
    m = n * ho * wo

    x = x_nhwc
    if cx < cin_p:
        x = jnp.pad(x, ((0, 0), (0, 0), (0, 0), (0, cin_p - cx)))
    x = x.astype(MXU_DTYPE)

    # conv1 input: zero-pad + polyphase restack (XLA, one pass over x).
    ph1 = _make_phases(x, stride, ho, wo)
    w1 = _w3x3_mat(params["w1"], cin_p, cout_p)

    # conv1 (+ fused 1x1 projection shortcut when present) + BN stats.
    if has_proj:
        ws = _w1x1_mat(params["ws"], cin_p, cout_p)
        y1_raw, st1, scut_raw, stsc = _conv3x3_call(ph1, w1, stride, ho, wo, cout_p, ws=ws)
    else:
        y1_raw, st1 = _conv3x3_call(ph1, w1, stride, ho, wo, cout_p)

    sc1, sh1 = _bn_scale_shift(st1, m, _pad_vec(params["g1"], cout_p),
                               _pad_vec(params["b1"], cout_p))

    # BN1 + ReLU fused with conv2's spatial zero-pad (no XLA pad pass over y1).
    y1_pad = _bn_relu_pad_call(y1_raw, sc1, sh1, ho, wo)

    # conv2 (3x3, stride 1) consumes the padded image directly as its single phase.
    w2 = _w3x3_mat(params["w2"], cout_p, cout_p)
    y2_raw, st2 = _conv3x3_call(y1_pad, w2, 1, ho, wo, cout_p)
    sc2, sh2 = _bn_scale_shift(st2, m, _pad_vec(params["g2"], cout_p),
                               _pad_vec(params["b2"], cout_p))

    # Residual branch: projection conv output (BN in final epilogue) or identity.
    if has_proj:
        scr, shr = _bn_scale_shift(stsc, m, _pad_vec(params["gs"], cout_p),
                                   _pad_vec(params["bs"], cout_p))
        res = scut_raw.reshape(m, cout_p)
    else:
        res = x.reshape(m, cout_p)           # identity (bf16; cin_p == cout_p here)
        scr = jnp.ones((1, cout_p), jnp.float32)
        shr = jnp.zeros((1, cout_p), jnp.float32)

    out = _bn_add_relu_call(y2_raw.reshape(m, cout_p), res, sc2, sh2, scr, shr)
    return out.reshape(n, ho, wo, cout_p)


def basic_block_forward(x_nchw, params, *, stride):
    """NCHW f32 wrapper (layout conversion done once, e.g. at network boundary)."""
    cout = params["w1"].shape[0]
    x = jnp.transpose(x_nchw, (0, 2, 3, 1)).astype(jnp.float32)     # -> NHWC
    out = basic_block_forward_nhwc(x, params, stride=stride)
    out = out[..., :cout].astype(jnp.float32)
    return jnp.transpose(out, (0, 3, 1, 2))                         # -> NCHW


# --------------------------------------------------------------------------- #
# Pure-JAX reference (f32) for a correctness sanity check.
# --------------------------------------------------------------------------- #
def _ref_basic_block(x_nchw, params, stride):
    def conv(x, w, s, pad):
        return jax.lax.conv_general_dilated(
            x, w, window_strides=(s, s), padding=((pad, pad), (pad, pad)),
            dimension_numbers=("NCHW", "OIHW", "NCHW"))

    def bn(y, g, b):
        mu = jnp.mean(y, axis=(0, 2, 3), keepdims=True)
        var = jnp.mean((y - mu) ** 2, axis=(0, 2, 3), keepdims=True)
        return ((y - mu) * jax.lax.rsqrt(var + BN_EPS)
                * g[None, :, None, None] + b[None, :, None, None])

    out = jax.nn.relu(bn(conv(x_nchw, params["w1"], stride, 1), params["g1"], params["b1"]))
    out = bn(conv(out, params["w2"], 1, 1), params["g2"], params["b2"])
    if "ws" in params:
        shortcut = bn(conv(x_nchw, params["ws"], stride, 0), params["gs"], params["bs"])
    else:
        shortcut = x_nchw
    return jax.nn.relu(out + shortcut)


if __name__ == "__main__":
    key = jax.random.PRNGKey(0)
    kx, kp1, kp2 = jax.random.split(key, 3)

    x = jax.random.normal(kx, (2, 4, 16, 16), jnp.float32)   # NCHW, like PyTorch

    # Case 1: downsampling block (stride=2, 4 -> 8 channels, conv shortcut).
    params_ds = init_basic_block_params(kp1, 4, 8, stride=2)
    fwd_ds = jax.jit(functools.partial(basic_block_forward, stride=2))
    out_ds = jax.block_until_ready(fwd_ds(x, params_ds))
    assert out_ds.shape == (2, 8, 8, 8)
    ref_ds = _ref_basic_block(x, params_ds, 2)
    # loose tolerance: bf16 MXU operands + bf16 HBM intermediates by design
    assert float(jnp.max(jnp.abs(out_ds - ref_ds))) < 2.5e-1

    # Case 2: identity-shortcut block (stride=1, 4 -> 4 channels).
    params_id = init_basic_block_params(kp2, 4, 4, stride=1)
    fwd_id = jax.jit(functools.partial(basic_block_forward, stride=1))
    out_id = jax.block_until_ready(fwd_id(x, params_id))
    assert out_id.shape == (2, 4, 16, 16)
    ref_id = _ref_basic_block(x, params_id, 1)
    assert float(jnp.max(jnp.abs(out_id - ref_id))) < 2.5e-1

    print("KERNEL_OK")
</pallas_src>

<mosaic_0001>
module attributes {stable_mosaic.version = 11 : i64} {
  func.func @_conv3x3_stats_kernel(%arg0: i32, %arg1: i32, %arg2: memref<4x9x9x128xbf16, #tpu.memory_space<vmem>>, %arg3: memref<9x128x128xbf16, #tpu.memory_space<vmem>>, %arg4: memref<128x128xbf16, #tpu.memory_space<vmem>>, %arg5: memref<1x64x128xbf16, #tpu.memory_space<vmem>>, %arg6: memref<1x8x128xf32, #tpu.memory_space<vmem>>, %arg7: memref<1x64x128xbf16, #tpu.memory_space<vmem>>, %arg8: memref<1x8x128xf32, #tpu.memory_space<vmem>>) attributes {dimension_semantics = [#tpu.dimension_semantics<parallel>, #tpu.dimension_semantics<parallel>], iteration_bounds = array<i64: 2, 1>, scalar_prefetch = 0 : i64, scratch_operands = 0 : i64, tpu.core_type = #tpu.core_type<tc>, window_params = [{transform_indices = @transform_0, window_bounds = array<i64: 4, 9, 9, 128>}, {pipeline_mode = #tpu.pipeline_mode<synchronous>, transform_indices = @transform_1, window_bounds = array<i64: 9, 128, 128>}, {pipeline_mode = #tpu.pipeline_mode<synchronous>, transform_indices = @transform_2, window_bounds = array<i64: 128, 128>}, {transform_indices = @transform_3, window_bounds = array<i64: 1, 64, 128>}, {transform_indices = @transform_4, window_bounds = array<i64: 1, 8, 128>}, {transform_indices = @transform_5, window_bounds = array<i64: 1, 64, 128>}, {transform_indices = @transform_6, window_bounds = array<i64: 1, 8, 128>}]} {
    %c8_i32 = arith.constant 8 : i32
    %0 = arith.muli %arg1, %c8_i32 : i32
    %cst = arith.constant 0.000000e+00 : f32
    %1 = vector.broadcast %cst : f32 to vector<64x128xf32>
    %c0_i32 = arith.constant 0 : i32
    %2 = arith.addi %0, %c0_i32 : i32
    %c0 = arith.constant 0 : index
    %3 = arith.index_cast %2 : i32 to index
    %c0_0 = arith.constant 0 : index
    %c0_1 = arith.constant 0 : index
    %4 = vector.load %arg2[%c0, %3, %c0_0, %c0_1] : memref<4x9x9x128xbf16, #tpu.memory_space<vmem>>, vector<1x8x8x128xbf16>
    %5 = vector.shape_cast %4 : vector<1x8x8x128xbf16> to vector<8x8x128xbf16>
    %6 = vector.shape_cast %5 : vector<8x8x128xbf16> to vector<64x128xbf16>
    %c0_2 = arith.constant 0 : index
    %c0_3 = arith.constant 0 : index
    %c0_4 = arith.constant 0 : index
    %7 = vector.load %arg3[%c0_2, %c0_3, %c0_4] : memref<9x128x128xbf16, #tpu.memory_space<vmem>>, vector<1x128x128xbf16>
    %8 = vector.shape_cast %7 : vector<1x128x128xbf16> to vector<128x128xbf16>
    %cst_5 = arith.constant dense<0.000000e+00> : vector<64x128xf32>
    %9 = tpu.matmul %6, %8, %cst_5 {dimension_numbers = #tpu.dot_dimension_numbers<[1], [0], [0], [1], [0, 0, 1, 1], [], []>} : vector<64x128xbf16>, vector<128x128xbf16>, vector<64x128xf32> -> vector<64x128xf32>
    %10 = arith.addf %1, %9 : vector<64x128xf32>
    %c0_i32_6 = arith.constant 0 : i32
    %11 = arith.addi %0, %c0_i32_6 : i32
    %c1 = arith.constant 1 : index
    %12 = arith.index_cast %11 : i32 to index
    %c0_7 = arith.constant 0 : index
    %c0_8 = arith.constant 0 : index
    %13 = vector.load %arg2[%c1, %12, %c0_7, %c0_8] : memref<4x9x9x128xbf16, #tpu.memory_space<vmem>>, vector<1x8x8x128xbf16>
    %14 = vector.shape_cast %13 : vector<1x8x8x128xbf16> to vector<8x8x128xbf16>
    %15 = vector.shape_cast %14 : vector<8x8x128xbf16> to vector<64x128xbf16>
    %c1_9 = arith.constant 1 : index
    %c0_10 = arith.constant 0 : index
    %c0_11 = arith.constant 0 : index
    %16 = vector.load %arg3[%c1_9, %c0_10, %c0_11] : memref<9x128x128xbf16, #tpu.memory_space<vmem>>, vector<1x128x128xbf16>
    %17 = vector.shape_cast %16 : vector<1x128x128xbf16> to vector<128x128xbf16>
    %cst_12 = arith.constant dense<0.000000e+00> : vector<64x128xf32>
    %18 = tpu.matmul %15, %17, %cst_12 {dimension_numbers = #tpu.dot_dimension_numbers<[1], [0], [0], [1], [0, 0, 1, 1], [], []>} : vector<64x128xbf16>, vector<128x128xbf16>, vector<64x128xf32> -> vector<64x128xf32>
    %19 = arith.addf %10, %18 : vector<64x128xf32>
    %c0_i32_13 = arith.constant 0 : i32
    %20 = arith.addi %0, %c0_i32_13 : i32
    %c0_14 = arith.constant 0 : index
    %21 = arith.index_cast %20 : i32 to index
    %c1_15 = arith.constant 1 : index
    %c0_16 = arith.constant 0 : index
    %22 = vector.load %arg2[%c0_14, %21, %c1_15, %c0_16] : memref<4x9x9x128xbf16, #tpu.memory_space<vmem>>, vector<1x8x8x128xbf16>
    %23 = vector.shape_cast %22 : vector<1x8x8x128xbf16> to vector<8x8x128xbf16>
    %24 = vector.shape_cast %23 : vector<8x8x128xbf16> to vector<64x128xbf16>
    %c2 = arith.constant 2 : index
    %c0_17 = arith.constant 0 : index
    %c0_18 = arith.constant 0 : index
    %25 = vector.load %arg3[%c2, %c0_17, %c0_18] : memref<9x128x128xbf16, #tpu.memory_space<vmem>>, vector<1x128x128xbf16>
    %26 = vector.shape_cast %25 : vector<1x128x128xbf16> to vector<128x128xbf16>
    %cst_19 = arith.constant dense<0.000000e+00> : vector<64x128xf32>
    %27 = tpu.matmul %24, %26, %cst_19 {dimension_numbers = #tpu.dot_dimension_numbers<[1], [0], [0], [1], [0, 0, 1, 1], [], []>} : vector<64x128xbf16>, vector<128x128xbf16>, vector<64x128xf32> -> vector<64x128xf32>
    %28 = arith.addf %19, %27 : vector<64x128xf32>
    %c0_i32_20 = arith.constant 0 : i32
    %29 = arith.addi %0, %c0_i32_20 : i32
    %c2_21 = arith.constant 2 : index
    %30 = arith.index_cast %29 : i32 to index
    %c0_22 = arith.constant 0 : index
    %c0_23 = arith.constant 0 : index
    %31 = vector.load %arg2[%c2_21, %30, %c0_22, %c0_23] : memref<4x9x9x128xbf16, #tpu.memory_space<vmem>>, vector<1x8x8x128xbf16>
    %32 = vector.shape_cast %31 : vector<1x8x8x128xbf16> to vector<8x8x128xbf16>
    %33 = vector.shape_cast %32 : vector<8x8x128xbf16> to vector<64x128xbf16>
    %c3 = arith.constant 3 : index
    %c0_24 = arith.constant 0 : index
    %c0_25 = arith.constant 0 : index
    %34 = vector.load %arg3[%c3, %c0_24, %c0_25] : memref<9x128x128xbf16, #tpu.memory_space<vmem>>, vector<1x128x128xbf16>
    %35 = vector.shape_cast %34 : vector<1x128x128xbf16> to vector<128x128xbf16>
    %cst_26 = arith.constant dense<0.000000e+00> : vector<64x128xf32>
    %36 = tpu.matmul %33, %35, %cst_26 {dimension_numbers = #tpu.dot_dimension_numbers<[1], [0], [0], [1], [0, 0, 1, 1], [], []>} : vector<64x128xbf16>, vector<128x128xbf16>, vector<64x128xf32> -> vector<64x128xf32>
    %37 = arith.addf %28, %36 : vector<64x128xf32>
    %c0_i32_27 = arith.constant 0 : i32
    %38 = arith.addi %0, %c0_i32_27 : i32
    %c3_28 = arith.constant 3 : index
    %39 = arith.index_cast %38 : i32 to index
    %c0_29 = arith.constant 0 : index
    %c0_30 = arith.constant 0 : index
    %40 = vector.load %arg2[%c3_28, %39, %c0_29, %c0_30] : memref<4x9x9x128xbf16, #tpu.memory_space<vmem>>, vector<1x8x8x128xbf16>
    %41 = vector.shape_cast %40 : vector<1x8x8x128xbf16> to vector<8x8x128xbf16>
    %42 = vector.shape_cast %41 : vector<8x8x128xbf16> to vector<64x128xbf16>
    %c4 = arith.constant 4 : index
    %c0_31 = arith.constant 0 : index
    %c0_32 = arith.constant 0 : index
    %43 = vector.load %arg3[%c4, %c0_31, %c0_32] : memref<9x128x128xbf16, #tpu.memory_space<vmem>>, vector<1x128x128xbf16>
    %44 = vector.shape_cast %43 : vector<1x128x128xbf16> to vector<128x128xbf16>
    %cst_33 = arith.constant dense<0.000000e+00> : vector<64x128xf32>
    %45 = tpu.matmul %42, %44, %cst_33 {dimension_numbers = #tpu.dot_dimension_numbers<[1], [0], [0], [1], [0, 0, 1, 1], [], []>} : vector<64x128xbf16>, vector<128x128xbf16>, vector<64x128xf32> -> vector<64x128xf32>
    %46 = arith.addf %37, %45 : vector<64x128xf32>
    %c0_i32_34 = arith.constant 0 : i32
    %47 = arith.addi %0, %c0_i32_34 : i32
    %c2_35 = arith.constant 2 : index
    %48 = arith.index_cast %47 : i32 to index
    %c1_36 = arith.constant 1 : index
    %c0_37 = arith.constant 0 : index
    %49 = vector.load %arg2[%c2_35, %48, %c1_36, %c0_37] : memref<4x9x9x128xbf16, #tpu.memory_space<vmem>>, vector<1x8x8x128xbf16>
    %50 = vector.shape_cast %49 : vector<1x8x8x128xbf16> to vector<8x8x128xbf16>
    %51 = vector.shape_cast %50 : vector<8x8x128xbf16> to vector<64x128xbf16>
    %c5 = arith.constant 5 : index
    %c0_38 = arith.constant 0 : index
    %c0_39 = arith.constant 0 : index
    %52 = vector.load %arg3[%c5, %c0_38, %c0_39] : memref<9x128x128xbf16, #tpu.memory_space<vmem>>, vector<1x128x128xbf16>
    %53 = vector.shape_cast %52 : vector<1x128x128xbf16> to vector<128x128xbf16>
    %cst_40 = arith.constant dense<0.000000e+00> : vector<64x128xf32>
    %54 = tpu.matmul %51, %53, %cst_40 {dimension_numbers = #tpu.dot_dimension_numbers<[1], [0], [0], [1], [0, 0, 1, 1], [], []>} : vector<64x128xbf16>, vector<128x128xbf16>, vector<64x128xf32> -> vector<64x128xf32>
    %55 = arith.addf %46, %54 : vector<64x128xf32>
    %c1_i32 = arith.constant 1 : i32
    %56 = arith.addi %0, %c1_i32 : i32
    %c0_41 = arith.constant 0 : index
    %57 = arith.index_cast %56 : i32 to index
    %c0_42 = arith.constant 0 : index
    %c0_43 = arith.constant 0 : index
    %58 = vector.load %arg2[%c0_41, %57, %c0_42, %c0_43] : memref<4x9x9x128xbf16, #tpu.memory_space<vmem>>, vector<1x8x8x128xbf16>
    %59 = vector.shape_cast %58 : vector<1x8x8x128xbf16> to vector<8x8x128xbf16>
    %60 = vector.shape_cast %59 : vector<8x8x128xbf16> to vector<64x128xbf16>
    %c6 = arith.constant 6 : index
    %c0_44 = arith.constant 0 : index
    %c0_45 = arith.constant 0 : index
    %61 = vector.load %arg3[%c6, %c0_44, %c0_45] : memref<9x128x128xbf16, #tpu.memory_space<vmem>>, vector<1x128x128xbf16>
    %62 = vector.shape_cast %61 : vector<1x128x128xbf16> to vector<128x128xbf16>
    %cst_46 = arith.constant dense<0.000000e+00> : vector<64x128xf32>
    %63 = tpu.matmul %60, %62, %cst_46 {dimension_numbers = #tpu.dot_dimension_numbers<[1], [0], [0], [1], [0, 0, 1, 1], [], []>} : vector<64x128xbf16>, vector<128x128xbf16>, vector<64x128xf32> -> vector<64x128xf32>
    %64 = arith.addf %55, %63 : vector<64x128xf32>
    %c1_i32_47 = arith.constant 1 : i32
    %65 = arith.addi %0, %c1_i32_47 : i32
    %c1_48 = arith.constant 1 : index
    %66 = arith.index_cast %65 : i32 to index
    %c0_49 = arith.constant 0 : index
    %c0_50 = arith.constant 0 : index
    %67 = vector.load %arg2[%c1_48, %66, %c0_49, %c0_50] : memref<4x9x9x128xbf16, #tpu.memory_space<vmem>>, vector<1x8x8x128xbf16>
    %68 = vector.shape_cast %67 : vector<1x8x8x128xbf16> to vector<8x8x128xbf16>
    %69 = vector.shape_cast %68 : vector<8x8x128xbf16> to vector<64x128xbf16>
    %c7 = arith.constant 7 : index
    %c0_51 = arith.constant 0 : index
    %c0_52 = arith.constant 0 : index
    %70 = vector.load %arg3[%c7, %c0_51, %c0_52] : memref<9x128x128xbf16, #tpu.memory_space<vmem>>, vector<1x128x128xbf16>
    %71 = vector.shape_cast %70 : vector<1x128x128xbf16> to vector<128x128xbf16>
    %cst_53 = arith.constant dense<0.000000e+00> : vector<64x128xf32>
    %72 = tpu.matmul %69, %71, %cst_53 {dimension_numbers = #tpu.dot_dimension_numbers<[1], [0], [0], [1], [0, 0, 1, 1], [], []>} : vector<64x128xbf16>, vector<128x128xbf16>, vector<64x128xf32> -> vector<64x128xf32>
    %73 = arith.addf %64, %72 : vector<64x128xf32>
    %c1_i32_54 = arith.constant 1 : i32
    %74 = arith.addi %0, %c1_i32_54 : i32
    %c0_55 = arith.constant 0 : index
    %75 = arith.index_cast %74 : i32 to index
    %c1_56 = arith.constant 1 : index
    %c0_57 = arith.constant 0 : index
    %76 = vector.load %arg2[%c0_55, %75, %c1_56, %c0_57] : memref<4x9x9x128xbf16, #tpu.memory_space<vmem>>, vector<1x8x8x128xbf16>
    %77 = vector.shape_cast %76 : vector<1x8x8x128xbf16> to vector<8x8x128xbf16>
    %78 = vector.shape_cast %77 : vector<8x8x128xbf16> to vector<64x128xbf16>
    %c8 = arith.constant 8 : index
    %c0_58 = arith.constant 0 : index
    %c0_59 = arith.constant 0 : index
    %79 = vector.load %arg3[%c8, %c0_58, %c0_59] : memref<9x128x128xbf16, #tpu.memory_space<vmem>>, vector<1x128x128xbf16>
    %80 = vector.shape_cast %79 : vector<1x128x128xbf16> to vector<128x128xbf16>
    %cst_60 = arith.constant dense<0.000000e+00> : vector<64x128xf32>
    %81 = tpu.matmul %78, %80, %cst_60 {dimension_numbers = #tpu.dot_dimension_numbers<[1], [0], [0], [1], [0, 0, 1, 1], [], []>} : vector<64x128xbf16>, vector<128x128xbf16>, vector<64x128xf32> -> vector<64x128xf32>
    %82 = arith.addf %73, %81 : vector<64x128xf32>
    %83 = arith.truncf %82 : vector<64x128xf32> to vector<64x128xbf16>
    %c0_61 = arith.constant 0 : index
    %c0_62 = arith.constant 0 : index
    %c0_63 = arith.constant 0 : index
    %84 = vector.load %arg5[%c0_61, %c0_62, %c0_63] : memref<1x64x128xbf16, #tpu.memory_space<vmem>>, vector<1x64x128xbf16>
    %85 = vector.shape_cast %84 : vector<1x64x128xbf16> to vector<64x128xbf16>
    %86 = vector.shape_cast %83 : vector<64x128xbf16> to vector<1x64x128xbf16>
    tpu.vector_store %arg5[%c0_61, %c0_62, %c0_63], %86 {strides = array<i32>} : memref<1x64x128xbf16, #tpu.memory_space<vmem>>, vector<1x64x128xbf16>,
    %cst_64 = arith.constant 0.000000e+00 : f32
    %87 = vector.broadcast %cst_64 : f32 to vector<6x128xf32>
    %cst_65 = arith.constant dense<0.000000e+00> : vector<128xf32>
    %88 = vector.multi_reduction <add>, %82, %cst_65 [0] : vector<64x128xf32> to vector<128xf32>
    %89 = vector.shape_cast %88 : vector<128xf32> to vector<1x128xf32>
    %90 = arith.mulf %82, %82 : vector<64x128xf32>
    %cst_66 = arith.constant dense<0.000000e+00> : vector<128xf32>
    %91 = vector.multi_reduction <add>, %90, %cst_66 [0] : vector<64x128xf32> to vector<128xf32>
    %92 = vector.shape_cast %91 : vector<128xf32> to vector<1x128xf32>
    %93 = tpu.concatenate %89, %92, %87 in 0 : vector<1x128xf32>, vector<1x128xf32>, vector<6x128xf32> -> vector<8x128xf32>
    %c0_67 = arith.constant 0 : index
    %c0_68 = arith.constant 0 : index
    %c0_69 = arith.constant 0 : index
    %94 = vector.load %arg6[%c0_67, %c0_68, %c0_69] : memref<1x8x128xf32, #tpu.memory_space<vmem>>, vector<1x8x128xf32>
    %95 = vector.shape_cast %94 : vector<1x8x128xf32> to vector<8x128xf32>
    %96 = vector.shape_cast %93 : vector<8x128xf32> to vector<1x8x128xf32>
    tpu.vector_store %arg6[%c0_67, %c0_68, %c0_69], %96 {strides = array<i32>} : memref<1x8x128xf32, #tpu.memory_space<vmem>>, vector<1x8x128xf32>,
    %c0_i32_70 = arith.constant 0 : i32
    %97 = arith.addi %0, %c0_i32_70 : i32
    %c3_71 = arith.constant 3 : index
    %98 = arith.index_cast %97 : i32 to index
    %c0_72 = arith.constant 0 : index
    %c0_73 = arith.constant 0 : index
    %99 = vector.load %arg2[%c3_71, %98, %c0_72, %c0_73] : memref<4x9x9x128xbf16, #tpu.memory_space<vmem>>, vector<1x8x8x128xbf16>
    %100 = vector.shape_cast %99 : vector<1x8x8x128xbf16> to vector<8x8x128xbf16>
    %101 = vector.shape_cast %100 : vector<8x8x128xbf16> to vector<64x128xbf16>
    %c0_74 = arith.constant 0 : index
    %c0_75 = arith.constant 0 : index
    %102 = vector.load %arg4[%c0_74, %c0_75] : memref<128x128xbf16, #tpu.memory_space<vmem>>, vector<128x128xbf16>
    %cst_76 = arith.constant dense<0.000000e+00> : vector<64x128xf32>
    %103 = tpu.matmul %101, %102, %cst_76 {dimension_numbers = #tpu.dot_dimension_numbers<[1], [0], [0], [1], [0, 0, 1, 1], [], []>} : vector<64x128xbf16>, vector<128x128xbf16>, vector<64x128xf32> -> vector<64x128xf32>
    %104 = arith.truncf %103 : vector<64x128xf32> to vector<64x128xbf16>
    %c0_77 = arith.constant 0 : index
    %c0_78 = arith.constant 0 : index
    %c0_79 = arith.constant 0 : index
    %105 = vector.load %arg7[%c0_77, %c0_78, %c0_79] : memref<1x64x128xbf16, #tpu.memory_space<vmem>>, vector<1x64x128xbf16>
    %106 = vector.shape_cast %105 : vector<1x64x128xbf16> to vector<64x128xbf16>
    %107 = vector.shape_cast %104 : vector<64x128xbf16> to vector<1x64x128xbf16>
    tpu.vector_store %arg7[%c0_77, %c0_78, %c0_79], %107 {strides = array<i32>} : memref<1x64x128xbf16, #tpu.memory_space<vmem>>, vector<1x64x128xbf16>,
    %cst_80 = arith.constant dense<0.000000e+00> : vector<128xf32>
    %108 = vector.multi_reduction <add>, %103, %cst_80 [0] : vector<64x128xf32> to vector<128xf32>
    %109 = vector.shape_cast %108 : vector<128xf32> to vector<1x128xf32>
    %110 = arith.mulf %103, %103 : vector<64x128xf32>
    %cst_81 = arith.constant dense<0.000000e+00> : vector<128xf32>
    %111 = vector.multi_reduction <add>, %110, %cst_81 [0] : vector<64x128xf32> to vector<128xf32>
    %112 = vector.shape_cast %111 : vector<128xf32> to vector<1x128xf32>
    %113 = tpu.concatenate %109, %112, %87 in 0 : vector<1x128xf32>, vector<1x128xf32>, vector<6x128xf32> -> vector<8x128xf32>
    %c0_82 = arith.constant 0 : index
    %c0_83 = arith.constant 0 : index
    %c0_84 = arith.constant 0 : index
    %114 = vector.load %arg8[%c0_82, %c0_83, %c0_84] : memref<1x8x128xf32, #tpu.memory_space<vmem>>, vector<1x8x128xf32>
    %115 = vector.shape_cast %114 : vector<1x8x128xf32> to vector<8x128xf32>
    %116 = vector.shape_cast %113 : vector<8x128xf32> to vector<1x8x128xf32>
    tpu.vector_store %arg8[%c0_82, %c0_83, %c0_84], %116 {strides = array<i32>} : memref<1x8x128xf32, #tpu.memory_space<vmem>>, vector<1x8x128xf32>,
    return
  }
  func.func @transform_0(%arg0: i32, %arg1: i32) -> (i32, i32, i32, i32) {
    %c0_i32 = arith.constant 0 : i32
    %c0_i32_0 = arith.constant 0 : i32
    %c0_i32_1 = arith.constant 0 : i32
    %c0_i32_2 = arith.constant 0 : i32
    return %arg0, %c0_i32, %c0_i32_0, %c0_i32_1 : i32, i32, i32, i32
  }
  func.func @transform_1(%arg0: i32, %arg1: i32) -> (i32, i32, i32) {
    %c0_i32 = arith.constant 0 : i32
    %c0_i32_0 = arith.constant 0 : i32
    %c0_i32_1 = arith.constant 0 : i32
    %c0_i32_2 = arith.constant 0 : i32
    return %c0_i32, %c0_i32_0, %c0_i32_1 : i32, i32, i32
  }
  func.func @transform_2(%arg0: i32, %arg1: i32) -> (i32, i32) {
    %c0_i32 = arith.constant 0 : i32
    %c0_i32_0 = arith.constant 0 : i32
    %c0_i32_1 = arith.constant 0 : i32
    return %c0_i32, %c0_i32_0 : i32, i32
  }
  func.func @transform_3(%arg0: i32, %arg1: i32) -> (i32, i32, i32) {
    %c0_i32 = arith.constant 0 : i32
    %c0_i32_0 = arith.constant 0 : i32
    return %arg0, %arg1, %c0_i32 : i32, i32, i32
  }
  func.func @transform_4(%arg0: i32, %arg1: i32) -> (i32, i32, i32) {
    %c1_i32 = arith.constant 1 : i32
    %0 = arith.muli %arg0, %c1_i32 : i32
    %1 = arith.addi %0, %arg1 : i32
    %c0_i32 = arith.constant 0 : i32
    %c0_i32_0 = arith.constant 0 : i32
    %c0_i32_1 = arith.constant 0 : i32
    return %1, %c0_i32, %c0_i32_0 : i32, i32, i32
  }
  func.func @transform_5(%arg0: i32, %arg1: i32) -> (i32, i32, i32) {
    %c0_i32 = arith.constant 0 : i32
    %c0_i32_0 = arith.constant 0 : i32
    return %arg0, %arg1, %c0_i32 : i32, i32, i32
  }
  func.func @transform_6(%arg0: i32, %arg1: i32) -> (i32, i32, i32) {
    %c1_i32 = arith.constant 1 : i32
    %0 = arith.muli %arg0, %c1_i32 : i32
    %1 = arith.addi %0, %arg1 : i32
    %c0_i32 = arith.constant 0 : i32
    %c0_i32_0 = arith.constant 0 : i32
    %c0_i32_1 = arith.constant 0 : i32
    return %1, %c0_i32, %c0_i32_0 : i32, i32, i32
  }
}

module attributes {stable_mosaic.version = 11 : i64} {
  func.func @_bn_relu_pad_kernel(%arg0: i32, %arg1: memref<1x64x128xbf16, #tpu.memory_space<vmem>>, %arg2: memref<1x128xf32, #tpu.memory_space<vmem>>, %arg3: memref<1x128xf32, #tpu.memory_space<vmem>>, %arg4: memref<1x10x10x128xbf16, #tpu.memory_space<vmem>>) attributes {dimension_semantics = [#tpu.dimension_semantics<parallel>], iteration_bounds = array<i64: 2>, scalar_prefetch = 0 : i64, scratch_operands = 0 : i64, tpu.core_type = #tpu.core_type<tc>, window_params = [{transform_indices = @transform_0, window_bounds = array<i64: 1, 64, 128>}, {pipeline_mode = #tpu.pipeline_mode<synchronous>, transform_indices = @transform_1, window_bounds = array<i64: 1, 128>}, {pipeline_mode = #tpu.pipeline_mode<synchronous>, transform_indices = @transform_2, window_bounds = array<i64: 1, 128>}, {transform_indices = @transform_3, window_bounds = array<i64: 1, 10, 10, 128>}]} {
    %c0 = arith.constant 0 : index
    %c0_0 = arith.constant 0 : index
    %c0_1 = arith.constant 0 : index
    %0 = vector.load %arg1[%c0, %c0_0, %c0_1] : memref<1x64x128xbf16, #tpu.memory_space<vmem>>, vector<1x64x128xbf16>
    %1 = vector.shape_cast %0 : vector<1x64x128xbf16> to vector<64x128xbf16>
    %2 = vector.shape_cast %1 : vector<64x128xbf16> to vector<8x8x128xbf16>
    %3 = arith.extf %2 : vector<8x8x128xbf16> to vector<8x8x128xf32>
    %c0_2 = arith.constant 0 : index
    %c0_3 = arith.constant 0 : index
    %4 = vector.load %arg2[%c0_2, %c0_3] : memref<1x128xf32, #tpu.memory_space<vmem>>, vector<1x128xf32>
    %5 = vector.shape_cast %4 : vector<1x128xf32> to vector<1x1x128xf32>
    %6 = vector.broadcast %5 : vector<1x1x128xf32> to vector<8x8x128xf32>
    %7 = arith.mulf %3, %6 : vector<8x8x128xf32>
    %c0_4 = arith.constant 0 : index
    %c0_5 = arith.constant 0 : index
    %8 = vector.load %arg3[%c0_4, %c0_5] : memref<1x128xf32, #tpu.memory_space<vmem>>, vector<1x128xf32>
    %9 = vector.shape_cast %8 : vector<1x128xf32> to vector<1x1x128xf32>
    %10 = vector.broadcast %9 : vector<1x1x128xf32> to vector<8x8x128xf32>
    %11 = arith.addf %7, %10 : vector<8x8x128xf32>
    %cst = arith.constant 0.000000e+00 : f32
    %12 = vector.broadcast %cst : f32 to vector<8x8x128xf32>
    %13 = arith.maximumf %11, %12 : vector<8x8x128xf32>
    %14 = arith.truncf %13 : vector<8x8x128xf32> to vector<8x8x128xbf16>
    %cst_6 = arith.constant 0.000000e+00 : bf16
    %15 = vector.broadcast %cst_6 : bf16 to vector<1x10x10x128xbf16>
    %c0_7 = arith.constant 0 : index
    %c0_8 = arith.constant 0 : index
    %c0_9 = arith.constant 0 : index
    %c0_10 = arith.constant 0 : index
    %16 = vector.load %arg4[%c0_7, %c0_8, %c0_9, %c0_10] : memref<1x10x10x128xbf16, #tpu.memory_space<vmem>>, vector<1x10x10x128xbf16>
    tpu.vector_store %arg4[%c0_7, %c0_8, %c0_9, %c0_10], %15 {strides = array<i32>} : memref<1x10x10x128xbf16, #tpu.memory_space<vmem>>, vector<1x10x10x128xbf16>,
    %c0_11 = arith.constant 0 : index
    %c1 = arith.constant 1 : index
    %c1_12 = arith.constant 1 : index
    %c0_13 = arith.constant 0 : index
    %17 = vector.load %arg4[%c0_11, %c1, %c1_12, %c0_13] : memref<1x10x10x128xbf16, #tpu.memory_space<vmem>>, vector<1x8x8x128xbf16>
    %18 = vector.shape_cast %17 : vector<1x8x8x128xbf16> to vector<8x8x128xbf16>
    %19 = vector.shape_cast %14 : vector<8x8x128xbf16> to vector<1x8x8x128xbf16>
    tpu.vector_store %arg4[%c0_11, %c1, %c1_12, %c0_13], %19 {strides = array<i32>} : memref<1x10x10x128xbf16, #tpu.memory_space<vmem>>, vector<1x8x8x128xbf16>,
    return
  }
  func.func @transform_0(%arg0: i32) -> (i32, i32, i32) {
    %c0_i32 = arith.constant 0 : i32
    %c0_i32_0 = arith.constant 0 : i32
    %c0_i32_1 = arith.constant 0 : i32
    return %arg0, %c0_i32, %c0_i32_0 : i32, i32, i32
  }
  func.func @transform_1(%arg0: i32) -> (i32, i32) {
    %c0_i32 = arith.constant 0 : i32
    %c0_i32_0 = arith.constant 0 : i32
    %c0_i32_1 = arith.constant 0 : i32
    return %c0_i32, %c0_i32_0 : i32, i32
  }
  func.func @transform_2(%arg0: i32) -> (i32, i32) {
    %c0_i32 = arith.constant 0 : i32
    %c0_i32_0 = arith.constant 0 : i32
    %c0_i32_1 = arith.constant 0 : i32
    return %c0_i32, %c0_i32_0 : i32, i32
  }
  func.func @transform_3(%arg0: i32) -> (i32, i32, i32, i32) {
    %c0_i32 = arith.constant 0 : i32
    %c0_i32_0 = arith.constant 0 : i32
    %c0_i32_1 = arith.constant 0 : i32
    %c0_i32_2 = arith.constant 0 : i32
    return %arg0, %c0_i32, %c0_i32_0, %c0_i32_1 : i32, i32, i32, i32
  }
}

module attributes {stable_mosaic.version = 11 : i64} {
  func.func @_conv3x3_stats_kernel(%arg0: i32, %arg1: i32, %arg2: memref<1x10x10x128xbf16, #tpu.memory_space<vmem>>, %arg3: memref<9x128x128xbf16, #tpu.memory_space<vmem>>, %arg4: memref<1x64x128xbf16, #tpu.memory_space<vmem>>, %arg5: memref<1x8x128xf32, #tpu.memory_space<vmem>>) attributes {dimension_semantics = [#tpu.dimension_semantics<parallel>, #tpu.dimension_semantics<parallel>], iteration_bounds = array<i64: 2, 1>, scalar_prefetch = 0 : i64, scratch_operands = 0 : i64, tpu.core_type = #tpu.core_type<tc>, window_params = [{transform_indices = @transform_0, window_bounds = array<i64: 1, 10, 10, 128>}, {pipeline_mode = #tpu.pipeline_mode<synchronous>, transform_indices = @transform_1, window_bounds = array<i64: 9, 128, 128>}, {transform_indices = @transform_2, window_bounds = array<i64: 1, 64, 128>}, {transform_indices = @transform_3, window_bounds = array<i64: 1, 8, 128>}]} {
    %c8_i32 = arith.constant 8 : i32
    %0 = arith.muli %arg1, %c8_i32 : i32
    %cst = arith.constant 0.000000e+00 : f32
    %1 = vector.broadcast %cst : f32 to vector<64x128xf32>
    %c0_i32 = arith.constant 0 : i32
    %2 = arith.addi %0, %c0_i32 : i32
    %c0 = arith.constant 0 : index
    %3 = arith.index_cast %2 : i32 to index
    %c0_0 = arith.constant 0 : index
    %c0_1 = arith.constant 0 : index
    %4 = vector.load %arg2[%c0, %3, %c0_0, %c0_1] : memref<1x10x10x128xbf16, #tpu.memory_space<vmem>>, vector<1x8x8x128xbf16>
    %5 = vector.shape_cast %4 : vector<1x8x8x128xbf16> to vector<8x8x128xbf16>
    %6 = vector.shape_cast %5 : vector<8x8x128xbf16> to vector<64x128xbf16>
    %c0_2 = arith.constant 0 : index
    %c0_3 = arith.constant 0 : index
    %c0_4 = arith.constant 0 : index
    %7 = vector.load %arg3[%c0_2, %c0_3, %c0_4] : memref<9x128x128xbf16, #tpu.memory_space<vmem>>, vector<1x128x128xbf16>
    %8 = vector.shape_cast %7 : vector<1x128x128xbf16> to vector<128x128xbf16>
    %cst_5 = arith.constant dense<0.000000e+00> : vector<64x128xf32>
    %9 = tpu.matmul %6, %8, %cst_5 {dimension_numbers = #tpu.dot_dimension_numbers<[1], [0], [0], [1], [0, 0, 1, 1], [], []>} : vector<64x128xbf16>, vector<128x128xbf16>, vector<64x128xf32> -> vector<64x128xf32>
    %10 = arith.addf %1, %9 : vector<64x128xf32>
    %c0_i32_6 = arith.constant 0 : i32
    %11 = arith.addi %0, %c0_i32_6 : i32
    %c0_7 = arith.constant 0 : index
    %12 = arith.index_cast %11 : i32 to index
    %c1 = arith.constant 1 : index
    %c0_8 = arith.constant 0 : index
    %13 = vector.load %arg2[%c0_7, %12, %c1, %c0_8] : memref<1x10x10x128xbf16, #tpu.memory_space<vmem>>, vector<1x8x8x128xbf16>
    %14 = vector.shape_cast %13 : vector<1x8x8x128xbf16> to vector<8x8x128xbf16>
    %15 = vector.shape_cast %14 : vector<8x8x128xbf16> to vector<64x128xbf16>
    %c1_9 = arith.constant 1 : index
    %c0_10 = arith.constant 0 : index
    %c0_11 = arith.constant 0 : index
    %16 = vector.load %arg3[%c1_9, %c0_10, %c0_11] : memref<9x128x128xbf16, #tpu.memory_space<vmem>>, vector<1x128x128xbf16>
    %17 = vector.shape_cast %16 : vector<1x128x128xbf16> to vector<128x128xbf16>
    %cst_12 = arith.constant dense<0.000000e+00> : vector<64x128xf32>
    %18 = tpu.matmul %15, %17, %cst_12 {dimension_numbers = #tpu.dot_dimension_numbers<[1], [0], [0], [1], [0, 0, 1, 1], [], []>} : vector<64x128xbf16>, vector<128x128xbf16>, vector<64x128xf32> -> vector<64x128xf32>
    %19 = arith.addf %10, %18 : vector<64x128xf32>
    %c0_i32_13 = arith.constant 0 : i32
    %20 = arith.addi %0, %c0_i32_13 : i32
    %c0_14 = arith.constant 0 : index
    %21 = arith.index_cast %20 : i32 to index
    %c2 = arith.constant 2 : index
    %c0_15 = arith.constant 0 : index
    %22 = vector.load %arg2[%c0_14, %21, %c2, %c0_15] : memref<1x10x10x128xbf16, #tpu.memory_space<vmem>>, vector<1x8x8x128xbf16>
    %23 = vector.shape_cast %22 : vector<1x8x8x128xbf16> to vector<8x8x128xbf16>
    %24 = vector.shape_cast %23 : vector<8x8x128xbf16> to vector<64x128xbf16>
    %c2_16 = arith.constant 2 : index
    %c0_17 = arith.constant 0 : index
    %c0_18 = arith.constant 0 : index
    %25 = vector.load %arg3[%c2_16, %c0_17, %c0_18] : memref<9x128x128xbf16, #tpu.memory_space<vmem>>, vector<1x128x128xbf16>
    %26 = vector.shape_cast %25 : vector<1x128x128xbf16> to vector<128x128xbf16>
    %cst_19 = arith.constant dense<0.000000e+00> : vector<64x128xf32>
    %27 = tpu.matmul %24, %26, %cst_19 {dimension_numbers = #tpu.dot_dimension_numbers<[1], [0], [0], [1], [0, 0, 1, 1], [], []>} : vector<64x128xbf16>, vector<128x128xbf16>, vector<64x128xf32> -> vector<64x128xf32>
    %28 = arith.addf %19, %27 : vector<64x128xf32>
    %c1_i32 = arith.constant 1 : i32
    %29 = arith.addi %0, %c1_i32 : i32
    %c0_20 = arith.constant 0 : index
    %30 = arith.index_cast %29 : i32 to index
    %c0_21 = arith.constant 0 : index
    %c0_22 = arith.constant 0 : index
    %31 = vector.load %arg2[%c0_20, %30, %c0_21, %c0_22] : memref<1x10x10x128xbf16, #tpu.memory_space<vmem>>, vector<1x8x8x128xbf16>
    %32 = vector.shape_cast %31 : vector<1x8x8x128xbf16> to vector<8x8x128xbf16>
    %33 = vector.shape_cast %32 : vector<8x8x128xbf16> to vector<64x128xbf16>
    %c3 = arith.constant 3 : index
    %c0_23 = arith.constant 0 : index
    %c0_24 = arith.constant 0 : index
    %34 = vector.load %arg3[%c3, %c0_23, %c0_24] : memref<9x128x128xbf16, #tpu.memory_space<vmem>>, vector<1x128x128xbf16>
    %35 = vector.shape_cast %34 : vector<1x128x128xbf16> to vector<128x128xbf16>
    %cst_25 = arith.constant dense<0.000000e+00> : vector<64x128xf32>
    %36 = tpu.matmul %33, %35, %cst_25 {dimension_numbers = #tpu.dot_dimension_numbers<[1], [0], [0], [1], [0, 0, 1, 1], [], []>} : vector<64x128xbf16>, vector<128x128xbf16>, vector<64x128xf32> -> vector<64x128xf32>
    %37 = arith.addf %28, %36 : vector<64x128xf32>
    %c1_i32_26 = arith.constant 1 : i32
    %38 = arith.addi %0, %c1_i32_26 : i32
    %c0_27 = arith.constant 0 : index
    %39 = arith.index_cast %38 : i32 to index
    %c1_28 = arith.constant 1 : index
    %c0_29 = arith.constant 0 : index
    %40 = vector.load %arg2[%c0_27, %39, %c1_28, %c0_29] : memref<1x10x10x128xbf16, #tpu.memory_space<vmem>>, vector<1x8x8x128xbf16>
    %41 = vector.shape_cast %40 : vector<1x8x8x128xbf16> to vector<8x8x128xbf16>
    %42 = vector.shape_cast %41 : vector<8x8x128xbf16> to vector<64x128xbf16>
    %c4 = arith.constant 4 : index
    %c0_30 = arith.constant 0 : index
    %c0_31 = arith.constant 0 : index
    %43 = vector.load %arg3[%c4, %c0_30, %c0_31] : memref<9x128x128xbf16, #tpu.memory_space<vmem>>, vector<1x128x128xbf16>
    %44 = vector.shape_cast %43 : vector<1x128x128xbf16> to vector<128x128xbf16>
    %cst_32 = arith.constant dense<0.000000e+00> : vector<64x128xf32>
    %45 = tpu.matmul %42, %44, %cst_32 {dimension_numbers = #tpu.dot_dimension_numbers<[1], [0], [0], [1], [0, 0, 1, 1], [], []>} : vector<64x128xbf16>, vector<128x128xbf16>, vector<64x128xf32> -> vector<64x128xf32>
    %46 = arith.addf %37, %45 : vector<64x128xf32>
    %c1_i32_33 = arith.constant 1 : i32
    %47 = arith.addi %0, %c1_i32_33 : i32
    %c0_34 = arith.constant 0 : index
    %48 = arith.index_cast %47 : i32 to index
    %c2_35 = arith.constant 2 : index
    %c0_36 = arith.constant 0 : index
    %49 = vector.load %arg2[%c0_34, %48, %c2_35, %c0_36] : memref<1x10x10x128xbf16, #tpu.memory_space<vmem>>, vector<1x8x8x128xbf16>
    %50 = vector.shape_cast %49 : vector<1x8x8x128xbf16> to vector<8x8x128xbf16>
    %51 = vector.shape_cast %50 : vector<8x8x128xbf16> to vector<64x128xbf16>
    %c5 = arith.constant 5 : index
    %c0_37 = arith.constant 0 : index
    %c0_38 = arith.constant 0 : index
    %52 = vector.load %arg3[%c5, %c0_37, %c0_38] : memref<9x128x128xbf16, #tpu.memory_space<vmem>>, vector<1x128x128xbf16>
    %53 = vector.shape_cast %52 : vector<1x128x128xbf16> to vector<128x128xbf16>
    %cst_39 = arith.constant dense<0.000000e+00> : vector<64x128xf32>
    %54 = tpu.matmul %51, %53, %cst_39 {dimension_numbers = #tpu.dot_dimension_numbers<[1], [0], [0], [1], [0, 0, 1, 1], [], []>} : vector<64x128xbf16>, vector<128x128xbf16>, vector<64x128xf32> -> vector<64x128xf32>
    %55 = arith.addf %46, %54 : vector<64x128xf32>
    %c2_i32 = arith.constant 2 : i32
    %56 = arith.addi %0, %c2_i32 : i32
    %c0_40 = arith.constant 0 : index
    %57 = arith.index_cast %56 : i32 to index
    %c0_41 = arith.constant 0 : index
    %c0_42 = arith.constant 0 : index
    %58 = vector.load %arg2[%c0_40, %57, %c0_41, %c0_42] : memref<1x10x10x128xbf16, #tpu.memory_space<vmem>>, vector<1x8x8x128xbf16>
    %59 = vector.shape_cast %58 : vector<1x8x8x128xbf16> to vector<8x8x128xbf16>
    %60 = vector.shape_cast %59 : vector<8x8x128xbf16> to vector<64x128xbf16>
    %c6 = arith.constant 6 : index
    %c0_43 = arith.constant 0 : index
    %c0_44 = arith.constant 0 : index
    %61 = vector.load %arg3[%c6, %c0_43, %c0_44] : memref<9x128x128xbf16, #tpu.memory_space<vmem>>, vector<1x128x128xbf16>
    %62 = vector.shape_cast %61 : vector<1x128x128xbf16> to vector<128x128xbf16>
    %cst_45 = arith.constant dense<0.000000e+00> : vector<64x128xf32>
    %63 = tpu.matmul %60, %62, %cst_45 {dimension_numbers = #tpu.dot_dimension_numbers<[1], [0], [0], [1], [0, 0, 1, 1], [], []>} : vector<64x128xbf16>, vector<128x128xbf16>, vector<64x128xf32> -> vector<64x128xf32>
    %64 = arith.addf %55, %63 : vector<64x128xf32>
    %c2_i32_46 = arith.constant 2 : i32
    %65 = arith.addi %0, %c2_i32_46 : i32
    %c0_47 = arith.constant 0 : index
    %66 = arith.index_cast %65 : i32 to index
    %c1_48 = arith.constant 1 : index
    %c0_49 = arith.constant 0 : index
    %67 = vector.load %arg2[%c0_47, %66, %c1_48, %c0_49] : memref<1x10x10x128xbf16, #tpu.memory_space<vmem>>, vector<1x8x8x128xbf16>
    %68 = vector.shape_cast %67 : vector<1x8x8x128xbf16> to vector<8x8x128xbf16>
    %69 = vector.shape_cast %68 : vector<8x8x128xbf16> to vector<64x128xbf16>
    %c7 = arith.constant 7 : index
    %c0_50 = arith.constant 0 : index
    %c0_51 = arith.constant 0 : index
    %70 = vector.load %arg3[%c7, %c0_50, %c0_51] : memref<9x128x128xbf16, #tpu.memory_space<vmem>>, vector<1x128x128xbf16>
    %71 = vector.shape_cast %70 : vector<1x128x128xbf16> to vector<128x128xbf16>
    %cst_52 = arith.constant dense<0.000000e+00> : vector<64x128xf32>
    %72 = tpu.matmul %69, %71, %cst_52 {dimension_numbers = #tpu.dot_dimension_numbers<[1], [0], [0], [1], [0, 0, 1, 1], [], []>} : vector<64x128xbf16>, vector<128x128xbf16>, vector<64x128xf32> -> vector<64x128xf32>
    %73 = arith.addf %64, %72 : vector<64x128xf32>
    %c2_i32_53 = arith.constant 2 : i32
    %74 = arith.addi %0, %c2_i32_53 : i32
    %c0_54 = arith.constant 0 : index
    %75 = arith.index_cast %74 : i32 to index
    %c2_55 = arith.constant 2 : index
    %c0_56 = arith.constant 0 : index
    %76 = vector.load %arg2[%c0_54, %75, %c2_55, %c0_56] : memref<1x10x10x128xbf16, #tpu.memory_space<vmem>>, vector<1x8x8x128xbf16>
    %77 = vector.shape_cast %76 : vector<1x8x8x128xbf16> to vector<8x8x128xbf16>
    %78 = vector.shape_cast %77 : vector<8x8x128xbf16> to vector<64x128xbf16>
    %c8 = arith.constant 8 : index
    %c0_57 = arith.constant 0 : index
    %c0_58 = arith.constant 0 : index
    %79 = vector.load %arg3[%c8, %c0_57, %c0_58] : memref<9x128x128xbf16, #tpu.memory_space<vmem>>, vector<1x128x128xbf16>
    %80 = vector.shape_cast %79 : vector<1x128x128xbf16> to vector<128x128xbf16>
    %cst_59 = arith.constant dense<0.000000e+00> : vector<64x128xf32>
    %81 = tpu.matmul %78, %80, %cst_59 {dimension_numbers = #tpu.dot_dimension_numbers<[1], [0], [0], [1], [0, 0, 1, 1], [], []>} : vector<64x128xbf16>, vector<128x128xbf16>, vector<64x128xf32> -> vector<64x128xf32>
    %82 = arith.addf %73, %81 : vector<64x128xf32>
    %83 = arith.truncf %82 : vector<64x128xf32> to vector<64x128xbf16>
    %c0_60 = arith.constant 0 : index
    %c0_61 = arith.constant 0 : index
    %c0_62 = arith.constant 0 : index
    %84 = vector.load %arg4[%c0_60, %c0_61, %c0_62] : memref<1x64x128xbf16, #tpu.memory_space<vmem>>, vector<1x64x128xbf16>
    %85 = vector.shape_cast %84 : vector<1x64x128xbf16> to vector<64x128xbf16>
    %86 = vector.shape_cast %83 : vector<64x128xbf16> to vector<1x64x128xbf16>
    tpu.vector_store %arg4[%c0_60, %c0_61, %c0_62], %86 {strides = array<i32>} : memref<1x64x128xbf16, #tpu.memory_space<vmem>>, vector<1x64x128xbf16>,
    %cst_63 = arith.constant 0.000000e+00 : f32
    %87 = vector.broadcast %cst_63 : f32 to vector<6x128xf32>
    %cst_64 = arith.constant dense<0.000000e+00> : vector<128xf32>
    %88 = vector.multi_reduction <add>, %82, %cst_64 [0] : vector<64x128xf32> to vector<128xf32>
    %89 = vector.shape_cast %88 : vector<128xf32> to vector<1x128xf32>
    %90 = arith.mulf %82, %82 : vector<64x128xf32>
    %cst_65 = arith.constant dense<0.000000e+00> : vector<128xf32>
    %91 = vector.multi_reduction <add>, %90, %cst_65 [0] : vector<64x128xf32> to vector<128xf32>
    %92 = vector.shape_cast %91 : vector<128xf32> to vector<1x128xf32>
    %93 = tpu.concatenate %89, %92, %87 in 0 : vector<1x128xf32>, vector<1x128xf32>, vector<6x128xf32> -> vector<8x128xf32>
    %c0_66 = arith.constant 0 : index
    %c0_67 = arith.constant 0 : index
    %c0_68 = arith.constant 0 : index
    %94 = vector.load %arg5[%c0_66, %c0_67, %c0_68] : memref<1x8x128xf32, #tpu.memory_space<vmem>>, vector<1x8x128xf32>
    %95 = vector.shape_cast %94 : vector<1x8x128xf32> to vector<8x128xf32>
    %96 = vector.shape_cast %93 : vector<8x128xf32> to vector<1x8x128xf32>
    tpu.vector_store %arg5[%c0_66, %c0_67, %c0_68], %96 {strides = array<i32>} : memref<1x8x128xf32, #tpu.memory_space<vmem>>, vector<1x8x128xf32>,
    return
  }
  func.func @transform_0(%arg0: i32, %arg1: i32) -> (i32, i32, i32, i32) {
    %c0_i32 = arith.constant 0 : i32
    %c0_i32_0 = arith.constant 0 : i32
    %c0_i32_1 = arith.constant 0 : i32
    %c0_i32_2 = arith.constant 0 : i32
    return %arg0, %c0_i32, %c0_i32_0, %c0_i32_1 : i32, i32, i32, i32
  }
  func.func @transform_1(%arg0: i32, %arg1: i32) -> (i32, i32, i32) {
    %c0_i32 = arith.constant 0 : i32
    %c0_i32_0 = arith.constant 0 : i32
    %c0_i32_1 = arith.constant 0 : i32
    %c0_i32_2 = arith.constant 0 : i32
    return %c0_i32, %c0_i32_0, %c0_i32_1 : i32, i32, i32
  }
  func.func @transform_2(%arg0: i32, %arg1: i32) -> (i32, i32, i32) {
    %c0_i32 = arith.constant 0 : i32
    %c0_i32_0 = arith.constant 0 : i32
    return %arg0, %arg1, %c0_i32 : i32, i32, i32
  }
  func.func @transform_3(%arg0: i32, %arg1: i32) -> (i32, i32, i32) {
    %c1_i32 = arith.constant 1 : i32
    %0 = arith.muli %arg0, %c1_i32 : i32
    %1 = arith.addi %0, %arg1 : i32
    %c0_i32 = arith.constant 0 : i32
    %c0_i32_0 = arith.constant 0 : i32
    %c0_i32_1 = arith.constant 0 : i32
    return %1, %c0_i32, %c0_i32_0 : i32, i32, i32
  }
}

module attributes {stable_mosaic.version = 11 : i64} {
  func.func @_bn_add_relu_kernel(%arg0: i32, %arg1: memref<128x128xbf16, #tpu.memory_space<vmem>>, %arg2: memref<128x128xbf16, #tpu.memory_space<vmem>>, %arg3: memref<1x128xf32, #tpu.memory_space<vmem>>, %arg4: memref<1x128xf32, #tpu.memory_space<vmem>>, %arg5: memref<1x128xf32, #tpu.memory_space<vmem>>, %arg6: memref<1x128xf32, #tpu.memory_space<vmem>>, %arg7: memref<128x128xbf16, #tpu.memory_space<vmem>>) attributes {dimension_semantics = [#tpu.dimension_semantics<parallel>], iteration_bounds = array<i64: 1>, scalar_prefetch = 0 : i64, scratch_operands = 0 : i64, tpu.core_type = #tpu.core_type<tc>, window_params = [{transform_indices = @transform_0, window_bounds = array<i64: 128, 128>}, {transform_indices = @transform_1, window_bounds = array<i64: 128, 128>}, {pipeline_mode = #tpu.pipeline_mode<synchronous>, transform_indices = @transform_2, window_bounds = array<i64: 1, 128>}, {pipeline_mode = #tpu.pipeline_mode<synchronous>, transform_indices = @transform_3, window_bounds = array<i64: 1, 128>}, {pipeline_mode = #tpu.pipeline_mode<synchronous>, transform_indices = @transform_4, window_bounds = array<i64: 1, 128>}, {pipeline_mode = #tpu.pipeline_mode<synchronous>, transform_indices = @transform_5, window_bounds = array<i64: 1, 128>}, {transform_indices = @transform_6, window_bounds = array<i64: 128, 128>}]} {
    %c0 = arith.constant 0 : index
    %c0_0 = arith.constant 0 : index
    %0 = vector.load %arg1[%c0, %c0_0] : memref<128x128xbf16, #tpu.memory_space<vmem>>, vector<128x128xbf16>
    %1 = arith.extf %0 : vector<128x128xbf16> to vector<128x128xf32>
    %c0_1 = arith.constant 0 : index
    %c0_2 = arith.constant 0 : index
    %2 = vector.load %arg3[%c0_1, %c0_2] : memref<1x128xf32, #tpu.memory_space<vmem>>, vector<1x128xf32>
    %3 = vector.broadcast %2 : vector<1x128xf32> to vector<128x128xf32>
    %4 = arith.mulf %1, %3 : vector<128x128xf32>
    %c0_3 = arith.constant 0 : index
    %c0_4 = arith.constant 0 : index
    %5 = vector.load %arg4[%c0_3, %c0_4] : memref<1x128xf32, #tpu.memory_space<vmem>>, vector<1x128xf32>
    %6 = vector.broadcast %5 : vector<1x128xf32> to vector<128x128xf32>
    %7 = arith.addf %4, %6 : vector<128x128xf32>
    %c0_5 = arith.constant 0 : index
    %c0_6 = arith.constant 0 : index
    %8 = vector.load %arg2[%c0_5, %c0_6] : memref<128x128xbf16, #tpu.memory_space<vmem>>, vector<128x128xbf16>
    %9 = arith.extf %8 : vector<128x128xbf16> to vector<128x128xf32>
    %c0_7 = arith.constant 0 : index
    %c0_8 = arith.constant 0 : index
    %10 = vector.load %arg5[%c0_7, %c0_8] : memref<1x128xf32, #tpu.memory_space<vmem>>, vector<1x128xf32>
    %11 = vector.broadcast %10 : vector<1x128xf32> to vector<128x128xf32>
    %12 = arith.mulf %9, %11 : vector<128x128xf32>
    %c0_9 = arith.constant 0 : index
    %c0_10 = arith.constant 0 : index
    %13 = vector.load %arg6[%c0_9, %c0_10] : memref<1x128xf32, #tpu.memory_space<vmem>>, vector<1x128xf32>
    %14 = vector.broadcast %13 : vector<1x128xf32> to vector<128x128xf32>
    %15 = arith.addf %12, %14 : vector<128x128xf32>
    %16 = arith.addf %7, %15 : vector<128x128xf32>
    %cst = arith.constant 0.000000e+00 : f32
    %17 = vector.broadcast %cst : f32 to vector<128x128xf32>
    %18 = arith.maximumf %16, %17 : vector<128x128xf32>
    %19 = arith.truncf %18 : vector<128x128xf32> to vector<128x128xbf16>
    %c0_11 = arith.constant 0 : index
    %c0_12 = arith.constant 0 : index
    %20 = vector.load %arg7[%c0_11, %c0_12] : memref<128x128xbf16, #tpu.memory_space<vmem>>, vector<128x128xbf16>
    tpu.vector_store %arg7[%c0_11, %c0_12], %19 {strides = array<i32>} : memref<128x128xbf16, #tpu.memory_space<vmem>>, vector<128x128xbf16>,
    return
  }
  func.func @transform_0(%arg0: i32) -> (i32, i32) {
    %c0_i32 = arith.constant 0 : i32
    %c0_i32_0 = arith.constant 0 : i32
    return %arg0, %c0_i32 : i32, i32
  }
  func.func @transform_1(%arg0: i32) -> (i32, i32) {
    %c0_i32 = arith.constant 0 : i32
    %c0_i32_0 = arith.constant 0 : i32
    return %arg0, %c0_i32 : i32, i32
  }
  func.func @transform_2(%arg0: i32) -> (i32, i32) {
    %c0_i32 = arith.constant 0 : i32
    %c0_i32_0 = arith.constant 0 : i32
    %c0_i32_1 = arith.constant 0 : i32
    return %c0_i32, %c0_i32_0 : i32, i32
  }
  func.func @transform_3(%arg0: i32) -> (i32, i32) {
    %c0_i32 = arith.constant 0 : i32
    %c0_i32_0 = arith.constant 0 : i32
    %c0_i32_1 = arith.constant 0 : i32
    return %c0_i32, %c0_i32_0 : i32, i32
  }
  func.func @transform_4(%arg0: i32) -> (i32, i32) {
    %c0_i32 = arith.constant 0 : i32
    %c0_i32_0 = arith.constant 0 : i32
    %c0_i32_1 = arith.constant 0 : i32
    return %c0_i32, %c0_i32_0 : i32, i32
  }
  func.func @transform_5(%arg0: i32) -> (i32, i32) {
    %c0_i32 = arith.constant 0 : i32
    %c0_i32_0 = arith.constant 0 : i32
    %c0_i32_1 = arith.constant 0 : i32
    return %c0_i32, %c0_i32_0 : i32, i32
  }
  func.func @transform_6(%arg0: i32) -> (i32, i32) {
    %c0_i32 = arith.constant 0 : i32
    %c0_i32_0 = arith.constant 0 : i32
    return %arg0, %c0_i32 : i32, i32
  }
}

</mosaic_0001>

<llo_original>
// kernel: basic_block_forward.5
$region0: #{basic_block_forward.5}
  #allocation0 [shape = 'u32[]', space=smem, size = 0x4, offset = 0x4, fixed_abs, tag = 'smem constant byte address 0x4 - core index']
  #allocation1 [shape = 'u32[144,128]{1,0:T(1,128)}', space=vmem, size = 0x12000, scoped, tag = 'internal scratch']
  %s0 = inlined_call_operand.vmem [shape: bf16[2,64,128], index: 0, kind: input, shape index: {}]
  %s1 = inlined_call_operand.vmem [shape: f32[1,128], index: 1, kind: input, shape index: {}]
  %s2 = inlined_call_operand.vmem [shape: f32[1,128], index: 2, kind: input, shape index: {}]
  %s3 = inlined_call_operand.vmem [shape: bf16[2,10,10,128], index: 3, kind: output, shape index: {}]
  %s4 = sld [smem:[#allocation0]]
  $region45: #{basic_block_forward.5} parent=0
    _
  %s6 = ssub.s32 1, %s4
  %s7 = scalar_select 0, %s6, %s4
  loop: start=0, step=1, limit=4
  $region2: #{basic_block_forward.5} parent=0 // loop_pre_header
    _
  $region3: #{basic_block_forward.5} parent=0 // loop_header
    %s9 = sphi 0, %s13
    %p10 = scmp.ge.s32.totalorder %s9, 4
    %s19 = sphi 0, %s21
    %s22 = sphi 0, %s19
    %s23 = sphi 0, %s22
    %s39 = sphi 0, %s23
    %s43 = sphi 0, %s43
    %s45 = sphi 0, %s43
    %s46 = sphi 0, %s45
    %s60 = sphi 0, %s46
    %s64 = sphi 0, %s64
    %s66 = sphi 0, %s64
    %s67 = sphi 0, %s66
    %s81 = sphi 0, %s67
    %s87 = sphi 0, %s89
    %s90 = sphi 0, %s87
    %s91 = sphi 0, %s90
    %s107 = sphi 0, %s91
  $region4: #{basic_block_forward.5} parent=0 // loop_header_branch
    %12 = sbr.rel (%p10) target = $region8
  $region5: #{basic_block_forward.5} parent=0 // loop_body
    %s14 = ssub.s32 %s9, 1
    %s15 = ssub.s32 %s9, 2
    %s16 = sadd.s32 %s9, 1
    %s17 = ssub.s32 %s9, %s16
    %p18 = scmp.eq.s32.totalorder %s17, 0
    %s20 = sadd.s32 %s19, 1
    %s21 = scalar_select %p18, %s19, %s20
    %p24 = pneg %p18
    %p25 = scmp.eq.s32.totalorder %s9, 1
    %p26 = por %p24, %p25
    %p27 = scmp.ne.s32.totalorder %s19, %s22
    %p28 = scmp.eq.s32.totalorder %s9, 0
    %p29 = por %p27, %p28
    %p30 = scmp.ne.s32.totalorder %s19, %s22
    %p31 = scmp.eq.s32.totalorder %s14, 1
    %p32 = por %p30, %p31
    %p33 = scmp.ne.s32.totalorder %s22, %s23
    %p34 = scmp.eq.s32.totalorder %s14, 0
    %p35 = por %p33, %p34
    %p36 = scmp.ne.s32.totalorder %s22, %s23
    %p37 = scmp.eq.s32.totalorder %s15, 1
    %p38 = por %p36, %p37
    %p40 = scmp.ne.s32.totalorder %s23, %s39
    %p41 = scmp.eq.s32.totalorder %s15, 0
    %p42 = por %p40, %p41
    %s44 = sadd.s32 %s43, 1
    %p47 = scmp.eq.s32.totalorder %s9, 1
    %p48 = scmp.ne.s32.totalorder %s43, %s45
    %p49 = scmp.eq.s32.totalorder %s9, 0
    %p50 = por %p48, %p49
    %p51 = scmp.ne.s32.totalorder %s43, %s45
    %p52 = scmp.eq.s32.totalorder %s14, 1
    %p53 = por %p51, %p52
    %p54 = scmp.ne.s32.totalorder %s45, %s46
    %p55 = scmp.eq.s32.totalorder %s14, 0
    %p56 = por %p54, %p55
    %p57 = scmp.ne.s32.totalorder %s45, %s46
    %p58 = scmp.eq.s32.totalorder %s15, 1
    %p59 = por %p57, %p58
    %p61 = scmp.ne.s32.totalorder %s46, %s60
    %p62 = scmp.eq.s32.totalorder %s15, 0
    %p63 = por %p61, %p62
    %s65 = sadd.s32 %s64, 1
    %p68 = scmp.eq.s32.totalorder %s9, 1
    %p69 = scmp.ne.s32.totalorder %s64, %s66
    %p70 = scmp.eq.s32.totalorder %s9, 0
    %p71 = por %p69, %p70
    %p72 = scmp.ne.s32.totalorder %s64, %s66
    %p73 = scmp.eq.s32.totalorder %s14, 1
    %p74 = por %p72, %p73
    %p75 = scmp.ne.s32.totalorder %s66, %s67
    %p76 = scmp.eq.s32.totalorder %s14, 0
    %p77 = por %p75, %p76
    %p78 = scmp.ne.s32.totalorder %s66, %s67
    %p79 = scmp.eq.s32.totalorder %s15, 1
    %p80 = por %p78, %p79
    %p82 = scmp.ne.s32.totalorder %s67, %s81
    %p83 = scmp.eq.s32.totalorder %s15, 0
    %p84 = por %p82, %p83
    %s85 = ssub.s32 %s9, %s16
    %p86 = scmp.eq.s32.totalorder %s85, 0
    %s88 = sadd.s32 %s87, 1
    %s89 = scalar_select %p86, %s87, %s88
    %p92 = pneg %p86
    %p93 = scmp.eq.s32.totalorder %s9, 1
    %p94 = por %p92, %p93
    %p95 = scmp.ne.s32.totalorder %s87, %s90
    %p96 = scmp.eq.s32.totalorder %s9, 0
    %p97 = por %p95, %p96
    %p98 = scmp.ne.s32.totalorder %s87, %s90
    %p99 = scmp.eq.s32.totalorder %s14, 1
    %p100 = por %p98, %p99
    %p101 = scmp.ne.s32.totalorder %s90, %s91
    %p102 = scmp.eq.s32.totalorder %s14, 0
    %p103 = por %p101, %p102
    %p104 = scmp.ne.s32.totalorder %s90, %s91
    %p105 = scmp.eq.s32.totalorder %s15, 1
    %p106 = por %p104, %p105
    %p108 = scmp.ne.s32.totalorder %s91, %s107
    %p109 = scmp.eq.s32.totalorder %s15, 0
    %p110 = por %p108, %p109
    %p111 = scmp.le.s32.totalorder 1, %s9
    %p112 = scmp.lt.s32.totalorder %s9, 3
    %p113 = pnand %p111, %p112
    %p114 = pneg %p113
    // Predicated region
    $region9: #{basic_block_forward.5} parent=5 // pred_check
      _
    $region10: #{basic_block_forward.5} parent=5 // pred_check_branch
      %116 = sbr.rel (%p113) target = $region12
    $region11: #{basic_block_forward.5} parent=5 // pred_region
      %s117 = ssub.s32 %s9, 1
      // Predicated region
      $region13: #{basic_block_forward.5} parent=11 // pred_check
        %p118 = pneg %p56
      $region14: #{basic_block_forward.5} parent=11 // pred_check_branch
        %120 = sbr.rel (%p118) target = $region16
      $region15: #{basic_block_forward.5} parent=11 // pred_region
        _
      $region16: #{basic_block_forward.5} parent=11 // pred_fallthru
        _
      // Predicated region
      $region17: #{basic_block_forward.5} parent=11 // pred_check
        %p121 = pneg %p77
      $region18: #{basic_block_forward.5} parent=11 // pred_check_branch
        %123 = sbr.rel (%p121) target = $region20
      $region19: #{basic_block_forward.5} parent=11 // pred_region
        _
      $region20: #{basic_block_forward.5} parent=11 // pred_fallthru
        _
    $region12: #{basic_block_forward.5} parent=5 // pred_fallthru
      _
    %p124 = scmp.lt.s32.totalorder %s9, 2
    // Predicated region
    $region21: #{basic_block_forward.5} parent=5 // pred_check
      %p125 = pneg %p124
    $region22: #{basic_block_forward.5} parent=5 // pred_check_branch
      %127 = sbr.rel (%p125) target = $region24
    $region23: #{basic_block_forward.5} parent=5 // pred_region
      // Predicated region
      $region25: #{basic_block_forward.5} parent=23 // pred_check
        %p128 = pneg %p29
      $region26: #{basic_block_forward.5} parent=23 // pred_check_branch
        %130 = sbr.rel (%p128) target = $region28
      $region27: #{basic_block_forward.5} parent=23 // pred_region
        %p131 = scmp.lt.s32.totalorder %s9, 1
        %s132 = scalar_select %p131, %s9, 1
        %s133 = smul.addr %s132, 8
        %s134 = smul.addr %s133, 4
        %s135 = scalar_lea.vmem %s0, %s134
      $region28: #{basic_block_forward.5} parent=23 // pred_fallthru
        _
    $region24: #{basic_block_forward.5} parent=5 // pred_fallthru
      _
    %p136 = scmp.le.s32.totalorder 1, %s9
    %p137 = scmp.lt.s32.totalorder %s9, 3
    %p138 = pnand %p136, %p137
    %p139 = pneg %p138
    // Predicated region
    $region29: #{basic_block_forward.5} parent=5 // pred_check
      _
    $region30: #{basic_block_forward.5} parent=5 // pred_check_branch
      %141 = sbr.rel (%p138) target = $region32
    $region31: #{basic_block_forward.5} parent=5 // pred_region
      %s142 = ssub.s32 %s9, 1
      %p143 = scmp.lt.s32.totalorder %s14, 1
      %s144 = scalar_select %p143, %s14, 1
      %s145 = smul.addr %s144, 8
      %s146 = smul.addr %s145, 4
      %s147 = scalar_lea.vmem %s0, %s146
      %p148 = pneg %p35
      %p149 = pneg %p32
      %p150 = pneg %p56
      %p151 = pneg %p53
      %p152 = pneg %p77
      %p153 = pneg %p74
      %p154 = pneg %p103
      %p155 = pneg %p100
      %p156 = scmp.lt.s32.totalorder %s14, 1
      %s157 = scalar_select %p156, %s14, 1
      %s158 = smul.addr %s157, 20
      %s159 = smul.addr %s158, 4
      %s160 = scalar_lea.vmem %s3, %s159
      %p161 = scmp.lt.s32.totalorder %s14, 1
      %s162 = scalar_select %p161, %s14, 1
      %s163 = smul.addr %s162, 8
      %s164 = smul.addr %s163, 4
      %s165 = scalar_lea.vmem %s0, %s164
      %p166 = scmp.lt.s32.totalorder %s14, 1
      %s167 = scalar_select %p166, %s14, 1
      %s168 = smul.addr %s167, 20
      %s169 = smul.addr %s168, 4
      %s170 = scalar_lea.vmem %s3, %s169
      %v172 = vld [vmem:[%s165] sm:$0xf]
      %v173 = vld [vmem:[%s165 + $0x4] sm:$0xf]
      %v174 = vld [vmem:[%s165 + $0x8] sm:$0xf]
      %v175 = vld [vmem:[%s165 + $0xc] sm:$0xf]
      %v176 = vld [vmem:[%s165 + $0x10] sm:$0xf]
      %v177 = vld [vmem:[%s165 + $0x14] sm:$0xf]
      %v178 = vld [vmem:[%s165 + $0x18] sm:$0xf]
      %v179 = vld [vmem:[%s165 + $0x1c] sm:$0xf]
      %v180 = vunpack.c.l.bf16 %v172
      %v181 = vunpack.c.l.bf16 %v173
      %v182 = vunpack.c.l.bf16 %v174
      %v183 = vunpack.c.l.bf16 %v175
      %v184 = vunpack.c.l.bf16 %v176
      %v185 = vunpack.c.l.bf16 %v177
      %v186 = vunpack.c.l.bf16 %v178
      %v187 = vunpack.c.l.bf16 %v179
      %v188 = vld [vmem:[%s1] sm:$0x1]
      %v190 = vlaneseq
      %v191 = vshrl.u32 %v190, 7
      %v192 = vsub.s32 0, %v191
      %v193 = vrot.slane %v188, %v192
      %v195 = vmul.f32 %v180, %v193
      %v196 = vmul.f32 %v181, %v193
      %v197 = vmul.f32 %v182, %v193
      %v198 = vmul.f32 %v183, %v193
      %v199 = vmul.f32 %v184, %v193
      %v200 = vmul.f32 %v185, %v193
      %v201 = vmul.f32 %v186, %v193
      %v202 = vmul.f32 %v187, %v193
      %v203 = vld [vmem:[%s2] sm:$0x1]
      %v205 = vlaneseq
      %v206 = vshrl.u32 %v205, 7
      %v207 = vsub.s32 0, %v206
      %v208 = vrot.slane %v203, %v207
      %v210 = vadd.f32 %v195, %v208
      %v211 = vadd.f32 %v196, %v208
      %v212 = vadd.f32 %v197, %v208
      %v213 = vadd.f32 %v198, %v208
      %v214 = vadd.f32 %v199, %v208
      %v215 = vadd.f32 %v200, %v208
      %v216 = vadd.f32 %v201, %v208
      %v217 = vadd.f32 %v202, %v208
      %v218 = vmax.f32 %v210, 0.0
      %v219 = vmax.f32 %v211, 0.0
      %v220 = vmax.f32 %v212, 0.0
      %v221 = vmax.f32 %v213, 0.0
      %v222 = vmax.f32 %v214, 0.0
      %v223 = vmax.f32 %v215, 0.0
      %v224 = vmax.f32 %v216, 0.0
      %v225 = vmax.f32 %v217, 0.0
      %v226 = vpack.c.bf16 %v218, %v218
      %v227 = vpack.c.bf16 %v219, %v219
      %v228 = vpack.c.bf16 %v220, %v220
      %v229 = vpack.c.bf16 %v221, %v221
      %v230 = vpack.c.bf16 %v222, %v222
      %v231 = vpack.c.bf16 %v223, %v223
      %v232 = vpack.c.bf16 %v224, %v224
      %v233 = vpack.c.bf16 %v225, %v225
      %234 = vst [vmem:[%s170] sm:$0xf] 0
      %235 = vst [vmem:[%s170 + $0x4] sm:$0x1] 0
      %236 = vst [vmem:[%s170 + $0x8] sm:$0xf] 0
      %237 = vst [vmem:[%s170 + $0xc] sm:$0x1] 0
      %238 = vst [vmem:[%s170 + $0x10] sm:$0xf] 0
      %239 = vst [vmem:[%s170 + $0x14] sm:$0x1] 0
      %240 = vst [vmem:[%s170 + $0x18] sm:$0xf] 0
      %241 = vst [vmem:[%s170 + $0x1c] sm:$0x1] 0
      %242 = vst [vmem:[%s170 + $0x20] sm:$0xf] 0
      %243 = vst [vmem:[%s170 + $0x24] sm:$0x1] 0
      %244 = vst [vmem:[%s170 + $0x28] sm:$0xf] 0
      %245 = vst [vmem:[%s170 + $0x2c] sm:$0x1] 0
      %246 = vst [vmem:[%s170 + $0x30] sm:$0xf] 0
      %247 = vst [vmem:[%s170 + $0x34] sm:$0x1] 0
      %248 = vst [vmem:[%s170 + $0x38] sm:$0xf] 0
      %249 = vst [vmem:[%s170 + $0x3c] sm:$0x1] 0
      %250 = vst [vmem:[%s170 + $0x40] sm:$0xf] 0
      %251 = vst [vmem:[%s170 + $0x44] sm:$0x1] 0
      %252 = vst [vmem:[%s170 + $0x48] sm:$0xf] 0
      %253 = vst [vmem:[%s170 + $0x4c] sm:$0x1] 0
      %v262 = vunpack.c.l.b16 %v226
      %v263 = vunpack.c.l.b16 %v227
      %v264 = vunpack.c.l.b16 %v228
      %v265 = vunpack.c.l.b16 %v229
      %v266 = vunpack.c.l.b16 %v230
      %v267 = vunpack.c.l.b16 %v231
      %v268 = vunpack.c.l.b16 %v232
      %v269 = vunpack.c.l.b16 %v233
      %v270 = vpack.c.b16 %v262, %v262
      %v271 = vpack.c.b16 %v263, %v263
      %v272 = vpack.c.b16 %v264, %v264
      %v273 = vpack.c.b16 %v265, %v265
      %v274 = vpack.c.b16 %v266, %v266
      %v275 = vpack.c.b16 %v267, %v267
      %v276 = vpack.c.b16 %v268, %v268
      %v277 = vpack.c.b16 %v269, %v269
      %v279 = vshrl.u32 %v270, 16
      %v281 = vrot.slane %v279, 7
      %v282 = vshll.u32 %v270, 16
      %v284 = vor.u32 %v281, %v282
      %v285 = vrot.slane %v281, 4
      %v287 = vshrl.u32 %v271, 16
      %v289 = vrot.slane %v287, 7
      %v290 = vshll.u32 %v271, 16
      %v292 = vor.u32 %v289, %v290
      %v293 = vrot.slane %v289, 4
      %v295 = vshrl.u32 %v272, 16
      %v297 = vrot.slane %v295, 7
      %v298 = vshll.u32 %v272, 16
      %v300 = vor.u32 %v297, %v298
      %v301 = vrot.slane %v297, 4
      %v303 = vshrl.u32 %v273, 16
      %v305 = vrot.slane %v303, 7
      %v306 = vshll.u32 %v273, 16
      %v308 = vor.u32 %v305, %v306
      %v309 = vrot.slane %v305, 4
      %v311 = vshrl.u32 %v274, 16
      %v313 = vrot.slane %v311, 7
      %v314 = vshll.u32 %v274, 16
      %v316 = vor.u32 %v313, %v314
      %v317 = vrot.slane %v313, 4
      %v319 = vshrl.u32 %v275, 16
      %v321 = vrot.slane %v319, 7
      %v322 = vshll.u32 %v275, 16
      %v324 = vor.u32 %v321, %v322
      %v325 = vrot.slane %v321, 4
      %v327 = vshrl.u32 %v276, 16
      %v329 = vrot.slane %v327, 7
      %v330 = vshll.u32 %v276, 16
      %v332 = vor.u32 %v329, %v330
      %v333 = vrot.slane %v329, 4
      %v335 = vshrl.u32 %v277, 16
      %v337 = vrot.slane %v335, 7
      %v338 = vshll.u32 %v277, 16
      %v340 = vor.u32 %v337, %v338
      %v341 = vrot.slane %v337, 4
      %s358 = scalar_lea.vmem %s170, 8
      %vm359 = vcmask 1043456
      %vm360 = vsmask.f32 7938
      %vm361 = vmand %vm359, %vm360
      %v362 = vld [vmem:[%s358] sm:$0xf]
      %v363 = vsel %vm361, %v284, %v362
      %364 = vst [vmem:[%s358] sm:$0xf] %v363
      %vm365 = vcmask 1040384
      %vm366 = vsmask.f32 256
      %vm367 = vmand %vm365, %vm366
      %v368 = vld [vmem:[%s358 + $0x4] sm:$0x1]
      %v369 = vsel %vm367, %v285, %v368
      %370 = vst [vmem:[%s358 + $0x4] sm:$0x1] %v369
      %v371 = vld [vmem:[%s358 + $0x8] sm:$0xf]
      %v372 = vsel %vm361, %v292, %v371
      %373 = vst [vmem:[%s358 + $0x8] sm:$0xf] %v372
      %v374 = vld [vmem:[%s358 + $0xc] sm:$0x1]
      %v375 = vsel %vm367, %v293, %v374
      %376 = vst [vmem:[%s358 + $0xc] sm:$0x1] %v375
      %v377 = vld [vmem:[%s358 + $0x10] sm:$0xf]
      %v378 = vsel %vm361, %v300, %v377
      %379 = vst [vmem:[%s358 + $0x10] sm:$0xf] %v378
      %v380 = vld [vmem:[%s358 + $0x14] sm:$0x1]
      %v381 = vsel %vm367, %v301, %v380
      %382 = vst [vmem:[%s358 + $0x14] sm:$0x1] %v381
      %v383 = vld [vmem:[%s358 + $0x18] sm:$0xf]
      %v384 = vsel %vm361, %v308, %v383
      %385 = vst [vmem:[%s358 + $0x18] sm:$0xf] %v384
      %v386 = vld [vmem:[%s358 + $0x1c] sm:$0x1]
      %v387 = vsel %vm367, %v309, %v386
      %388 = vst [vmem:[%s358 + $0x1c] sm:$0x1] %v387
      %v389 = vld [vmem:[%s358 + $0x20] sm:$0xf]
      %v390 = vsel %vm361, %v316, %v389
      %391 = vst [vmem:[%s358 + $0x20] sm:$0xf] %v390
      %v392 = vld [vmem:[%s358 + $0x24] sm:$0x1]
      %v393 = vsel %vm367, %v317, %v392
      %394 = vst [vmem:[%s358 + $0x24] sm:$0x1] %v393
      %v395 = vld [vmem:[%s358 + $0x28] sm:$0xf]
      %v396 = vsel %vm361, %v324, %v395
      %397 = vst [vmem:[%s358 + $0x28] sm:$0xf] %v396
      %v398 = vld [vmem:[%s358 + $0x2c] sm:$0x1]
      %v399 = vsel %vm367, %v325, %v398
      %400 = vst [vmem:[%s358 + $0x2c] sm:$0x1] %v399
      %v401 = vld [vmem:[%s358 + $0x30] sm:$0xf]
      %v402 = vsel %vm361, %v332, %v401
      %403 = vst [vmem:[%s358 + $0x30] sm:$0xf] %v402
      %v404 = vld [vmem:[%s358 + $0x34] sm:$0x1]
      %v405 = vsel %vm367, %v333, %v404
      %406 = vst [vmem:[%s358 + $0x34] sm:$0x1] %v405
      %v407 = vld [vmem:[%s358 + $0x38] sm:$0xf]
      %v408 = vsel %vm361, %v340, %v407
      %409 = vst [vmem:[%s358 + $0x38] sm:$0xf] %v408
      %v410 = vld [vmem:[%s358 + $0x3c] sm:$0x1]
      %v411 = vsel %vm367, %v341, %v410
      %412 = vst [vmem:[%s358 + $0x3c] sm:$0x1] %v411
      %p413 = scmp.lt.s32.totalorder %s14, 1
      %s414 = scalar_select %p413, %s14, 1
      %s415 = smul.addr %s414, 20
      %s416 = smul.addr %s415, 4
      %s417 = scalar_lea.vmem %s3, %s416
      // Predicated region
      $region33: #{basic_block_forward.5} parent=31 // pred_check
        %p418 = pneg %p100
      $region34: #{basic_block_forward.5} parent=31 // pred_check_branch
        %420 = sbr.rel (%p418) target = $region36
      $region35: #{basic_block_forward.5} parent=31 // pred_region
        _
      $region36: #{basic_block_forward.5} parent=31 // pred_fallthru
        _
    $region32: #{basic_block_forward.5} parent=5 // pred_fallthru
      _
    %p421 = scmp.le.s32.totalorder 2, %s9
    // Predicated region
    $region37: #{basic_block_forward.5} parent=5 // pred_check
      %p422 = pneg %p421
    $region38: #{basic_block_forward.5} parent=5 // pred_check_branch
      %424 = sbr.rel (%p422) target = $region40
    $region39: #{basic_block_forward.5} parent=5 // pred_region
      %s425 = ssub.s32 %s9, 2
      // Predicated region
      $region41: #{basic_block_forward.5} parent=39 // pred_check
        %p426 = pneg %p106
      $region42: #{basic_block_forward.5} parent=39 // pred_check_branch
        %428 = sbr.rel (%p426) target = $region44
      $region43: #{basic_block_forward.5} parent=39 // pred_region
        %p429 = scmp.lt.s32.totalorder %s15, 1
        %s430 = scalar_select %p429, %s15, 1
        %s431 = smul.addr %s430, 20
        %s432 = smul.addr %s431, 4
        %s433 = scalar_lea.vmem %s3, %s432
      $region44: #{basic_block_forward.5} parent=39 // pred_fallthru
        _
    $region40: #{basic_block_forward.5} parent=5 // pred_fallthru
      _
  $region6: #{basic_block_forward.5} parent=0 // loop_footer
    %s13 = sadd.s32 1, %s9
  $region7: #{basic_block_forward.5} parent=0 // loop_footer_branch
    %8 = sbr.rel target = $region3
  $region8: #{basic_block_forward.5} parent=0 // loop_exit
    _

// kernel: basic_block_forward.4
$region0: #{basic_block_forward.4}
  #allocation0 [shape = 'u32[]', space=smem, size = 0x4, offset = 0x4, fixed_abs, tag = 'smem constant byte address 0x4 - core index']
  #allocation1 [shape = 'u32[144,128]{1,0:T(1,128)}', space=vmem, size = 0x12000, scoped, tag = 'internal scratch']
  %s0 = inlined_call_operand.vmem [shape: bf16[8,9,9,128], index: 0, kind: input, shape index: {}]
  %s1 = inlined_call_operand.vmem [shape: bf16[9,128,128], index: 1, kind: input, shape index: {}]
  %s2 = inlined_call_operand.vmem [shape: bf16[128,128], index: 2, kind: input, shape index: {}]
  %s3 = inlined_call_operand.vmem [shape: bf16[2,64,128], index: 3, kind: output, shape index: {0}]
  %s4 = inlined_call_operand.vmem [shape: f32[2,8,128], index: 4, kind: output, shape index: {1}]
  %s5 = inlined_call_operand.vmem [shape: bf16[2,64,128], index: 5, kind: output, shape index: {2}]
  %s6 = inlined_call_operand.vmem [shape: f32[2,8,128], index: 6, kind: output, shape index: {3}]
  %7 = xla_tuple %s3, %s4, %s5, %s6
  %s8 = sld [smem:[#allocation0]]
  $region69: #{basic_block_forward.4} parent=0
    _
  %s10 = ssub.s32 1, %s8
  %s11 = scalar_select 0, %s10, %s8
  loop: start=0, step=1, limit=4
  $region2: #{basic_block_forward.4} parent=0 // loop_pre_header
    _
  $region3: #{basic_block_forward.4} parent=0 // loop_header
    %s13 = sphi 0, %s17
    %p14 = scmp.ge.s32.totalorder %s13, 4
    %s20 = sphi 0, %s32
    %s21 = sphi 0, %s28
    %s22 = sphi 0, %s20
    %s23 = sphi 0, %s21
    %s24 = sphi 0, %s22
    %s25 = sphi 0, %s23
    %s35 = sphi 0, %s37
    %s38 = sphi 0, %s35
    %s39 = sphi 0, %s38
    %s55 = sphi 0, %s39
    %s59 = sphi 0, %s59
    %s61 = sphi 0, %s59
    %s62 = sphi 0, %s61
    %s76 = sphi 0, %s62
    %s80 = sphi 0, %s80
    %s82 = sphi 0, %s80
    %s83 = sphi 0, %s82
    %s97 = sphi 0, %s83
    %s105 = sphi 0, %s107
    %s108 = sphi 0, %s105
    %s109 = sphi 0, %s108
    %s125 = sphi 0, %s109
    %s133 = sphi 0, %s135
    %s136 = sphi 0, %s133
    %s137 = sphi 0, %s136
    %s153 = sphi 0, %s137
    %s161 = sphi 0, %s163
    %s164 = sphi 0, %s161
    %s165 = sphi 0, %s164
    %s181 = sphi 0, %s165
    %s189 = sphi 0, %s191
    %s192 = sphi 0, %s189
    %s193 = sphi 0, %s192
    %s209 = sphi 0, %s193
  $region4: #{basic_block_forward.4} parent=0 // loop_header_branch
    %16 = sbr.rel (%p14) target = $region8
  $region5: #{basic_block_forward.4} parent=0 // loop_body
    %s18 = ssub.s32 %s13, 1
    %s19 = ssub.s32 %s13, 2
    %s26 = sadd.s32 1, %s21
    %p27 = scmp.ge.s32.totalorder %s26, 1
    %s28 = scalar_select %p27, 0, %s26
    %s29 = sadd.s32 1, %s20
    %s30 = scalar_select %p27, %s29, %s20
    %p31 = scmp.ge.s32.totalorder %s30, 2
    %s32 = scalar_select %p31, 0, %s30
    %s33 = ssub.s32 %s20, %s32
    %p34 = scmp.eq.s32.totalorder %s33, 0
    %s36 = sadd.s32 %s35, 1
    %s37 = scalar_select %p34, %s35, %s36
    %p40 = pneg %p34
    %p41 = scmp.eq.s32.totalorder %s13, 1
    %p42 = por %p40, %p41
    %p43 = scmp.ne.s32.totalorder %s35, %s38
    %p44 = scmp.eq.s32.totalorder %s13, 0
    %p45 = por %p43, %p44
    %p46 = scmp.ne.s32.totalorder %s35, %s38
    %p47 = scmp.eq.s32.totalorder %s18, 1
    %p48 = por %p46, %p47
    %p49 = scmp.ne.s32.totalorder %s38, %s39
    %p50 = scmp.eq.s32.totalorder %s18, 0
    %p51 = por %p49, %p50
    %p52 = scmp.ne.s32.totalorder %s38, %s39
    %p53 = scmp.eq.s32.totalorder %s19, 1
    %p54 = por %p52, %p53
    %p56 = scmp.ne.s32.totalorder %s39, %s55
    %p57 = scmp.eq.s32.totalorder %s19, 0
    %p58 = por %p56, %p57
    %s60 = sadd.s32 %s59, 1
    %p63 = scmp.eq.s32.totalorder %s13, 1
    %p64 = scmp.ne.s32.totalorder %s59, %s61
    %p65 = scmp.eq.s32.totalorder %s13, 0
    %p66 = por %p64, %p65
    %p67 = scmp.ne.s32.totalorder %s59, %s61
    %p68 = scmp.eq.s32.totalorder %s18, 1
    %p69 = por %p67, %p68
    %p70 = scmp.ne.s32.totalorder %s61, %s62
    %p71 = scmp.eq.s32.totalorder %s18, 0
    %p72 = por %p70, %p71
    %p73 = scmp.ne.s32.totalorder %s61, %s62
    %p74 = scmp.eq.s32.totalorder %s19, 1
    %p75 = por %p73, %p74
    %p77 = scmp.ne.s32.totalorder %s62, %s76
    %p78 = scmp.eq.s32.totalorder %s19, 0
    %p79 = por %p77, %p78
    %s81 = sadd.s32 %s80, 1
    %p84 = scmp.eq.s32.totalorder %s13, 1
    %p85 = scmp.ne.s32.totalorder %s80, %s82
    %p86 = scmp.eq.s32.totalorder %s13, 0
    %p87 = por %p85, %p86
    %p88 = scmp.ne.s32.totalorder %s80, %s82
    %p89 = scmp.eq.s32.totalorder %s18, 1
    %p90 = por %p88, %p89
    %p91 = scmp.ne.s32.totalorder %s82, %s83
    %p92 = scmp.eq.s32.totalorder %s18, 0
    %p93 = por %p91, %p92
    %p94 = scmp.ne.s32.totalorder %s82, %s83
    %p95 = scmp.eq.s32.totalorder %s19, 1
    %p96 = por %p94, %p95
    %p98 = scmp.ne.s32.totalorder %s83, %s97
    %p99 = scmp.eq.s32.totalorder %s19, 0
    %p100 = por %p98, %p99
    %s101 = ssub.s32 %s20, %s32
    %s102 = ssub.s32 %s21, %s28
    %s103 = sor.u32 %s101, %s102
    %p104 = scmp.eq.s32.totalorder %s103, 0
    %s106 = sadd.s32 %s105, 1
    %s107 = scalar_select %p104, %s105, %s106
    %p110 = pneg %p104
    %p111 = scmp.eq.s32.totalorder %s13, 1
    %p112 = por %p110, %p111
    %p113 = scmp.ne.s32.totalorder %s105, %s108
    %p114 = scmp.eq.s32.totalorder %s13, 0
    %p115 = por %p113, %p114
    %p116 = scmp.ne.s32.totalorder %s105, %s108
    %p117 = scmp.eq.s32.totalorder %s18, 1
    %p118 = por %p116, %p117
    %p119 = scmp.ne.s32.totalorder %s108, %s109
    %p120 = scmp.eq.s32.totalorder %s18, 0
    %p121 = por %p119, %p120
    %p122 = scmp.ne.s32.totalorder %s108, %s109
    %p123 = scmp.eq.s32.totalorder %s19, 1
    %p124 = por %p122, %p123
    %p126 = scmp.ne.s32.totalorder %s109, %s125
    %p127 = scmp.eq.s32.totalorder %s19, 0
    %p128 = por %p126, %p127
    %s129 = sadd.s32 %s20, %s21
    %s130 = sadd.s32 %s32, %s28
    %s131 = ssub.s32 %s129, %s130
    %p132 = scmp.eq.s32.totalorder %s131, 0
    %s134 = sadd.s32 %s133, 1
    %s135 = scalar_select %p132, %s133, %s134
    %p138 = pneg %p132
    %p139 = scmp.eq.s32.totalorder %s13, 1
    %p140 = por %p138, %p139
    %p141 = scmp.ne.s32.totalorder %s133, %s136
    %p142 = scmp.eq.s32.totalorder %s13, 0
    %p143 = por %p141, %p142
    %p144 = scmp.ne.s32.totalorder %s133, %s136
    %p145 = scmp.eq.s32.totalorder %s18, 1
    %p146 = por %p144, %p145
    %p147 = scmp.ne.s32.totalorder %s136, %s137
    %p148 = scmp.eq.s32.totalorder %s18, 0
    %p149 = por %p147, %p148
    %p150 = scmp.ne.s32.totalorder %s136, %s137
    %p151 = scmp.eq.s32.totalorder %s19, 1
    %p152 = por %p150, %p151
    %p154 = scmp.ne.s32.totalorder %s137, %s153
    %p155 = scmp.eq.s32.totalorder %s19, 0
    %p156 = por %p154, %p155
    %s157 = ssub.s32 %s20, %s32
    %s158 = ssub.s32 %s21, %s28
    %s159 = sor.u32 %s157, %s158
    %p160 = scmp.eq.s32.totalorder %s159, 0
    %s162 = sadd.s32 %s161, 1
    %s163 = scalar_select %p160, %s161, %s162
    %p166 = pneg %p160
    %p167 = scmp.eq.s32.totalorder %s13, 1
    %p168 = por %p166, %p167
    %p169 = scmp.ne.s32.totalorder %s161, %s164
    %p170 = scmp.eq.s32.totalorder %s13, 0
    %p171 = por %p169, %p170
    %p172 = scmp.ne.s32.totalorder %s161, %s164
    %p173 = scmp.eq.s32.totalorder %s18, 1
    %p174 = por %p172, %p173
    %p175 = scmp.ne.s32.totalorder %s164, %s165
    %p176 = scmp.eq.s32.totalorder %s18, 0
    %p177 = por %p175, %p176
    %p178 = scmp.ne.s32.totalorder %s164, %s165
    %p179 = scmp.eq.s32.totalorder %s19, 1
    %p180 = por %p178, %p179
    %p182 = scmp.ne.s32.totalorder %s165, %s181
    %p183 = scmp.eq.s32.totalorder %s19, 0
    %p184 = por %p182, %p183
    %s185 = sadd.s32 %s20, %s21
    %s186 = sadd.s32 %s32, %s28
    %s187 = ssub.s32 %s185, %s186
    %p188 = scmp.eq.s32.totalorder %s187, 0
    %s190 = sadd.s32 %s189, 1
    %s191 = scalar_select %p188, %s189, %s190
    %p194 = pneg %p188
    %p195 = scmp.eq.s32.totalorder %s13, 1
    %p196 = por %p194, %p195
    %p197 = scmp.ne.s32.totalorder %s189, %s192
    %p198 = scmp.eq.s32.totalorder %s13, 0
    %p199 = por %p197, %p198
    %p200 = scmp.ne.s32.totalorder %s189, %s192
    %p201 = scmp.eq.s32.totalorder %s18, 1
    %p202 = por %p200, %p201
    %p203 = scmp.ne.s32.totalorder %s192, %s193
    %p204 = scmp.eq.s32.totalorder %s18, 0
    %p205 = por %p203, %p204
    %p206 = scmp.ne.s32.totalorder %s192, %s193
    %p207 = scmp.eq.s32.totalorder %s19, 1
    %p208 = por %p206, %p207
    %p210 = scmp.ne.s32.totalorder %s193, %s209
    %p211 = scmp.eq.s32.totalorder %s19, 0
    %p212 = por %p210, %p211
    %p213 = scmp.le.s32.totalorder 1, %s13
    %p214 = scmp.lt.s32.totalorder %s13, 3
    %p215 = pnand %p213, %p214
    %p216 = pneg %p215
    // Predicated region
    $region9: #{basic_block_forward.4} parent=5 // pred_check
      _
    $region10: #{basic_block_forward.4} parent=5 // pred_check_branch
      %218 = sbr.rel (%p215) target = $region12
    $region11: #{basic_block_forward.4} parent=5 // pred_region
      %s219 = ssub.s32 %s13, 1
      // Predicated region
      $region13: #{basic_block_forward.4} parent=11 // pred_check
        %p220 = pneg %p72
      $region14: #{basic_block_forward.4} parent=11 // pred_check_branch
        %222 = sbr.rel (%p220) target = $region16
      $region15: #{basic_block_forward.4} parent=11 // pred_region
        _
      $region16: #{basic_block_forward.4} parent=11 // pred_fallthru
        _
      // Predicated region
      $region17: #{basic_block_forward.4} parent=11 // pred_check
        %p223 = pneg %p93
      $region18: #{basic_block_forward.4} parent=11 // pred_check_branch
        %225 = sbr.rel (%p223) target = $region20
      $region19: #{basic_block_forward.4} parent=11 // pred_region
        _
      $region20: #{basic_block_forward.4} parent=11 // pred_fallthru
        _
    $region12: #{basic_block_forward.4} parent=5 // pred_fallthru
      _
    %p226 = scmp.lt.s32.totalorder %s13, 2
    // Predicated region
    $region21: #{basic_block_forward.4} parent=5 // pred_check
      %p227 = pneg %p226
    $region22: #{basic_block_forward.4} parent=5 // pred_check_branch
      %229 = sbr.rel (%p227) target = $region24
    $region23: #{basic_block_forward.4} parent=5 // pred_region
      // Predicated region
      $region25: #{basic_block_forward.4} parent=23 // pred_check
        %p230 = pneg %p45
      $region26: #{basic_block_forward.4} parent=23 // pred_check_branch
        %232 = sbr.rel (%p230) target = $region28
      $region27: #{basic_block_forward.4} parent=23 // pred_region
        %s233 = smul.u32 4, %s20
        %p234 = scmp.lt.s32.totalorder %s233, 7
        %s235 = scalar_select %p234, %s233, 7
        %s236 = smul.addr %s235, 18
        %s237 = smul.addr %s236, 4
        %s238 = scalar_lea.vmem %s0, %s237
        %s239 = smul.u32 4, %s20
      $region28: #{basic_block_forward.4} parent=23 // pred_fallthru
        _
    $region24: #{basic_block_forward.4} parent=5 // pred_fallthru
      _
    %p240 = scmp.le.s32.totalorder 1, %s13
    %p241 = scmp.lt.s32.totalorder %s13, 3
    %p242 = pnand %p240, %p241
    %p243 = pneg %p242
    // Predicated region
    $region29: #{basic_block_forward.4} parent=5 // pred_check
      _
    $region30: #{basic_block_forward.4} parent=5 // pred_check_branch
      %245 = sbr.rel (%p242) target = $region32
    $region31: #{basic_block_forward.4} parent=5 // pred_region
      %s246 = ssub.s32 %s13, 1
      %s247 = smul.u32 4, %s22
      %p248 = scmp.lt.s32.totalorder %s247, 7
      %s249 = scalar_select %p248, %s247, 7
      %s250 = smul.addr %s249, 18
      %s251 = smul.addr %s250, 4
      %s252 = scalar_lea.vmem %s0, %s251
      %p253 = pneg %p51
      %p254 = pneg %p48
      %p255 = pneg %p72
      %p256 = pneg %p69
      %p257 = pneg %p93
      %p258 = pneg %p90
      %p259 = pneg %p121
      %p260 = pneg %p118
      %s261 = smul.u32 8, %s23
      %p262 = scmp.lt.s32.totalorder %s22, 1
      %s263 = scalar_select %p262, %s22, 1
      %p264 = scmp.lt.s32.totalorder %s261, 7
      %s265 = scalar_select %p264, %s261, 7
      %s266 = smul.addr %s263, 8
      %s267 = sadd.s32 %s265, %s266
      %s268 = smul.addr %s267, 4
      %s269 = scalar_lea.vmem %s3, %s268
      %p270 = pneg %p149
      %p271 = pneg %p146
      %s272 = sadd.s32 %s22, %s23
      %p273 = scmp.lt.s32.totalorder %s272, 1
      %s274 = scalar_select %p273, %s272, 1
      %s275 = smul.addr %s274, 8
      %s276 = scalar_lea.vmem %s4, %s275
      %p277 = pneg %p177
      %p278 = pneg %p174
      %s279 = smul.u32 8, %s23
      %p280 = scmp.lt.s32.totalorder %s22, 1
      %s281 = scalar_select %p280, %s22, 1
      %p282 = scmp.lt.s32.totalorder %s279, 7
      %s283 = scalar_select %p282, %s279, 7
      %s284 = smul.addr %s281, 8
      %s285 = sadd.s32 %s283, %s284
      %s286 = smul.addr %s285, 4
      %s287 = scalar_lea.vmem %s5, %s286
      %p288 = pneg %p205
      %p289 = pneg %p202
      %s290 = sadd.s32 %s22, %s23
      %p291 = scmp.lt.s32.totalorder %s290, 1
      %s292 = scalar_select %p291, %s290, 1
      %s293 = smul.addr %s292, 8
      %s294 = scalar_lea.vmem %s6, %s293
      %s295 = smul.u32 4, %s22
      %p296 = scmp.lt.s32.totalorder %s295, 7
      %s297 = scalar_select %p296, %s295, 7
      %s298 = smul.addr %s297, 18
      %s299 = smul.addr %s298, 4
      %s300 = scalar_lea.vmem %s0, %s299
      %s301 = smul.u32 4, %s22
      %s302 = smul.u32 8, %s23
      %p303 = scmp.lt.s32.totalorder %s22, 1
      %s304 = scalar_select %p303, %s22, 1
      %p305 = scmp.lt.s32.totalorder %s302, 7
      %s306 = scalar_select %p305, %s302, 7
      %s307 = smul.addr %s304, 8
      %s308 = sadd.s32 %s306, %s307
      %s309 = smul.addr %s308, 4
      %s310 = scalar_lea.vmem %s3, %s309
      %s311 = smul.u32 8, %s23
      %s312 = sadd.s32 %s22, %s23
      %p313 = scmp.lt.s32.totalorder %s312, 1
      %s314 = scalar_select %p313, %s312, 1
      %s315 = smul.addr %s314, 8
      %s316 = scalar_lea.vmem %s4, %s315
      %s317 = sadd.s32 %s22, %s23
      %s318 = smul.u32 8, %s23
      %p319 = scmp.lt.s32.totalorder %s22, 1
      %s320 = scalar_select %p319, %s22, 1
      %p321 = scmp.lt.s32.totalorder %s318, 7
      %s322 = scalar_select %p321, %s318, 7
      %s323 = smul.addr %s320, 8
      %s324 = sadd.s32 %s322, %s323
      %s325 = smul.addr %s324, 4
      %s326 = scalar_lea.vmem %s5, %s325
      %s327 = smul.u32 8, %s23
      %s328 = sadd.s32 %s22, %s23
      %p329 = scmp.lt.s32.totalorder %s328, 1
      %s330 = scalar_select %p329, %s328, 1
      %s331 = smul.addr %s330, 8
      %s332 = scalar_lea.vmem %s6, %s331
      %s333 = sadd.s32 %s22, %s23
      %s335 = smul.u32 %s23, 8
      %s336 = smul.u32 %s335, 2
      %s337 = smul.addr %s336, 4
      %s338 = scalar_lea.vmem %s300, %s337
      %v339 = vld [vmem:[%s338] sm:$0xf]
      %v340 = vld [vmem:[%s338 + $0x8] sm:$0xf]
      %v341 = vld [vmem:[%s338 + $0x10] sm:$0xf]
      %v342 = vld [vmem:[%s338 + $0x18] sm:$0xf]
      %v343 = vld [vmem:[%s338 + $0x20] sm:$0xf]
      %v344 = vld [vmem:[%s338 + $0x28] sm:$0xf]
      %v345 = vld [vmem:[%s338 + $0x30] sm:$0xf]
      %v346 = vld [vmem:[%s338 + $0x38] sm:$0xf]
      %v347 = vld [vmem:[%s1] sm:$0xf]
      %v348 = vld [vmem:[%s1 + $0x4] sm:$0xf]
      %v349 = vld [vmem:[%s1 + $0x8] sm:$0xf]
      %v350 = vld [vmem:[%s1 + $0xc] sm:$0xf]
      %v351 = vld [vmem:[%s1 + $0x10] sm:$0xf]
      %v352 = vld [vmem:[%s1 + $0x14] sm:$0xf]
      %v353 = vld [vmem:[%s1 + $0x18] sm:$0xf]
      %v354 = vld [vmem:[%s1 + $0x1c] sm:$0xf]
      %v355 = vld [vmem:[%s1 + $0x20] sm:$0xf]
      %v356 = vld [vmem:[%s1 + $0x24] sm:$0xf]
      %v357 = vld [vmem:[%s1 + $0x28] sm:$0xf]
      %v358 = vld [vmem:[%s1 + $0x2c] sm:$0xf]
      %v359 = vld [vmem:[%s1 + $0x30] sm:$0xf]
      %v360 = vld [vmem:[%s1 + $0x34] sm:$0xf]
      %v361 = vld [vmem:[%s1 + $0x38] sm:$0xf]
      %v362 = vld [vmem:[%s1 + $0x3c] sm:$0xf]
      %s363 = sadd.s32 %s336, 18
      %s364 = smul.addr %s363, 4
      %s365 = scalar_lea.vmem %s300, %s364
      %v366 = vld [vmem:[%s365] sm:$0xf]
      %v367 = vld [vmem:[%s365 + $0x8] sm:$0xf]
      %v368 = vld [vmem:[%s365 + $0x10] sm:$0xf]
      %v369 = vld [vmem:[%s365 + $0x18] sm:$0xf]
      %v370 = vld [vmem:[%s365 + $0x20] sm:$0xf]
      %v371 = vld [vmem:[%s365 + $0x28] sm:$0xf]
      %v372 = vld [vmem:[%s365 + $0x30] sm:$0xf]
      %v373 = vld [vmem:[%s365 + $0x38] sm:$0xf]
      %s374 = scalar_lea.vmem %s1, 64
      %v375 = vld [vmem:[%s374] sm:$0xf]
      %v376 = vld [vmem:[%s374 + $0x4] sm:$0xf]
      %v377 = vld [vmem:[%s374 + $0x8] sm:$0xf]
      %v378 = vld [vmem:[%s374 + $0xc] sm:$0xf]
      %v379 = vld [vmem:[%s374 + $0x10] sm:$0xf]
      %v380 = vld [vmem:[%s374 + $0x14] sm:$0xf]
      %v381 = vld [vmem:[%s374 + $0x18] sm:$0xf]
      %v382 = vld [vmem:[%s374 + $0x1c] sm:$0xf]
      %v383 = vld [vmem:[%s374 + $0x20] sm:$0xf]
      %v384 = vld [vmem:[%s374 + $0x24] sm:$0xf]
      %v385 = vld [vmem:[%s374 + $0x28] sm:$0xf]
      %v386 = vld [vmem:[%s374 + $0x2c] sm:$0xf]
      %v387 = vld [vmem:[%s374 + $0x30] sm:$0xf]
      %v388 = vld [vmem:[%s374 + $0x34] sm:$0xf]
      %v389 = vld [vmem:[%s374 + $0x38] sm:$0xf]
      %v390 = vld [vmem:[%s374 + $0x3c] sm:$0xf]
      %v399 = vunpack.c.l.b16 %v366
      %v400 = vunpack.c.l.b16 %v367
      %v401 = vunpack.c.l.b16 %v368
      %v402 = vunpack.c.l.b16 %v369
      %v403 = vunpack.c.l.b16 %v370
      %v404 = vunpack.c.l.b16 %v371
      %v405 = vunpack.c.l.b16 %v372
      %v406 = vunpack.c.l.b16 %v373
      %v407 = vpack.c.b16 %v400, %v399
      %v408 = vpack.c.b16 %v402, %v401
      %v409 = vpack.c.b16 %v404, %v403
      %v410 = vpack.c.b16 %v406, %v405
      %v431 = vunpack.c.l.b16 %v375
      %v432 = vunpack.c.l.b16 %v376
      %v433 = vunpack.c.l.b16 %v377
      %v434 = vunpack.c.l.b16 %v378
      %v435 = vunpack.c.l.b16 %v379
      %v436 = vunpack.c.l.b16 %v380
      %v437 = vunpack.c.l.b16 %v381
      %v438 = vunpack.c.l.b16 %v382
      %v439 = vunpack.c.l.b16 %v383
      %v440 = vunpack.c.l.b16 %v384
      %v441 = vunpack.c.l.b16 %v385
      %v442 = vunpack.c.l.b16 %v386
      %v443 = vunpack.c.l.b16 %v387
      %v444 = vunpack.c.l.b16 %v388
      %v445 = vunpack.c.l.b16 %v389
      %v446 = vunpack.c.l.b16 %v390
      %v447 = vpack.c.b16 %v432, %v431
      %v448 = vpack.c.b16 %v434, %v433
      %v449 = vpack.c.b16 %v436, %v435
      %v450 = vpack.c.b16 %v438, %v437
      %v451 = vpack.c.b16 %v440, %v439
      %v452 = vpack.c.b16 %v442, %v441
      %v453 = vpack.c.b16 %v444, %v443
      %v454 = vpack.c.b16 %v446, %v445
      %463 = vmatprep.subr.bf16.mxu0 0
      %464 = vmatpush1.bf16.msra.mxu0 %v454
      %465 = vmatprep.subr.bf16.mxu0 0
      %466 = vmatpush1.bf16.msra.mxu0 %v453
      %467 = vmatprep.subr.bf16.mxu0 0
      %468 = vmatpush1.bf16.msra.mxu0 %v452
      %469 = vmatprep.subr.bf16.mxu0 0
      %470 = vmatpush1.bf16.msra.mxu0 %v451
      %471 = vmatprep.subr.bf16.mxu0 0
      %472 = vmatpush1.bf16.msra.mxu0 %v450
      %473 = vmatprep.subr.bf16.mxu0 0
      %474 = vmatpush1.bf16.msra.mxu0 %v449
      %475 = vmatprep.subr.bf16.mxu0 0
      %476 = vmatpush1.bf16.msra.mxu0 %v448
      %477 = vmatprep.subr.bf16.mxu0 0
      %478 = vmatpush1.bf16.msra.mxu0 %v447
      %479 = vmatprep.subr.bf16.mxu0 0
      %480 = vmatpush2.bf16.msra.mxu0 0
      %481 = vmatprep.subr.bf16.mxu0 0
      %482 = vmatpush2.bf16.msra.mxu0 0
      %483 = vmatprep.subr.bf16.mxu0 0
      %484 = vmatpush2.bf16.msra.mxu0 0
      %485 = vmatprep.subr.bf16.mxu0 0
      %486 = vmatpush2.bf16.msra.mxu0 0
      %487 = vmatprep.subr.bf16.mxu0 0
      %488 = vmatpush2.bf16.msra.mxu0 0
      %489 = vmatprep.subr.bf16.mxu0 0
      %490 = vmatpush2.bf16.msra.mxu0 0
      %491 = vmatprep.subr.bf16.mxu0 0
      %492 = vmatpush2.bf16.msra.mxu0 0
      %493 = vmatprep.subr.bf16.mxu0 0
      %494 = vmatpush2.bf16.msra.mxu0 0
      %495 = vmatprep.mubr.bf16.mxu0 0
      %496 = vmatmul.mubr.bf16.gmra.mxu0 %v407
      %v497 = vpop.f32.mrf.mxu0
      %v498 = vadd.f32 0.0, %v497
      %v499 = vpop.f32.mrf.mxu0
      %v500 = vpop.f32.mrf.mxu0
      %v501 = vadd.f32 0.0, %v500
      %v502 = vpop.f32.mrf.mxu0
      %503 = vmatprep.mubr.bf16.mxu0 0
      %504 = vmatmul.mubr.bf16.gmra.mxu0 %v408
      %v505 = vpop.f32.mrf.mxu0
      %v506 = vadd.f32 0.0, %v505
      %v507 = vpop.f32.mrf.mxu0
      %v508 = vpop.f32.mrf.mxu0
      %v509 = vadd.f32 0.0, %v508
      %v510 = vpop.f32.mrf.mxu0
      %511 = vmatprep.mubr.bf16.mxu0 0
      %512 = vmatmul.mubr.bf16.gmra.mxu0 %v409
      %v513 = vpop.f32.mrf.mxu0
      %v514 = vadd.f32 0.0, %v513
      %v515 = vpop.f32.mrf.mxu0
      %v516 = vpop.f32.mrf.mxu0
      %v517 = vadd.f32 0.0, %v516
      %v518 = vpop.f32.mrf.mxu0
      %519 = vmatprep.mubr.bf16.mxu0 0
      %520 = vmatmul.mubr.bf16.gmra.mxu0 %v410
      %v521 = vpop.f32.mrf.mxu0
      %v522 = vadd.f32 0.0, %v521
      %v523 = vpop.f32.mrf.mxu0
      %v524 = vpop.f32.mrf.mxu0
      %v525 = vadd.f32 0.0, %v524
      %v526 = vpop.f32.mrf.mxu0
      %527 = vdwg.mxu0
      %v536 = vunpack.c.l.b16 %v339
      %v537 = vunpack.c.l.b16 %v340
      %v538 = vunpack.c.l.b16 %v341
      %v539 = vunpack.c.l.b16 %v342
      %v540 = vunpack.c.l.b16 %v343
      %v541 = vunpack.c.l.b16 %v344
      %v542 = vunpack.c.l.b16 %v345
      %v543 = vunpack.c.l.b16 %v346
      %v544 = vpack.c.b16 %v537, %v536
      %v545 = vpack.c.b16 %v539, %v538
      %v546 = vpack.c.b16 %v541, %v540
      %v547 = vpack.c.b16 %v543, %v542
      %v568 = vunpack.c.l.b16 %v347
      %v569 = vunpack.c.l.b16 %v348
      %v570 = vunpack.c.l.b16 %v349
      %v571 = vunpack.c.l.b16 %v350
      %v572 = vunpack.c.l.b16 %v351
      %v573 = vunpack.c.l.b16 %v352
      %v574 = vunpack.c.l.b16 %v353
      %v575 = vunpack.c.l.b16 %v354
      %v576 = vunpack.c.l.b16 %v355
      %v577 = vunpack.c.l.b16 %v356
      %v578 = vunpack.c.l.b16 %v357
      %v579 = vunpack.c.l.b16 %v358
      %v580 = vunpack.c.l.b16 %v359
      %v581 = vunpack.c.l.b16 %v360
      %v582 = vunpack.c.l.b16 %v361
      %v583 = vunpack.c.l.b16 %v362
      %v584 = vpack.c.b16 %v569, %v568
      %v585 = vpack.c.b16 %v571, %v570
      %v586 = vpack.c.b16 %v573, %v572
      %v587 = vpack.c.b16 %v575, %v574
      %v588 = vpack.c.b16 %v577, %v576
      %v589 = vpack.c.b16 %v579, %v578
      %v590 = vpack.c.b16 %v581, %v580
      %v591 = vpack.c.b16 %v583, %v582
      %600 = vmatprep.subr.bf16.mxu0 0
      %601 = vmatpush1.bf16.msra.mxu0 %v591
      %602 = vmatprep.subr.bf16.mxu0 0
      %603 = vmatpush1.bf16.msra.mxu0 %v590
      %604 = vmatprep.subr.bf16.mxu0 0
      %605 = vmatpush1.bf16.msra.mxu0 %v589
      %606 = vmatprep.subr.bf16.mxu0 0
      %607 = vmatpush1.bf16.msra.mxu0 %v588
      %608 = vmatprep.subr.bf16.mxu0 0
      %609 = vmatpush1.bf16.msra.mxu0 %v587
      %610 = vmatprep.subr.bf16.mxu0 0
      %611 = vmatpush1.bf16.msra.mxu0 %v586
      %612 = vmatprep.subr.bf16.mxu0 0
      %613 = vmatpush1.bf16.msra.mxu0 %v585
      %614 = vmatprep.subr.bf16.mxu0 0
      %615 = vmatpush1.bf16.msra.mxu0 %v584
      %616 = vmatprep.subr.bf16.mxu0 0
      %617 = vmatpush2.bf16.msra.mxu0 0
      %618 = vmatprep.subr.bf16.mxu0 0
      %619 = vmatpush2.bf16.msra.mxu0 0
      %620 = vmatprep.subr.bf16.mxu0 0
      %621 = vmatpush2.bf16.msra.mxu0 0
      %622 = vmatprep.subr.bf16.mxu0 0
      %623 = vmatpush2.bf16.msra.mxu0 0
      %624 = vmatprep.subr.bf16.mxu0 0
      %625 = vmatpush2.bf16.msra.mxu0 0
      %626 = vmatprep.subr.bf16.mxu0 0
      %627 = vmatpush2.bf16.msra.mxu0 0
      %628 = vmatprep.subr.bf16.mxu0 0
      %629 = vmatpush2.bf16.msra.mxu0 0
      %630 = vmatprep.subr.bf16.mxu0 0
      %631 = vmatpush2.bf16.msra.mxu0 0
      %632 = vmatprep.mubr.bf16.mxu0 0
      %633 = vmatmul.mubr.bf16.gmra.mxu0 %v544
      %v634 = vpop.f32.mrf.mxu0
      %v635 = vadd.f32 %v498, %v634
      %v636 = vpop.f32.mrf.mxu0
      %v637 = vpop.f32.mrf.mxu0
      %v638 = vadd.f32 %v501, %v637
      %v639 = vpop.f32.mrf.mxu0
      %640 = vmatprep.mubr.bf16.mxu0 0
      %641 = vmatmul.mubr.bf16.gmra.mxu0 %v545
      %v642 = vpop.f32.mrf.mxu0
      %v643 = vadd.f32 %v506, %v642
      %v644 = vpop.f32.mrf.mxu0
      %v645 = vpop.f32.mrf.mxu0
      %v646 = vadd.f32 %v509, %v645
      %v647 = vpop.f32.mrf.mxu0
      %648 = vmatprep.mubr.bf16.mxu0 0
      %649 = vmatmul.mubr.bf16.gmra.mxu0 %v546
      %v650 = vpop.f32.mrf.mxu0
      %v651 = vadd.f32 %v514, %v650
      %v652 = vpop.f32.mrf.mxu0
      %v653 = vpop.f32.mrf.mxu0
      %v654 = vadd.f32 %v517, %v653
      %v655 = vpop.f32.mrf.mxu0
      %656 = vmatprep.mubr.bf16.mxu0 0
      %657 = vmatmul.mubr.bf16.gmra.mxu0 %v547
      %v658 = vpop.f32.mrf.mxu0
      %v659 = vadd.f32 %v522, %v658
      %v660 = vpop.f32.mrf.mxu0
      %v661 = vpop.f32.mrf.mxu0
      %v662 = vadd.f32 %v525, %v661
      %v663 = vpop.f32.mrf.mxu0
      %664 = vdwg.mxu0
      %v665 = vld [vmem:[%s338] sm:$0xf]
      %v666 = vld [vmem:[%s338 + $0x4] sm:$0x1]
      %v667 = vld [vmem:[%s338 + $0x8] sm:$0xf]
      %v668 = vld [vmem:[%s338 + $0xc] sm:$0x1]
      %v669 = vld [vmem:[%s338 + $0x10] sm:$0xf]
      %v670 = vld [vmem:[%s338 + $0x14] sm:$0x1]
      %v671 = vld [vmem:[%s338 + $0x18] sm:$0xf]
      %v672 = vld [vmem:[%s338 + $0x1c] sm:$0x1]
      %v673 = vld [vmem:[%s338 + $0x20] sm:$0xf]
      %v674 = vld [vmem:[%s338 + $0x24] sm:$0x1]
      %v675 = vld [vmem:[%s338 + $0x28] sm:$0xf]
      %v676 = vld [vmem:[%s338 + $0x2c] sm:$0x1]
      %v677 = vld [vmem:[%s338 + $0x30] sm:$0xf]
      %v678 = vld [vmem:[%s338 + $0x34] sm:$0x1]
      %v679 = vld [vmem:[%s338 + $0x38] sm:$0xf]
      %v680 = vld [vmem:[%s338 + $0x3c] sm:$0x1]
      %vm681 = vsmask.f32 3328
      %vm682 = vsmask.f32 7440
      %vm683 = vmor %vm681, %vm682
      %v685 = vshrl.u32 %v665, 16
      %v687 = vrot.slane %v685, 4
      %v688 = vshll.u32 %v665, 16
      %v690 = vrot.slane %v688, 5
      %v691 = vor.u32 %v687, %v690
      %v692 = vrot.slane %v691, 4
      %v694 = vshll.u32 %v666, 16
      %v696 = vrot.slane %v694, 5
      %v697 = vsel %vm683, %v692, %v696
      %v699 = vshrl.u32 %v667, 16
      %v701 = vrot.slane %v699, 4
      %v702 = vshll.u32 %v667, 16
      %v704 = vrot.slane %v702, 5
      %v705 = vor.u32 %v701, %v704
      %v706 = vrot.slane %v705, 4
      %v708 = vshll.u32 %v668, 16
      %v710 = vrot.slane %v708, 5
      %v711 = vsel %vm683, %v706, %v710
      %v713 = vshrl.u32 %v669, 16
      %v715 = vrot.slane %v713, 4
      %v716 = vshll.u32 %v669, 16
      %v718 = vrot.slane %v716, 5
      %v719 = vor.u32 %v715, %v718
      %v720 = vrot.slane %v719, 4
      %v722 = vshll.u32 %v670, 16
      %v724 = vrot.slane %v722, 5
      %v725 = vsel %vm683, %v720, %v724
      %v727 = vshrl.u32 %v671, 16
      %v729 = vrot.slane %v727, 4
      %v730 = vshll.u32 %v671, 16
      %v732 = vrot.slane %v730, 5
      %v733 = vor.u32 %v729, %v732
      %v734 = vrot.slane %v733, 4
      %v736 = vshll.u32 %v672, 16
      %v738 = vrot.slane %v736, 5
      %v739 = vsel %vm683, %v734, %v738
      %v741 = vshrl.u32 %v673, 16
      %v743 = vrot.slane %v741, 4
      %v744 = vshll.u32 %v673, 16
      %v746 = vrot.slane %v744, 5
      %v747 = vor.u32 %v743, %v746
      %v748 = vrot.slane %v747, 4
      %v750 = vshll.u32 %v674, 16
      %v752 = vrot.slane %v750, 5
      %v753 = vsel %vm683, %v748, %v752
      %v755 = vshrl.u32 %v675, 16
      %v757 = vrot.slane %v755, 4
      %v758 = vshll.u32 %v675, 16
      %v760 = vrot.slane %v758, 5
      %v761 = vor.u32 %v757, %v760
      %v762 = vrot.slane %v761, 4
      %v764 = vshll.u32 %v676, 16
      %v766 = vrot.slane %v764, 5
      %v767 = vsel %vm683, %v762, %v766
      %v769 = vshrl.u32 %v677, 16
      %v771 = vrot.slane %v769, 4
      %v772 = vshll.u32 %v677, 16
      %v774 = vrot.slane %v772, 5
      %v775 = vor.u32 %v771, %v774
      %v776 = vrot.slane %v775, 4
      %v778 = vshll.u32 %v678, 16
      %v780 = vrot.slane %v778, 5
      %v781 = vsel %vm683, %v776, %v780
      %v783 = vshrl.u32 %v679, 16
      %v785 = vrot.slane %v783, 4
      %v786 = vshll.u32 %v679, 16
      %v788 = vrot.slane %v786, 5
      %v789 = vor.u32 %v785, %v788
      %v790 = vrot.slane %v789, 4
      %v792 = vshll.u32 %v680, 16
      %v794 = vrot.slane %v792, 5
      %v795 = vsel %vm683, %v790, %v794
      %s796 = scalar_lea.vmem %s1, 128
      %v797 = vld [vmem:[%s796] sm:$0xf]
      %v798 = vld [vmem:[%s796 + $0x4] sm:$0xf]
      %v799 = vld [vmem:[%s796 + $0x8] sm:$0xf]
      %v800 = vld [vmem:[%s796 + $0xc] sm:$0xf]
      %v801 = vld [vmem:[%s796 + $0x10] sm:$0xf]
      %v802 = vld [vmem:[%s796 + $0x14] sm:$0xf]
      %v803 = vld [vmem:[%s796 + $0x18] sm:$0xf]
      %v804 = vld [vmem:[%s796 + $0x1c] sm:$0xf]
      %v805 = vld [vmem:[%s796 + $0x20] sm:$0xf]
      %v806 = vld [vmem:[%s796 + $0x24] sm:$0xf]
      %v807 = vld [vmem:[%s796 + $0x28] sm:$0xf]
      %v808 = vld [vmem:[%s796 + $0x2c] sm:$0xf]
      %v809 = vld [vmem:[%s796 + $0x30] sm:$0xf]
      %v810 = vld [vmem:[%s796 + $0x34] sm:$0xf]
      %v811 = vld [vmem:[%s796 + $0x38] sm:$0xf]
      %v812 = vld [vmem:[%s796 + $0x3c] sm:$0xf]
      %v813 = vunpack.c.l.b16 %v697
      %v814 = vunpack.c.l.b16 %v711
      %v815 = vunpack.c.l.b16 %v725
      %v816 = vunpack.c.l.b16 %v739
      %v817 = vunpack.c.l.b16 %v753
      %v818 = vunpack.c.l.b16 %v767
      %v819 = vunpack.c.l.b16 %v781
      %v820 = vunpack.c.l.b16 %v795
      %v821 = vpack.c.b16 %v814, %v813
      %v822 = vpack.c.b16 %v816, %v815
      %v823 = vpack.c.b16 %v818, %v817
      %v824 = vpack.c.b16 %v820, %v819
      %v845 = vunpack.c.l.b16 %v797
      %v846 = vunpack.c.l.b16 %v798
      %v847 = vunpack.c.l.b16 %v799
      %v848 = vunpack.c.l.b16 %v800
      %v849 = vunpack.c.l.b16 %v801
      %v850 = vunpack.c.l.b16 %v802
      %v851 = vunpack.c.l.b16 %v803
      %v852 = vunpack.c.l.b16 %v804
      %v853 = vunpack.c.l.b16 %v805
      %v854 = vunpack.c.l.b16 %v806
      %v855 = vunpack.c.l.b16 %v807
      %v856 = vunpack.c.l.b16 %v808
      %v857 = vunpack.c.l.b16 %v809
      %v858 = vunpack.c.l.b16 %v810
      %v859 = vunpack.c.l.b16 %v811
      %v860 = vunpack.c.l.b16 %v812
      %v861 = vpack.c.b16 %v846, %v845
      %v862 = vpack.c.b16 %v848, %v847
      %v863 = vpack.c.b16 %v850, %v849
      %v864 = vpack.c.b16 %v852, %v851
      %v865 = vpack.c.b16 %v854, %v853
      %v866 = vpack.c.b16 %v856, %v855
      %v867 = vpack.c.b16 %v858, %v857
      %v868 = vpack.c.b16 %v860, %v859
      %877 = vmatprep.subr.bf16.mxu0 0
      %878 = vmatpush1.bf16.msra.mxu0 %v868
      %879 = vmatprep.subr.bf16.mxu0 0
      %880 = vmatpush1.bf16.msra.mxu0 %v867
      %881 = vmatprep.subr.bf16.mxu0 0
      %882 = vmatpush1.bf16.msra.mxu0 %v866
      %883 = vmatprep.subr.bf16.mxu0 0
      %884 = vmatpush1.bf16.msra.mxu0 %v865
      %885 = vmatprep.subr.bf16.mxu0 0
      %886 = vmatpush1.bf16.msra.mxu0 %v864
      %887 = vmatprep.subr.bf16.mxu0 0
      %888 = vmatpush1.bf16.msra.mxu0 %v863
      %889 = vmatprep.subr.bf16.mxu0 0
      %890 = vmatpush1.bf16.msra.mxu0 %v862
      %891 = vmatprep.subr.bf16.mxu0 0
      %892 = vmatpush1.bf16.msra.mxu0 %v861
      %893 = vmatprep.subr.bf16.mxu0 0
      %894 = vmatpush2.bf16.msra.mxu0 0
      %895 = vmatprep.subr.bf16.mxu0 0
      %896 = vmatpush2.bf16.msra.mxu0 0
      %897 = vmatprep.subr.bf16.mxu0 0
      %898 = vmatpush2.bf16.msra.mxu0 0
      %899 = vmatprep.subr.bf16.mxu0 0
      %900 = vmatpush2.bf16.msra.mxu0 0
      %901 = vmatprep.subr.bf16.mxu0 0
      %902 = vmatpush2.bf16.msra.mxu0 0
      %903 = vmatprep.subr.bf16.mxu0 0
      %904 = vmatpush2.bf16.msra.mxu0 0
      %905 = vmatprep.subr.bf16.mxu0 0
      %906 = vmatpush2.bf16.msra.mxu0 0
      %907 = vmatprep.subr.bf16.mxu0 0
      %908 = vmatpush2.bf16.msra.mxu0 0
      %909 = vmatprep.mubr.bf16.mxu0 0
      %910 = vmatmul.mubr.bf16.gmra.mxu0 %v821
      %v911 = vpop.f32.mrf.mxu0
      %v912 = vadd.f32 0.0, %v911
      %v913 = vpop.f32.mrf.mxu0
      %v914 = vpop.f32.mrf.mxu0
      %v915 = vadd.f32 0.0, %v914
      %v916 = vpop.f32.mrf.mxu0
      %917 = vmatprep.mubr.bf16.mxu0 0
      %918 = vmatmul.mubr.bf16.gmra.mxu0 %v822
      %v919 = vpop.f32.mrf.mxu0
      %v920 = vadd.f32 0.0, %v919
      %v921 = vpop.f32.mrf.mxu0
      %v922 = vpop.f32.mrf.mxu0
      %v923 = vadd.f32 0.0, %v922
      %v924 = vpop.f32.mrf.mxu0
      %925 = vmatprep.mubr.bf16.mxu0 0
      %926 = vmatmul.mubr.bf16.gmra.mxu0 %v823
      %v927 = vpop.f32.mrf.mxu0
      %v928 = vadd.f32 0.0, %v927
      %v929 = vpop.f32.mrf.mxu0
      %v930 = vpop.f32.mrf.mxu0
      %v931 = vadd.f32 0.0, %v930
      %v932 = vpop.f32.mrf.mxu0
      %933 = vmatprep.mubr.bf16.mxu0 0
      %934 = vmatmul.mubr.bf16.gmra.mxu0 %v824
      %v935 = vpop.f32.mrf.mxu0
      %v936 = vadd.f32 0.0, %v935
      %v937 = vpop.f32.mrf.mxu0
      %v938 = vpop.f32.mrf.mxu0
      %v939 = vadd.f32 0.0, %v938
      %v940 = vpop.f32.mrf.mxu0
      %941 = vdwg.mxu0
      %v942 = vadd.f32 %v635, %v912
      %v943 = vadd.f32 %v638, %v915
      %v944 = vadd.f32 %v643, %v920
      %v945 = vadd.f32 %v646, %v923
      %v946 = vadd.f32 %v651, %v928
      %v947 = vadd.f32 %v654, %v931
      %v948 = vadd.f32 %v659, %v936
      %v949 = vadd.f32 %v662, %v939
      %s950 = sadd.s32 %s336, 36
      %s951 = smul.addr %s950, 4
      %s952 = scalar_lea.vmem %s300, %s951
      %v953 = vld [vmem:[%s952] sm:$0xf]
      %v954 = vld [vmem:[%s952 + $0x8] sm:$0xf]
      %v955 = vld [vmem:[%s952 + $0x10] sm:$0xf]
      %v956 = vld [vmem:[%s952 + $0x18] sm:$0xf]
      %v957 = vld [vmem:[%s952 + $0x20] sm:$0xf]
      %v958 = vld [vmem:[%s952 + $0x28] sm:$0xf]
      %v959 = vld [vmem:[%s952 + $0x30] sm:$0xf]
      %v960 = vld [vmem:[%s952 + $0x38] sm:$0xf]
      %s961 = scalar_lea.vmem %s1, 192
      %v962 = vld [vmem:[%s961] sm:$0xf]
      %v963 = vld [vmem:[%s961 + $0x4] sm:$0xf]
      %v964 = vld [vmem:[%s961 + $0x8] sm:$0xf]
      %v965 = vld [vmem:[%s961 + $0xc] sm:$0xf]
      %v966 = vld [vmem:[%s961 + $0x10] sm:$0xf]
      %v967 = vld [vmem:[%s961 + $0x14] sm:$0xf]
      %v968 = vld [vmem:[%s961 + $0x18] sm:$0xf]
      %v969 = vld [vmem:[%s961 + $0x1c] sm:$0xf]
      %v970 = vld [vmem:[%s961 + $0x20] sm:$0xf]
      %v971 = vld [vmem:[%s961 + $0x24] sm:$0xf]
      %v972 = vld [vmem:[%s961 + $0x28] sm:$0xf]
      %v973 = vld [vmem:[%s961 + $0x2c] sm:$0xf]
      %v974 = vld [vmem:[%s961 + $0x30] sm:$0xf]
      %v975 = vld [vmem:[%s961 + $0x34] sm:$0xf]
      %v976 = vld [vmem:[%s961 + $0x38] sm:$0xf]
      %v977 = vld [vmem:[%s961 + $0x3c] sm:$0xf]
      %v986 = vunpack.c.l.b16 %v953
      %v987 = vunpack.c.l.b16 %v954
      %v988 = vunpack.c.l.b16 %v955
      %v989 = vunpack.c.l.b16 %v956
      %v990 = vunpack.c.l.b16 %v957
      %v991 = vunpack.c.l.b16 %v958
      %v992 = vunpack.c.l.b16 %v959
      %v993 = vunpack.c.l.b16 %v960
      %v994 = vpack.c.b16 %v987, %v986
      %v995 = vpack.c.b16 %v989, %v988
      %v996 = vpack.c.b16 %v991, %v990
      %v997 = vpack.c.b16 %v993, %v992
      %v1018 = vunpack.c.l.b16 %v962
      %v1019 = vunpack.c.l.b16 %v963
      %v1020 = vunpack.c.l.b16 %v964
      %v1021 = vunpack.c.l.b16 %v965
      %v1022 = vunpack.c.l.b16 %v966
      %v1023 = vunpack.c.l.b16 %v967
      %v1024 = vunpack.c.l.b16 %v968
      %v1025 = vunpack.c.l.b16 %v969
      %v1026 = vunpack.c.l.b16 %v970
      %v1027 = vunpack.c.l.b16 %v971
      %v1028 = vunpack.c.l.b16 %v972
      %v1029 = vunpack.c.l.b16 %v973
      %v1030 = vunpack.c.l.b16 %v974
      %v1031 = vunpack.c.l.b16 %v975
      %v1032 = vunpack.c.l.b16 %v976
      %v1033 = vunpack.c.l.b16 %v977
      %v1034 = vpack.c.b16 %v1019, %v1018
      %v1035 = vpack.c.b16 %v1021, %v1020
      %v1036 = vpack.c.b16 %v1023, %v1022
      %v1037 = vpack.c.b16 %v1025, %v1024
      %v1038 = vpack.c.b16 %v1027, %v1026
      %v1039 = vpack.c.b16 %v1029, %v1028
      %v1040 = vpack.c.b16 %v1031, %v1030
      %v1041 = vpack.c.b16 %v1033, %v1032
      %1050 = vmatprep.subr.bf16.mxu0 0
      %1051 = vmatpush1.bf16.msra.mxu0 %v1041
      %1052 = vmatprep.subr.bf16.mxu0 0
      %1053 = vmatpush1.bf16.msra.mxu0 %v1040
      %1054 = vmatprep.subr.bf16.mxu0 0
      %1055 = vmatpush1.bf16.msra.mxu0 %v1039
      %1056 = vmatprep.subr.bf16.mxu0 0
      %1057 = vmatpush1.bf16.msra.mxu0 %v1038
      %1058 = vmatprep.subr.bf16.mxu0 0
      %1059 = vmatpush1.bf16.msra.mxu0 %v1037
      %1060 = vmatprep.subr.bf16.mxu0 0
      %1061 = vmatpush1.bf16.msra.mxu0 %v1036
      %1062 = vmatprep.subr.bf16.mxu0 0
      %1063 = vmatpush1.bf16.msra.mxu0 %v1035
      %1064 = vmatprep.subr.bf16.mxu0 0
      %1065 = vmatpush1.bf16.msra.mxu0 %v1034
      %1066 = vmatprep.subr.bf16.mxu0 0
      %1067 = vmatpush2.bf16.msra.mxu0 0
      %1068 = vmatprep.subr.bf16.mxu0 0
      %1069 = vmatpush2.bf16.msra.mxu0 0
      %1070 = vmatprep.subr.bf16.mxu0 0
      %1071 = vmatpush2.bf16.msra.mxu0 0
      %1072 = vmatprep.subr.bf16.mxu0 0
      %1073 = vmatpush2.bf16.msra.mxu0 0
      %1074 = vmatprep.subr.bf16.mxu0 0
      %1075 = vmatpush2.bf16.msra.mxu0 0
      %1076 = vmatprep.subr.bf16.mxu0 0
      %1077 = vmatpush2.bf16.msra.mxu0 0
      %1078 = vmatprep.subr.bf16.mxu0 0
      %1079 = vmatpush2.bf16.msra.mxu0 0
      %1080 = vmatprep.subr.bf16.mxu0 0
      %1081 = vmatpush2.bf16.msra.mxu0 0
      %1082 = vmatprep.mubr.bf16.mxu0 0
      %1083 = vmatmul.mubr.bf16.gmra.mxu0 %v994
      %v1084 = vpop.f32.mrf.mxu0
      %v1085 = vadd.f32 0.0, %v1084
      %v1086 = vpop.f32.mrf.mxu0
      %v1087 = vpop.f32.mrf.mxu0
      %v1088 = vadd.f32 0.0, %v1087
      %v1089 = vpop.f32.mrf.mxu0
      %1090 = vmatprep.mubr.bf16.mxu0 0
      %1091 = vmatmul.mubr.bf16.gmra.mxu0 %v995
      %v1092 = vpop.f32.mrf.mxu0
      %v1093 = vadd.f32 0.0, %v1092
      %v1094 = vpop.f32.mrf.mxu0
      %v1095 = vpop.f32.mrf.mxu0
      %v1096 = vadd.f32 0.0, %v1095
      %v1097 = vpop.f32.mrf.mxu0
      %1098 = vmatprep.mubr.bf16.mxu0 0
      %1099 = vmatmul.mubr.bf16.gmra.mxu0 %v996
      %v1100 = vpop.f32.mrf.mxu0
      %v1101 = vadd.f32 0.0, %v1100
      %v1102 = vpop.f32.mrf.mxu0
      %v1103 = vpop.f32.mrf.mxu0
      %v1104 = vadd.f32 0.0, %v1103
      %v1105 = vpop.f32.mrf.mxu0
      %1106 = vmatprep.mubr.bf16.mxu0 0
      %1107 = vmatmul.mubr.bf16.gmra.mxu0 %v997
      %v1108 = vpop.f32.mrf.mxu0
      %v1109 = vadd.f32 0.0, %v1108
      %v1110 = vpop.f32.mrf.mxu0
      %v1111 = vpop.f32.mrf.mxu0
      %v1112 = vadd.f32 0.0, %v1111
      %v1113 = vpop.f32.mrf.mxu0
      %1114 = vdwg.mxu0
      %v1115 = vadd.f32 %v942, %v1085
      %v1116 = vadd.f32 %v943, %v1088
      %v1117 = vadd.f32 %v944, %v1093
      %v1118 = vadd.f32 %v945, %v1096
      %v1119 = vadd.f32 %v946, %v1101
      %v1120 = vadd.f32 %v947, %v1104
      %v1121 = vadd.f32 %v948, %v1109
      %v1122 = vadd.f32 %v949, %v1112
      %s1123 = sadd.s32 %s336, 54
      %s1124 = smul.addr %s1123, 4
      %s1125 = scalar_lea.vmem %s300, %s1124
      %v1126 = vld [vmem:[%s1125] sm:$0xf]
      %v1127 = vld [vmem:[%s1125 + $0x8] sm:$0xf]
      %v1128 = vld [vmem:[%s1125 + $0x10] sm:$0xf]
      %v1129 = vld [vmem:[%s1125 + $0x18] sm:$0xf]
      %v1130 = vld [vmem:[%s1125 + $0x20] sm:$0xf]
      %v1131 = vld [vmem:[%s1125 + $0x28] sm:$0xf]
      %v1132 = vld [vmem:[%s1125 + $0x30] sm:$0xf]
      %v1133 = vld [vmem:[%s1125 + $0x38] sm:$0xf]
      %s1134 = scalar_lea.vmem %s1, 256
      %v1135 = vld [vmem:[%s1134] sm:$0xf]
      %v1136 = vld [vmem:[%s1134 + $0x4] sm:$0xf]
      %v1137 = vld [vmem:[%s1134 + $0x8] sm:$0xf]
      %v1138 = vld [vmem:[%s1134 + $0xc] sm:$0xf]
      %v1139 = vld [vmem:[%s1134 + $0x10] sm:$0xf]
      %v1140 = vld [vmem:[%s1134 + $0x14] sm:$0xf]
      %v1141 = vld [vmem:[%s1134 + $0x18] sm:$0xf]
      %v1142 = vld [vmem:[%s1134 + $0x1c] sm:$0xf]
      %v1143 = vld [vmem:[%s1134 + $0x20] sm:$0xf]
      %v1144 = vld [vmem:[%s1134 + $0x24] sm:$0xf]
      %v1145 = vld [vmem:[%s1134 + $0x28] sm:$0xf]
      %v1146 = vld [vmem:[%s1134 + $0x2c] sm:$0xf]
      %v1147 = vld [vmem:[%s1134 + $0x30] sm:$0xf]
      %v1148 = vld [vmem:[%s1134 + $0x34] sm:$0xf]
      %v1149 = vld [vmem:[%s1134 + $0x38] sm:$0xf]
      %v1150 = vld [vmem:[%s1134 + $0x3c] sm:$0xf]
      %v1159 = vunpack.c.l.b16 %v1126
      %v1160 = vunpack.c.l.b16 %v1127
      %v1161 = vunpack.c.l.b16 %v1128
      %v1162 = vunpack.c.l.b16 %v1129
      %v1163 = vunpack.c.l.b16 %v1130
      %v1164 = vunpack.c.l.b16 %v1131
      %v1165 = vunpack.c.l.b16 %v1132
      %v1166 = vunpack.c.l.b16 %v1133
      %v1167 = vpack.c.b16 %v1160, %v1159
      %v1168 = vpack.c.b16 %v1162, %v1161
      %v1169 = vpack.c.b16 %v1164, %v1163
      %v1170 = vpack.c.b16 %v1166, %v1165
      %v1191 = vunpack.c.l.b16 %v1135
      %v1192 = vunpack.c.l.b16 %v1136
      %v1193 = vunpack.c.l.b16 %v1137
      %v1194 = vunpack.c.l.b16 %v1138
      %v1195 = vunpack.c.l.b16 %v1139
      %v1196 = vunpack.c.l.b16 %v1140
      %v1197 = vunpack.c.l.b16 %v1141
      %v1198 = vunpack.c.l.b16 %v1142
      %v1199 = vunpack.c.l.b16 %v1143
      %v1200 = vunpack.c.l.b16 %v1144
      %v1201 = vunpack.c.l.b16 %v1145
      %v1202 = vunpack.c.l.b16 %v1146
      %v1203 = vunpack.c.l.b16 %v1147
      %v1204 = vunpack.c.l.b16 %v1148
      %v1205 = vunpack.c.l.b16 %v1149
      %v1206 = vunpack.c.l.b16 %v1150
      %v1207 = vpack.c.b16 %v1192, %v1191
      %v1208 = vpack.c.b16 %v1194, %v1193
      %v1209 = vpack.c.b16 %v1196, %v1195
      %v1210 = vpack.c.b16 %v1198, %v1197
      %v1211 = vpack.c.b16 %v1200, %v1199
      %v1212 = vpack.c.b16 %v1202, %v1201
      %v1213 = vpack.c.b16 %v1204, %v1203
      %v1214 = vpack.c.b16 %v1206, %v1205
      %1223 = vmatprep.subr.bf16.mxu0 0
      %1224 = vmatpush1.bf16.msra.mxu0 %v1214
      %1225 = vmatprep.subr.bf16.mxu0 0
      %1226 = vmatpush1.bf16.msra.mxu0 %v1213
      %1227 = vmatprep.subr.bf16.mxu0 0
      %1228 = vmatpush1.bf16.msra.mxu0 %v1212
      %1229 = vmatprep.subr.bf16.mxu0 0
      %1230 = vmatpush1.bf16.msra.mxu0 %v1211
      %1231 = vmatprep.subr.bf16.mxu0 0
      %1232 = vmatpush1.bf16.msra.mxu0 %v1210
      %1233 = vmatprep.subr.bf16.mxu0 0
      %1234 = vmatpush1.bf16.msra.mxu0 %v1209
      %1235 = vmatprep.subr.bf16.mxu0 0
      %1236 = vmatpush1.bf16.msra.mxu0 %v1208
      %1237 = vmatprep.subr.bf16.mxu0 0
      %1238 = vmatpush1.bf16.msra.mxu0 %v1207
      %1239 = vmatprep.subr.bf16.mxu0 0
      %1240 = vmatpush2.bf16.msra.mxu0 0
      %1241 = vmatprep.subr.bf16.mxu0 0
      %1242 = vmatpush2.bf16.msra.mxu0 0
      %1243 = vmatprep.subr.bf16.mxu0 0
      %1244 = vmatpush2.bf16.msra.mxu0 0
      %1245 = vmatprep.subr.bf16.mxu0 0
      %1246 = vmatpush2.bf16.msra.mxu0 0
      %1247 = vmatprep.subr.bf16.mxu0 0
      %1248 = vmatpush2.bf16.msra.mxu0 0
      %1249 = vmatprep.subr.bf16.mxu0 0
      %1250 = vmatpush2.bf16.msra.mxu0 0
      %1251 = vmatprep.subr.bf16.mxu0 0
      %1252 = vmatpush2.bf16.msra.mxu0 0
      %1253 = vmatprep.subr.bf16.mxu0 0
      %1254 = vmatpush2.bf16.msra.mxu0 0
      %1255 = vmatprep.mubr.bf16.mxu0 0
      %1256 = vmatmul.mubr.bf16.gmra.mxu0 %v1167
      %v1257 = vpop.f32.mrf.mxu0
      %v1258 = vadd.f32 0.0, %v1257
      %v1259 = vpop.f32.mrf.mxu0
      %v1260 = vpop.f32.mrf.mxu0
      %v1261 = vadd.f32 0.0, %v1260
      %v1262 = vpop.f32.mrf.mxu0
      %1263 = vmatprep.mubr.bf16.mxu0 0
      %1264 = vmatmul.mubr.bf16.gmra.mxu0 %v1168
      %v1265 = vpop.f32.mrf.mxu0
      %v1266 = vadd.f32 0.0, %v1265
      %v1267 = vpop.f32.mrf.mxu0
      %v1268 = vpop.f32.mrf.mxu0
      %v1269 = vadd.f32 0.0, %v1268
      %v1270 = vpop.f32.mrf.mxu0
      %1271 = vmatprep.mubr.bf16.mxu0 0
      %1272 = vmatmul.mubr.bf16.gmra.mxu0 %v1169
      %v1273 = vpop.f32.mrf.mxu0
      %v1274 = vadd.f32 0.0, %v1273
      %v1275 = vpop.f32.mrf.mxu0
      %v1276 = vpop.f32.mrf.mxu0
      %v1277 = vadd.f32 0.0, %v1276
      %v1278 = vpop.f32.mrf.mxu0
      %1279 = vmatprep.mubr.bf16.mxu0 0
      %1280 = vmatmul.mubr.bf16.gmra.mxu0 %v1170
      %v1281 = vpop.f32.mrf.mxu0
      %v1282 = vadd.f32 0.0, %v1281
      %v1283 = vpop.f32.mrf.mxu0
      %v1284 = vpop.f32.mrf.mxu0
      %v1285 = vadd.f32 0.0, %v1284
      %v1286 = vpop.f32.mrf.mxu0
      %1287 = vdwg.mxu0
      %v1288 = vadd.f32 %v1115, %v1258
      %v1289 = vadd.f32 %v1116, %v1261
      %v1290 = vadd.f32 %v1117, %v1266
      %v1291 = vadd.f32 %v1118, %v1269
      %v1292 = vadd.f32 %v1119, %v1274
      %v1293 = vadd.f32 %v1120, %v1277
      %v1294 = vadd.f32 %v1121, %v1282
      %v1295 = vadd.f32 %v1122, %v1285
      %v1296 = vld [vmem:[%s952] sm:$0xf]
      %v1297 = vld [vmem:[%s952 + $0x4] sm:$0x1]
      %v1298 = vld [vmem:[%s952 + $0x8] sm:$0xf]
      %v1299 = vld [vmem:[%s952 + $0xc] sm:$0x1]
      %v1300 = vld [vmem:[%s952 + $0x10] sm:$0xf]
      %v1301 = vld [vmem:[%s952 + $0x14] sm:$0x1]
      %v1302 = vld [vmem:[%s952 + $0x18] sm:$0xf]
      %v1303 = vld [vmem:[%s952 + $0x1c] sm:$0x1]
      %v1304 = vld [vmem:[%s952 + $0x20] sm:$0xf]
      %v1305 = vld [vmem:[%s952 + $0x24] sm:$0x1]
      %v1306 = vld [vmem:[%s952 + $0x28] sm:$0xf]
      %v1307 = vld [vmem:[%s952 + $0x2c] sm:$0x1]
      %v1308 = vld [vmem:[%s952 + $0x30] sm:$0xf]
      %v1309 = vld [vmem:[%s952 + $0x34] sm:$0x1]
      %v1310 = vld [vmem:[%s952 + $0x38] sm:$0xf]
      %v1311 = vld [vmem:[%s952 + $0x3c] sm:$0x1]
      %v1313 = vshrl.u32 %v1296, 16
      %v1315 = vrot.slane %v1313, 4
      %v1316 = vshll.u32 %v1296, 16
      %v1318 = vrot.slane %v1316, 5
      %v1319 = vor.u32 %v1315, %v1318
      %v1320 = vrot.slane %v1319, 4
      %v1322 = vshll.u32 %v1297, 16
      %v1324 = vrot.slane %v1322, 5
      %v1325 = vsel %vm683, %v1320, %v1324
      %v1327 = vshrl.u32 %v1298, 16
      %v1329 = vrot.slane %v1327, 4
      %v1330 = vshll.u32 %v1298, 16
      %v1332 = vrot.slane %v1330, 5
      %v1333 = vor.u32 %v1329, %v1332
      %v1334 = vrot.slane %v1333, 4
      %v1336 = vshll.u32 %v1299, 16
      %v1338 = vrot.slane %v1336, 5
      %v1339 = vsel %vm683, %v1334, %v1338
      %v1341 = vshrl.u32 %v1300, 16
      %v1343 = vrot.slane %v1341, 4
      %v1344 = vshll.u32 %v1300, 16
      %v1346 = vrot.slane %v1344, 5
      %v1347 = vor.u32 %v1343, %v1346
      %v1348 = vrot.slane %v1347, 4
      %v1350 = vshll.u32 %v1301, 16
      %v1352 = vrot.slane %v1350, 5
      %v1353 = vsel %vm683, %v1348, %v1352
      %v1355 = vshrl.u32 %v1302, 16
      %v1357 = vrot.slane %v1355, 4
      %v1358 = vshll.u32 %v1302, 16
      %v1360 = vrot.slane %v1358, 5
      %v1361 = vor.u32 %v1357, %v1360
      %v1362 = vrot.slane %v1361, 4
      %v1364 = vshll.u32 %v1303, 16
      %v1366 = vrot.slane %v1364, 5
      %v1367 = vsel %vm683, %v1362, %v1366
      %v1369 = vshrl.u32 %v1304, 16
      %v1371 = vrot.slane %v1369, 4
      %v1372 = vshll.u32 %v1304, 16
      %v1374 = vrot.slane %v1372, 5
      %v1375 = vor.u32 %v1371, %v1374
      %v1376 = vrot.slane %v1375, 4
      %v1378 = vshll.u32 %v1305, 16
      %v1380 = vrot.slane %v1378, 5
      %v1381 = vsel %vm683, %v1376, %v1380
      %v1383 = vshrl.u32 %v1306, 16
      %v1385 = vrot.slane %v1383, 4
      %v1386 = vshll.u32 %v1306, 16
      %v1388 = vrot.slane %v1386, 5
      %v1389 = vor.u32 %v1385, %v1388
      %v1390 = vrot.slane %v1389, 4
      %v1392 = vshll.u32 %v1307, 16
      %v1394 = vrot.slane %v1392, 5
      %v1395 = vsel %vm683, %v1390, %v1394
      %v1397 = vshrl.u32 %v1308, 16
      %v1399 = vrot.slane %v1397, 4
      %v1400 = vshll.u32 %v1308, 16
      %v1402 = vrot.slane %v1400, 5
      %v1403 = vor.u32 %v1399, %v1402
      %v1404 = vrot.slane %v1403, 4
      %v1406 = vshll.u32 %v1309, 16
      %v1408 = vrot.slane %v1406, 5
      %v1409 = vsel %vm683, %v1404, %v1408
      %v1411 = vshrl.u32 %v1310, 16
      %v1413 = vrot.slane %v1411, 4
      %v1414 = vshll.u32 %v1310, 16
      %v1416 = vrot.slane %v1414, 5
      %v1417 = vor.u32 %v1413, %v1416
      %v1418 = vrot.slane %v1417, 4
      %v1420 = vshll.u32 %v1311, 16
      %v1422 = vrot.slane %v1420, 5
      %v1423 = vsel %vm683, %v1418, %v1422
      %s1424 = scalar_lea.vmem %s1, 320
      %v1425 = vld [vmem:[%s1424] sm:$0xf]
      %v1426 = vld [vmem:[%s1424 + $0x4] sm:$0xf]
      %v1427 = vld [vmem:[%s1424 + $0x8] sm:$0xf]
      %v1428 = vld [vmem:[%s1424 + $0xc] sm:$0xf]
      %v1429 = vld [vmem:[%s1424 + $0x10] sm:$0xf]
      %v1430 = vld [vmem:[%s1424 + $0x14] sm:$0xf]
      %v1431 = vld [vmem:[%s1424 + $0x18] sm:$0xf]
      %v1432 = vld [vmem:[%s1424 + $0x1c] sm:$0xf]
      %v1433 = vld [vmem:[%s1424 + $0x20] sm:$0xf]
      %v1434 = vld [vmem:[%s1424 + $0x24] sm:$0xf]
      %v1435 = vld [vmem:[%s1424 + $0x28] sm:$0xf]
      %v1436 = vld [vmem:[%s1424 + $0x2c] sm:$0xf]
      %v1437 = vld [vmem:[%s1424 + $0x30] sm:$0xf]
      %v1438 = vld [vmem:[%s1424 + $0x34] sm:$0xf]
      %v1439 = vld [vmem:[%s1424 + $0x38] sm:$0xf]
      %v1440 = vld [vmem:[%s1424 + $0x3c] sm:$0xf]
      %v1441 = vunpack.c.l.b16 %v1325
      %v1442 = vunpack.c.l.b16 %v1339
      %v1443 = vunpack.c.l.b16 %v1353
      %v1444 = vunpack.c.l.b16 %v1367
      %v1445 = vunpack.c.l.b16 %v1381
      %v1446 = vunpack.c.l.b16 %v1395
      %v1447 = vunpack.c.l.b16 %v1409
      %v1448 = vunpack.c.l.b16 %v1423
      %v1449 = vpack.c.b16 %v1442, %v1441
      %v1450 = vpack.c.b16 %v1444, %v1443
      %v1451 = vpack.c.b16 %v1446, %v1445
      %v1452 = vpack.c.b16 %v1448, %v1447
      %v1473 = vunpack.c.l.b16 %v1425
      %v1474 = vunpack.c.l.b16 %v1426
      %v1475 = vunpack.c.l.b16 %v1427
      %v1476 = vunpack.c.l.b16 %v1428
      %v1477 = vunpack.c.l.b16 %v1429
      %v1478 = vunpack.c.l.b16 %v1430
      %v1479 = vunpack.c.l.b16 %v1431
      %v1480 = vunpack.c.l.b16 %v1432
      %v1481 = vunpack.c.l.b16 %v1433
      %v1482 = vunpack.c.l.b16 %v1434
      %v1483 = vunpack.c.l.b16 %v1435
      %v1484 = vunpack.c.l.b16 %v1436
      %v1485 = vunpack.c.l.b16 %v1437
      %v1486 = vunpack.c.l.b16 %v1438
      %v1487 = vunpack.c.l.b16 %v1439
      %v1488 = vunpack.c.l.b16 %v1440
      %v1489 = vpack.c.b16 %v1474, %v1473
      %v1490 = vpack.c.b16 %v1476, %v1475
      %v1491 = vpack.c.b16 %v1478, %v1477
      %v1492 = vpack.c.b16 %v1480, %v1479
      %v1493 = vpack.c.b16 %v1482, %v1481
      %v1494 = vpack.c.b16 %v1484, %v1483
      %v1495 = vpack.c.b16 %v1486, %v1485
      %v1496 = vpack.c.b16 %v1488, %v1487
      %1505 = vmatprep.subr.bf16.mxu0 0
      %1506 = vmatpush1.bf16.msra.mxu0 %v1496
      %1507 = vmatprep.subr.bf16.mxu0 0
      %1508 = vmatpush1.bf16.msra.mxu0 %v1495
      %1509 = vmatprep.subr.bf16.mxu0 0
      %1510 = vmatpush1.bf16.msra.mxu0 %v1494
      %1511 = vmatprep.subr.bf16.mxu0 0
      %1512 = vmatpush1.bf16.msra.mxu0 %v1493
      %1513 = vmatprep.subr.bf16.mxu0 0
      %1514 = vmatpush1.bf16.msra.mxu0 %v1492
      %1515 = vmatprep.subr.bf16.mxu0 0
      %1516 = vmatpush1.bf16.msra.mxu0 %v1491
      %1517 = vmatprep.subr.bf16.mxu0 0
      %1518 = vmatpush1.bf16.msra.mxu0 %v1490
      %1519 = vmatprep.subr.bf16.mxu0 0
      %1520 = vmatpush1.bf16.msra.mxu0 %v1489
      %1521 = vmatprep.subr.bf16.mxu0 0
      %1522 = vmatpush2.bf16.msra.mxu0 0
      %1523 = vmatprep.subr.bf16.mxu0 0
      %1524 = vmatpush2.bf16.msra.mxu0 0
      %1525 = vmatprep.subr.bf16.mxu0 0
      %1526 = vmatpush2.bf16.msra.mxu0 0
      %1527 = vmatprep.subr.bf16.mxu0 0
      %1528 = vmatpush2.bf16.msra.mxu0 0
      %1529 = vmatprep.subr.bf16.mxu0 0
      %1530 = vmatpush2.bf16.msra.mxu0 0
      %1531 = vmatprep.subr.bf16.mxu0 0
      %1532 = vmatpush2.bf16.msra.mxu0 0
      %1533 = vmatprep.subr.bf16.mxu0 0
      %1534 = vmatpush2.bf16.msra.mxu0 0
      %1535 = vmatprep.subr.bf16.mxu0 0
      %1536 = vmatpush2.bf16.msra.mxu0 0
      %1537 = vmatprep.mubr.bf16.mxu0 0
      %1538 = vmatmul.mubr.bf16.gmra.mxu0 %v1449
      %v1539 = vpop.f32.mrf.mxu0
      %v1540 = vadd.f32 0.0, %v1539
      %v1541 = vpop.f32.mrf.mxu0
      %v1542 = vpop.f32.mrf.mxu0
      %v1543 = vadd.f32 0.0, %v1542
      %v1544 = vpop.f32.mrf.mxu0
      %1545 = vmatprep.mubr.bf16.mxu0 0
      %1546 = vmatmul.mubr.bf16.gmra.mxu0 %v1450
      %v1547 = vpop.f32.mrf.mxu0
      %v1548 = vadd.f32 0.0, %v1547
      %v1549 = vpop.f32.mrf.mxu0
      %v1550 = vpop.f32.mrf.mxu0
      %v1551 = vadd.f32 0.0, %v1550
      %v1552 = vpop.f32.mrf.mxu0
      %1553 = vmatprep.mubr.bf16.mxu0 0
      %1554 = vmatmul.mubr.bf16.gmra.mxu0 %v1451
      %v1555 = vpop.f32.mrf.mxu0
      %v1556 = vadd.f32 0.0, %v1555
      %v1557 = vpop.f32.mrf.mxu0
      %v1558 = vpop.f32.mrf.mxu0
      %v1559 = vadd.f32 0.0, %v1558
      %v1560 = vpop.f32.mrf.mxu0
      %1561 = vmatprep.mubr.bf16.mxu0 0
      %1562 = vmatmul.mubr.bf16.gmra.mxu0 %v1452
      %v1563 = vpop.f32.mrf.mxu0
      %v1564 = vadd.f32 0.0, %v1563
      %v1565 = vpop.f32.mrf.mxu0
      %v1566 = vpop.f32.mrf.mxu0
      %v1567 = vadd.f32 0.0, %v1566
      %v1568 = vpop.f32.mrf.mxu0
      %1569 = vdwg.mxu0
      %v1570 = vadd.f32 %v1288, %v1540
      %v1571 = vadd.f32 %v1289, %v1543
      %v1572 = vadd.f32 %v1290, %v1548
      %v1573 = vadd.f32 %v1291, %v1551
      %v1574 = vadd.f32 %v1292, %v1556
      %v1575 = vadd.f32 %v1293, %v1559
      %v1576 = vadd.f32 %v1294, %v1564
      %v1577 = vadd.f32 %v1295, %v1567
      %s1578 = sadd.s32 %s335, 1
      %s1579 = smul.u32 %s1578, 2
      %s1580 = smul.addr %s1579, 4
      %s1581 = scalar_lea.vmem %s300, %s1580
      %v1582 = vld [vmem:[%s1581] sm:$0xf]
      %v1583 = vld [vmem:[%s1581 + $0x8] sm:$0xf]
      %v1584 = vld [vmem:[%s1581 + $0x10] sm:$0xf]
      %v1585 = vld [vmem:[%s1581 + $0x18] sm:$0xf]
      %v1586 = vld [vmem:[%s1581 + $0x20] sm:$0xf]
      %v1587 = vld [vmem:[%s1581 + $0x28] sm:$0xf]
      %v1588 = vld [vmem:[%s1581 + $0x30] sm:$0xf]
      %v1589 = vld [vmem:[%s1581 + $0x38] sm:$0xf]
      %s1590 = scalar_lea.vmem %s1, 384
      %v1591 = vld [vmem:[%s1590] sm:$0xf]
      %v1592 = vld [vmem:[%s1590 + $0x4] sm:$0xf]
      %v1593 = vld [vmem:[%s1590 + $0x8] sm:$0xf]
      %v1594 = vld [vmem:[%s1590 + $0xc] sm:$0xf]
      %v1595 = vld [vmem:[%s1590 + $0x10] sm:$0xf]
      %v1596 = vld [vmem:[%s1590 + $0x14] sm:$0xf]
      %v1597 = vld [vmem:[%s1590 + $0x18] sm:$0xf]
      %v1598 = vld [vmem:[%s1590 + $0x1c] sm:$0xf]
      %v1599 = vld [vmem:[%s1590 + $0x20] sm:$0xf]
      %v1600 = vld [vmem:[%s1590 + $0x24] sm:$0xf]
      %v1601 = vld [vmem:[%s1590 + $0x28] sm:$0xf]
      %v1602 = vld [vmem:[%s1590 + $0x2c] sm:$0xf]
      %v1603 = vld [vmem:[%s1590 + $0x30] sm:$0xf]
      %v1604 = vld [vmem:[%s1590 + $0x34] sm:$0xf]
      %v1605 = vld [vmem:[%s1590 + $0x38] sm:$0xf]
      %v1606 = vld [vmem:[%s1590 + $0x3c] sm:$0xf]
      %v1615 = vunpack.c.l.b16 %v1582
      %v1616 = vunpack.c.l.b16 %v1583
      %v1617 = vunpack.c.l.b16 %v1584
      %v1618 = vunpack.c.l.b16 %v1585
      %v1619 = vunpack.c.l.b16 %v1586
      %v1620 = vunpack.c.l.b16 %v1587
      %v1621 = vunpack.c.l.b16 %v1588
      %v1622 = vunpack.c.l.b16 %v1589
      %v1623 = vpack.c.b16 %v1616, %v1615
      %v1624 = vpack.c.b16 %v1618, %v1617
      %v1625 = vpack.c.b16 %v1620, %v1619
      %v1626 = vpack.c.b16 %v1622, %v1621
      %v1647 = vunpack.c.l.b16 %v1591
      %v1648 = vunpack.c.l.b16 %v1592
      %v1649 = vunpack.c.l.b16 %v1593
      %v1650 = vunpack.c.l.b16 %v1594
      %v1651 = vunpack.c.l.b16 %v1595
      %v1652 = vunpack.c.l.b16 %v1596
      %v1653 = vunpack.c.l.b16 %v1597
      %v1654 = vunpack.c.l.b16 %v1598
      %v1655 = vunpack.c.l.b16 %v1599
      %v1656 = vunpack.c.l.b16 %v1600
      %v1657 = vunpack.c.l.b16 %v1601
      %v1658 = vunpack.c.l.b16 %v1602
      %v1659 = vunpack.c.l.b16 %v1603
      %v1660 = vunpack.c.l.b16 %v1604
      %v1661 = vunpack.c.l.b16 %v1605
      %v1662 = vunpack.c.l.b16 %v1606
      %v1663 = vpack.c.b16 %v1648, %v1647
      %v1664 = vpack.c.b16 %v1650, %v1649
      %v1665 = vpack.c.b16 %v1652, %v1651
      %v1666 = vpack.c.b16 %v1654, %v1653
      %v1667 = vpack.c.b16 %v1656, %v1655
      %v1668 = vpack.c.b16 %v1658, %v1657
      %v1669 = vpack.c.b16 %v1660, %v1659
      %v1670 = vpack.c.b16 %v1662, %v1661
      %1679 = vmatprep.subr.bf16.mxu0 0
      %1680 = vmatpush1.bf16.msra.mxu0 %v1670
      %1681 = vmatprep.subr.bf16.mxu0 0
      %1682 = vmatpush1.bf16.msra.mxu0 %v1669
      %1683 = vmatprep.subr.bf16.mxu0 0
      %1684 = vmatpush1.bf16.msra.mxu0 %v1668
      %1685 = vmatprep.subr.bf16.mxu0 0
      %1686 = vmatpush1.bf16.msra.mxu0 %v1667
      %1687 = vmatprep.subr.bf16.mxu0 0
      %1688 = vmatpush1.bf16.msra.mxu0 %v1666
      %1689 = vmatprep.subr.bf16.mxu0 0
      %1690 = vmatpush1.bf16.msra.mxu0 %v1665
      %1691 = vmatprep.subr.bf16.mxu0 0
      %1692 = vmatpush1.bf16.msra.mxu0 %v1664
      %1693 = vmatprep.subr.bf16.mxu0 0
      %1694 = vmatpush1.bf16.msra.mxu0 %v1663
      %1695 = vmatprep.subr.bf16.mxu0 0
      %1696 = vmatpush2.bf16.msra.mxu0 0
      %1697 = vmatprep.subr.bf16.mxu0 0
      %1698 = vmatpush2.bf16.msra.mxu0 0
      %1699 = vmatprep.subr.bf16.mxu0 0
      %1700 = vmatpush2.bf16.msra.mxu0 0
      %1701 = vmatprep.subr.bf16.mxu0 0
      %1702 = vmatpush2.bf16.msra.mxu0 0
      %1703 = vmatprep.subr.bf16.mxu0 0
      %1704 = vmatpush2.bf16.msra.mxu0 0
      %1705 = vmatprep.subr.bf16.mxu0 0
      %1706 = vmatpush2.bf16.msra.mxu0 0
      %1707 = vmatprep.subr.bf16.mxu0 0
      %1708 = vmatpush2.bf16.msra.mxu0 0
      %1709 = vmatprep.subr.bf16.mxu0 0
      %1710 = vmatpush2.bf16.msra.mxu0 0
      %1711 = vmatprep.mubr.bf16.mxu0 0
      %1712 = vmatmul.mubr.bf16.gmra.mxu0 %v1623
      %v1713 = vpop.f32.mrf.mxu0
      %v1714 = vadd.f32 0.0, %v1713
      %v1715 = vpop.f32.mrf.mxu0
      %v1716 = vpop.f32.mrf.mxu0
      %v1717 = vadd.f32 0.0, %v1716
      %v1718 = vpop.f32.mrf.mxu0
      %1719 = vmatprep.mubr.bf16.mxu0 0
      %1720 = vmatmul.mubr.bf16.gmra.mxu0 %v1624
      %v1721 = vpop.f32.mrf.mxu0
      %v1722 = vadd.f32 0.0, %v1721
      %v1723 = vpop.f32.mrf.mxu0
      %v1724 = vpop.f32.mrf.mxu0
      %v1725 = vadd.f32 0.0, %v1724
      %v1726 = vpop.f32.mrf.mxu0
      %1727 = vmatprep.mubr.bf16.mxu0 0
      %1728 = vmatmul.mubr.bf16.gmra.mxu0 %v1625
      %v1729 = vpop.f32.mrf.mxu0
      %v1730 = vadd.f32 0.0, %v1729
      %v1731 = vpop.f32.mrf.mxu0
      %v1732 = vpop.f32.mrf.mxu0
      %v1733 = vadd.f32 0.0, %v1732
      %v1734 = vpop.f32.mrf.mxu0
      %1735 = vmatprep.mubr.bf16.mxu0 0
      %1736 = vmatmul.mubr.bf16.gmra.mxu0 %v1626
      %v1737 = vpop.f32.mrf.mxu0
      %v1738 = vadd.f32 0.0, %v1737
      %v1739 = vpop.f32.mrf.mxu0
      %v1740 = vpop.f32.mrf.mxu0
      %v1741 = vadd.f32 0.0, %v1740
      %v1742 = vpop.f32.mrf.mxu0
      %1743 = vdwg.mxu0
      %v1744 = vadd.f32 %v1570, %v1714
      %v1745 = vadd.f32 %v1571, %v1717
      %v1746 = vadd.f32 %v1572, %v1722
      %v1747 = vadd.f32 %v1573, %v1725
      %v1748 = vadd.f32 %v1574, %v1730
      %v1749 = vadd.f32 %v1575, %v1733
      %v1750 = vadd.f32 %v1576, %v1738
      %v1751 = vadd.f32 %v1577, %v1741
      %s1752 = sadd.s32 %s1579, 18
      %s1753 = smul.addr %s1752, 4
      %s1754 = scalar_lea.vmem %s300, %s1753
      %v1755 = vld [vmem:[%s1754] sm:$0xf]
      %v1756 = vld [vmem:[%s1754 + $0x8] sm:$0xf]
      %v1757 = vld [vmem:[%s1754 + $0x10] sm:$0xf]
      %v1758 = vld [vmem:[%s1754 + $0x18] sm:$0xf]
      %v1759 = vld [vmem:[%s1754 + $0x20] sm:$0xf]
      %v1760 = vld [vmem:[%s1754 + $0x28] sm:$0xf]
      %v1761 = vld [vmem:[%s1754 + $0x30] sm:$0xf]
      %v1762 = vld [vmem:[%s1754 + $0x38] sm:$0xf]
      %s1763 = scalar_lea.vmem %s1, 448
      %v1764 = vld [vmem:[%s1763] sm:$0xf]
      %v1765 = vld [vmem:[%s1763 + $0x4] sm:$0xf]
      %v1766 = vld [vmem:[%s1763 + $0x8] sm:$0xf]
      %v1767 = vld [vmem:[%s1763 + $0xc] sm:$0xf]
      %v1768 = vld [vmem:[%s1763 + $0x10] sm:$0xf]
      %v1769 = vld [vmem:[%s1763 + $0x14] sm:$0xf]
      %v1770 = vld [vmem:[%s1763 + $0x18] sm:$0xf]
      %v1771 = vld [vmem:[%s1763 + $0x1c] sm:$0xf]
      %v1772 = vld [vmem:[%s1763 + $0x20] sm:$0xf]
      %v1773 = vld [vmem:[%s1763 + $0x24] sm:$0xf]
      %v1774 = vld [vmem:[%s1763 + $0x28] sm:$0xf]
      %v1775 = vld [vmem:[%s1763 + $0x2c] sm:$0xf]
      %v1776 = vld [vmem:[%s1763 + $0x30] sm:$0xf]
      %v1777 = vld [vmem:[%s1763 + $0x34] sm:$0xf]
      %v1778 = vld [vmem:[%s1763 + $0x38] sm:$0xf]
      %v1779 = vld [vmem:[%s1763 + $0x3c] sm:$0xf]
      %v1788 = vunpack.c.l.b16 %v1755
      %v1789 = vunpack.c.l.b16 %v1756
      %v1790 = vunpack.c.l.b16 %v1757
      %v1791 = vunpack.c.l.b16 %v1758
      %v1792 = vunpack.c.l.b16 %v1759
      %v1793 = vunpack.c.l.b16 %v1760
      %v1794 = vunpack.c.l.b16 %v1761
      %v1795 = vunpack.c.l.b16 %v1762
      %v1796 = vpack.c.b16 %v1789, %v1788
      %v1797 = vpack.c.b16 %v1791, %v1790
      %v1798 = vpack.c.b16 %v1793, %v1792
      %v1799 = vpack.c.b16 %v1795, %v1794
      %v1820 = vunpack.c.l.b16 %v1764
      %v1821 = vunpack.c.l.b16 %v1765
      %v1822 = vunpack.c.l.b16 %v1766
      %v1823 = vunpack.c.l.b16 %v1767
      %v1824 = vunpack.c.l.b16 %v1768
      %v1825 = vunpack.c.l.b16 %v1769
      %v1826 = vunpack.c.l.b16 %v1770
      %v1827 = vunpack.c.l.b16 %v1771
      %v1828 = vunpack.c.l.b16 %v1772
      %v1829 = vunpack.c.l.b16 %v1773
      %v1830 = vunpack.c.l.b16 %v1774
      %v1831 = vunpack.c.l.b16 %v1775
      %v1832 = vunpack.c.l.b16 %v1776
      %v1833 = vunpack.c.l.b16 %v1777
      %v1834 = vunpack.c.l.b16 %v1778
      %v1835 = vunpack.c.l.b16 %v1779
      %v1836 = vpack.c.b16 %v1821, %v1820
      %v1837 = vpack.c.b16 %v1823, %v1822
      %v1838 = vpack.c.b16 %v1825, %v1824
      %v1839 = vpack.c.b16 %v1827, %v1826
      %v1840 = vpack.c.b16 %v1829, %v1828
      %v1841 = vpack.c.b16 %v1831, %v1830
      %v1842 = vpack.c.b16 %v1833, %v1832
      %v1843 = vpack.c.b16 %v1835, %v1834
      %1852 = vmatprep.subr.bf16.mxu0 0
      %1853 = vmatpush1.bf16.msra.mxu0 %v1843
      %1854 = vmatprep.subr.bf16.mxu0 0
      %1855 = vmatpush1.bf16.msra.mxu0 %v1842
      %1856 = vmatprep.subr.bf16.mxu0 0
      %1857 = vmatpush1.bf16.msra.mxu0 %v1841
      %1858 = vmatprep.subr.bf16.mxu0 0
      %1859 = vmatpush1.bf16.msra.mxu0 %v1840
      %1860 = vmatprep.subr.bf16.mxu0 0
      %1861 = vmatpush1.bf16.msra.mxu0 %v1839
      %1862 = vmatprep.subr.bf16.mxu0 0
      %1863 = vmatpush1.bf16.msra.mxu0 %v1838
      %1864 = vmatprep.subr.bf16.mxu0 0
      %1865 = vmatpush1.bf16.msra.mxu0 %v1837
      %1866 = vmatprep.subr.bf16.mxu0 0
      %1867 = vmatpush1.bf16.msra.mxu0 %v1836
      %1868 = vmatprep.subr.bf16.mxu0 0
      %1869 = vmatpush2.bf16.msra.mxu0 0
      %1870 = vmatprep.subr.bf16.mxu0 0
      %1871 = vmatpush2.bf16.msra.mxu0 0
      %1872 = vmatprep.subr.bf16.mxu0 0
      %1873 = vmatpush2.bf16.msra.mxu0 0
      %1874 = vmatprep.subr.bf16.mxu0 0
      %1875 = vmatpush2.bf16.msra.mxu0 0
      %1876 = vmatprep.subr.bf16.mxu0 0
      %1877 = vmatpush2.bf16.msra.mxu0 0
      %1878 = vmatprep.subr.bf16.mxu0 0
      %1879 = vmatpush2.bf16.msra.mxu0 0
      %1880 = vmatprep.subr.bf16.mxu0 0
      %1881 = vmatpush2.bf16.msra.mxu0 0
      %1882 = vmatprep.subr.bf16.mxu0 0
      %1883 = vmatpush2.bf16.msra.mxu0 0
      %1884 = vmatprep.mubr.bf16.mxu0 0
      %1885 = vmatmul.mubr.bf16.gmra.mxu0 %v1796
      %v1886 = vpop.f32.mrf.mxu0
      %v1887 = vadd.f32 0.0, %v1886
      %v1888 = vpop.f32.mrf.mxu0
      %v1889 = vpop.f32.mrf.mxu0
      %v1890 = vadd.f32 0.0, %v1889
      %v1891 = vpop.f32.mrf.mxu0
      %1892 = vmatprep.mubr.bf16.mxu0 0
      %1893 = vmatmul.mubr.bf16.gmra.mxu0 %v1797
      %v1894 = vpop.f32.mrf.mxu0
      %v1895 = vadd.f32 0.0, %v1894
      %v1896 = vpop.f32.mrf.mxu0
      %v1897 = vpop.f32.mrf.mxu0
      %v1898 = vadd.f32 0.0, %v1897
      %v1899 = vpop.f32.mrf.mxu0
      %1900 = vmatprep.mubr.bf16.mxu0 0
      %1901 = vmatmul.mubr.bf16.gmra.mxu0 %v1798
      %v1902 = vpop.f32.mrf.mxu0
      %v1903 = vadd.f32 0.0, %v1902
      %v1904 = vpop.f32.mrf.mxu0
      %v1905 = vpop.f32.mrf.mxu0
      %v1906 = vadd.f32 0.0, %v1905
      %v1907 = vpop.f32.mrf.mxu0
      %1908 = vmatprep.mubr.bf16.mxu0 0
      %1909 = vmatmul.mubr.bf16.gmra.mxu0 %v1799
      %v1910 = vpop.f32.mrf.mxu0
      %v1911 = vadd.f32 0.0, %v1910
      %v1912 = vpop.f32.mrf.mxu0
      %v1913 = vpop.f32.mrf.mxu0
      %v1914 = vadd.f32 0.0, %v1913
      %v1915 = vpop.f32.mrf.mxu0
      %1916 = vdwg.mxu0
      %v1917 = vadd.f32 %v1744, %v1887
      %v1918 = vadd.f32 %v1745, %v1890
      %v1919 = vadd.f32 %v1746, %v1895
      %v1920 = vadd.f32 %v1747, %v1898
      %v1921 = vadd.f32 %v1748, %v1903
      %v1922 = vadd.f32 %v1749, %v1906
      %v1923 = vadd.f32 %v1750, %v1911
      %v1924 = vadd.f32 %v1751, %v1914
      %v1925 = vld [vmem:[%s1581] sm:$0xf]
      %v1926 = vld [vmem:[%s1581 + $0x4] sm:$0x1]
      %v1927 = vld [vmem:[%s1581 + $0x8] sm:$0xf]
      %v1928 = vld [vmem:[%s1581 + $0xc] sm:$0x1]
      %v1929 = vld [vmem:[%s1581 + $0x10] sm:$0xf]
      %v1930 = vld [vmem:[%s1581 + $0x14] sm:$0x1]
      %v1931 = vld [vmem:[%s1581 + $0x18] sm:$0xf]
      %v1932 = vld [vmem:[%s1581 + $0x1c] sm:$0x1]
      %v1933 = vld [vmem:[%s1581 + $0x20] sm:$0xf]
      %v1934 = vld [vmem:[%s1581 + $0x24] sm:$0x1]
      %v1935 = vld [vmem:[%s1581 + $0x28] sm:$0xf]
      %v1936 = vld [vmem:[%s1581 + $0x2c] sm:$0x1]
      %v1937 = vld [vmem:[%s1581 + $0x30] sm:$0xf]
      %v1938 = vld [vmem:[%s1581 + $0x34] sm:$0x1]
      %v1939 = vld [vmem:[%s1581 + $0x38] sm:$0xf]
      %v1940 = vld [vmem:[%s1581 + $0x3c] sm:$0x1]
      %v1942 = vshrl.u32 %v1925, 16
      %v1944 = vrot.slane %v1942, 4
      %v1945 = vshll.u32 %v1925, 16
      %v1947 = vrot.slane %v1945, 5
      %v1948 = vor.u32 %v1944, %v1947
      %v1949 = vrot.slane %v1948, 4
      %v1951 = vshll.u32 %v1926, 16
      %v1953 = vrot.slane %v1951, 5
      %v1954 = vsel %vm683, %v1949, %v1953
      %v1956 = vshrl.u32 %v1927, 16
      %v1958 = vrot.slane %v1956, 4
      %v1959 = vshll.u32 %v1927, 16
      %v1961 = vrot.slane %v1959, 5
      %v1962 = vor.u32 %v1958, %v1961
      %v1963 = vrot.slane %v1962, 4
      %v1965 = vshll.u32 %v1928, 16
      %v1967 = vrot.slane %v1965, 5
      %v1968 = vsel %vm683, %v1963, %v1967
      %v1970 = vshrl.u32 %v1929, 16
      %v1972 = vrot.slane %v1970, 4
      %v1973 = vshll.u32 %v1929, 16
      %v1975 = vrot.slane %v1973, 5
      %v1976 = vor.u32 %v1972, %v1975
      %v1977 = vrot.slane %v1976, 4
      %v1979 = vshll.u32 %v1930, 16
      %v1981 = vrot.slane %v1979, 5
      %v1982 = vsel %vm683, %v1977, %v1981
      %v1984 = vshrl.u32 %v1931, 16
      %v1986 = vrot.slane %v1984, 4
      %v1987 = vshll.u32 %v1931, 16
      %v1989 = vrot.slane %v1987, 5
      %v1990 = vor.u32 %v1986, %v1989
      %v1991 = vrot.slane %v1990, 4
      %v1993 = vshll.u32 %v1932, 16
      %v1995 = vrot.slane %v1993, 5
      %v1996 = vsel %vm683, %v1991, %v1995
      %v1998 = vshrl.u32 %v1933, 16
      %v2000 = vrot.slane %v1998, 4
      %v2001 = vshll.u32 %v1933, 16
      %v2003 = vrot.slane %v2001, 5
      %v2004 = vor.u32 %v2000, %v2003
      %v2005 = vrot.slane %v2004, 4
      %v2007 = vshll.u32 %v1934, 16
      %v2009 = vrot.slane %v2007, 5
      %v2010 = vsel %vm683, %v2005, %v2009
      %v2012 = vshrl.u32 %v1935, 16
      %v2014 = vrot.slane %v2012, 4
      %v2015 = vshll.u32 %v1935, 16
      %v2017 = vrot.slane %v2015, 5
      %v2018 = vor.u32 %v2014, %v2017
      %v2019 = vrot.slane %v2018, 4
      %v2021 = vshll.u32 %v1936, 16
      %v2023 = vrot.slane %v2021, 5
      %v2024 = vsel %vm683, %v2019, %v2023
      %v2026 = vshrl.u32 %v1937, 16
      %v2028 = vrot.slane %v2026, 4
      %v2029 = vshll.u32 %v1937, 16
      %v2031 = vrot.slane %v2029, 5
      %v2032 = vor.u32 %v2028, %v2031
      %v2033 = vrot.slane %v2032, 4
      %v2035 = vshll.u32 %v1938, 16
      %v2037 = vrot.slane %v2035, 5
      %v2038 = vsel %vm683, %v2033, %v2037
      %v2040 = vshrl.u32 %v1939, 16
      %v2042 = vrot.slane %v2040, 4
      %v2043 = vshll.u32 %v1939, 16
      %v2045 = vrot.slane %v2043, 5
      %v2046 = vor.u32 %v2042, %v2045
      %v2047 = vrot.slane %v2046, 4
      %v2049 = vshll.u32 %v1940, 16
      %v2051 = vrot.slane %v2049, 5
      %v2052 = vsel %vm683, %v2047, %v2051
      %s2053 = scalar_lea.vmem %s1, 512
      %v2054 = vld [vmem:[%s2053] sm:$0xf]
      %v2055 = vld [vmem:[%s2053 + $0x4] sm:$0xf]
      %v2056 = vld [vmem:[%s2053 + $0x8] sm:$0xf]
      %v2057 = vld [vmem:[%s2053 + $0xc] sm:$0xf]
      %v2058 = vld [vmem:[%s2053 + $0x10] sm:$0xf]
      %v2059 = vld [vmem:[%s2053 + $0x14] sm:$0xf]
      %v2060 = vld [vmem:[%s2053 + $0x18] sm:$0xf]
      %v2061 = vld [vmem:[%s2053 + $0x1c] sm:$0xf]
      %v2062 = vld [vmem:[%s2053 + $0x20] sm:$0xf]
      %v2063 = vld [vmem:[%s2053 + $0x24] sm:$0xf]
      %v2064 = vld [vmem:[%s2053 + $0x28] sm:$0xf]
      %v2065 = vld [vmem:[%s2053 + $0x2c] sm:$0xf]
      %v2066 = vld [vmem:[%s2053 + $0x30] sm:$0xf]
      %v2067 = vld [vmem:[%s2053 + $0x34] sm:$0xf]
      %v2068 = vld [vmem:[%s2053 + $0x38] sm:$0xf]
      %v2069 = vld [vmem:[%s2053 + $0x3c] sm:$0xf]
      %v2070 = vunpack.c.l.b16 %v1954
      %v2071 = vunpack.c.l.b16 %v1968
      %v2072 = vunpack.c.l.b16 %v1982
      %v2073 = vunpack.c.l.b16 %v1996
      %v2074 = vunpack.c.l.b16 %v2010
      %v2075 = vunpack.c.l.b16 %v2024
      %v2076 = vunpack.c.l.b16 %v2038
      %v2077 = vunpack.c.l.b16 %v2052
      %v2078 = vpack.c.b16 %v2071, %v2070
      %v2079 = vpack.c.b16 %v2073, %v2072
      %v2080 = vpack.c.b16 %v2075, %v2074
      %v2081 = vpack.c.b16 %v2077, %v2076
      %v2102 = vunpack.c.l.b16 %v2054
      %v2103 = vunpack.c.l.b16 %v2055
      %v2104 = vunpack.c.l.b16 %v2056
      %v2105 = vunpack.c.l.b16 %v2057
      %v2106 = vunpack.c.l.b16 %v2058
      %v2107 = vunpack.c.l.b16 %v2059
      %v2108 = vunpack.c.l.b16 %v2060
      %v2109 = vunpack.c.l.b16 %v2061
      %v2110 = vunpack.c.l.b16 %v2062
      %v2111 = vunpack.c.l.b16 %v2063
      %v2112 = vunpack.c.l.b16 %v2064
      %v2113 = vunpack.c.l.b16 %v2065
      %v2114 = vunpack.c.l.b16 %v2066
      %v2115 = vunpack.c.l.b16 %v2067
      %v2116 = vunpack.c.l.b16 %v2068
      %v2117 = vunpack.c.l.b16 %v2069
      %v2118 = vpack.c.b16 %v2103, %v2102
      %v2119 = vpack.c.b16 %v2105, %v2104
      %v2120 = vpack.c.b16 %v2107, %v2106
      %v2121 = vpack.c.b16 %v2109, %v2108
      %v2122 = vpack.c.b16 %v2111, %v2110
      %v2123 = vpack.c.b16 %v2113, %v2112
      %v2124 = vpack.c.b16 %v2115, %v2114
      %v2125 = vpack.c.b16 %v2117, %v2116
      %2134 = vmatprep.subr.bf16.mxu0 0
      %2135 = vmatpush1.bf16.msra.mxu0 %v2125
      %2136 = vmatprep.subr.bf16.mxu0 0
      %2137 = vmatpush1.bf16.msra.mxu0 %v2124
      %2138 = vmatprep.subr.bf16.mxu0 0
      %2139 = vmatpush1.bf16.msra.mxu0 %v2123
      %2140 = vmatprep.subr.bf16.mxu0 0
      %2141 = vmatpush1.bf16.msra.mxu0 %v2122
      %2142 = vmatprep.subr.bf16.mxu0 0
      %2143 = vmatpush1.bf16.msra.mxu0 %v2121
      %2144 = vmatprep.subr.bf16.mxu0 0
      %2145 = vmatpush1.bf16.msra.mxu0 %v2120
      %2146 = vmatprep.subr.bf16.mxu0 0
      %2147 = vmatpush1.bf16.msra.mxu0 %v2119
      %2148 = vmatprep.subr.bf16.mxu0 0
      %2149 = vmatpush1.bf16.msra.mxu0 %v2118
      %2150 = vmatprep.subr.bf16.mxu0 0
      %2151 = vmatpush2.bf16.msra.mxu0 0
      %2152 = vmatprep.subr.bf16.mxu0 0
      %2153 = vmatpush2.bf16.msra.mxu0 0
      %2154 = vmatprep.subr.bf16.mxu0 0
      %2155 = vmatpush2.bf16.msra.mxu0 0
      %2156 = vmatprep.subr.bf16.mxu0 0
      %2157 = vmatpush2.bf16.msra.mxu0 0
      %2158 = vmatprep.subr.bf16.mxu0 0
      %2159 = vmatpush2.bf16.msra.mxu0 0
      %2160 = vmatprep.subr.bf16.mxu0 0
      %2161 = vmatpush2.bf16.msra.mxu0 0
      %2162 = vmatprep.subr.bf16.mxu0 0
      %2163 = vmatpush2.bf16.msra.mxu0 0
      %2164 = vmatprep.subr.bf16.mxu0 0
      %2165 = vmatpush2.bf16.msra.mxu0 0
      %2166 = vmatprep.mubr.bf16.mxu0 0
      %2167 = vmatmul.mubr.bf16.gmra.mxu0 %v2078
      %v2168 = vpop.f32.mrf.mxu0
      %v2169 = vadd.f32 0.0, %v2168
      %v2170 = vpop.f32.mrf.mxu0
      %v2171 = vpop.f32.mrf.mxu0
      %v2172 = vadd.f32 0.0, %v2171
      %v2173 = vpop.f32.mrf.mxu0
      %2174 = vmatprep.mubr.bf16.mxu0 0
      %2175 = vmatmul.mubr.bf16.gmra.mxu0 %v2079
      %v2176 = vpop.f32.mrf.mxu0
      %v2177 = vadd.f32 0.0, %v2176
      %v2178 = vpop.f32.mrf.mxu0
      %v2179 = vpop.f32.mrf.mxu0
      %v2180 = vadd.f32 0.0, %v2179
      %v2181 = vpop.f32.mrf.mxu0
      %2182 = vmatprep.mubr.bf16.mxu0 0
      %2183 = vmatmul.mubr.bf16.gmra.mxu0 %v2080
      %v2184 = vpop.f32.mrf.mxu0
      %v2185 = vadd.f32 0.0, %v2184
      %v2186 = vpop.f32.mrf.mxu0
      %v2187 = vpop.f32.mrf.mxu0
      %v2188 = vadd.f32 0.0, %v2187
      %v2189 = vpop.f32.mrf.mxu0
      %2190 = vmatprep.mubr.bf16.mxu0 0
      %2191 = vmatmul.mubr.bf16.gmra.mxu0 %v2081
      %v2192 = vpop.f32.mrf.mxu0
      %v2193 = vadd.f32 0.0, %v2192
      %v2194 = vpop.f32.mrf.mxu0
      %v2195 = vpop.f32.mrf.mxu0
      %v2196 = vadd.f32 0.0, %v2195
      %v2197 = vpop.f32.mrf.mxu0
      %2198 = vdwg.mxu0
      %v2199 = vadd.f32 %v1917, %v2169
      %v2200 = vadd.f32 %v1918, %v2172
      %v2201 = vadd.f32 %v1919, %v2177
      %v2202 = vadd.f32 %v1920, %v2180
      %v2203 = vadd.f32 %v1921, %v2185
      %v2204 = vadd.f32 %v1922, %v2188
      %v2205 = vadd.f32 %v1923, %v2193
      %v2206 = vadd.f32 %v1924, %v2196
      %v2207 = vpack.c.bf16 %v2200, %v2199
      %v2208 = vpack.c.bf16 %v2202, %v2201
      %v2209 = vpack.c.bf16 %v2204, %v2203
      %v2210 = vpack.c.bf16 %v2206, %v2205
      %v2215 = vunpack.c.l.b16 %v2207
      %v2216 = vunpack.c.h.b16 %v2207
      %v2217 = vunpack.c.l.b16 %v2208
      %v2218 = vunpack.c.h.b16 %v2208
      %v2219 = vunpack.c.l.b16 %v2209
      %v2220 = vunpack.c.h.b16 %v2209
      %v2221 = vunpack.c.l.b16 %v2210
      %v2222 = vunpack.c.h.b16 %v2210
      %v2223 = vpack.c.b16 %v2215, %v2215
      %v2224 = vpack.c.b16 %v2216, %v2216
      %v2225 = vpack.c.b16 %v2217, %v2217
      %v2226 = vpack.c.b16 %v2218, %v2218
      %v2227 = vpack.c.b16 %v2219, %v2219
      %v2228 = vpack.c.b16 %v2220, %v2220
      %v2229 = vpack.c.b16 %v2221, %v2221
      %v2230 = vpack.c.b16 %v2222, %v2222
      %2239 = vst [vmem:[%s310] sm:$0xf] %v2223
      %2240 = vst [vmem:[%s310 + $0x4] sm:$0xf] %v2224
      %2241 = vst [vmem:[%s310 + $0x8] sm:$0xf] %v2225
      %2242 = vst [vmem:[%s310 + $0xc] sm:$0xf] %v2226
      %2243 = vst [vmem:[%s310 + $0x10] sm:$0xf] %v2227
      %2244 = vst [vmem:[%s310 + $0x14] sm:$0xf] %v2228
      %2245 = vst [vmem:[%s310 + $0x18] sm:$0xf] %v2229
      %2246 = vst [vmem:[%s310 + $0x1c] sm:$0xf] %v2230
      %v2247 = vadd.f32 %v2199, %v2200
      %v2248 = vadd.f32 %v2247, %v2201
      %v2249 = vadd.f32 %v2248, %v2202
      %v2250 = vadd.f32 %v2249, %v2203
      %v2251 = vadd.f32 %v2250, %v2204
      %v2252 = vadd.f32 %v2251, %v2205
      %v2253 = vadd.f32 %v2252, %v2206
      %v2254 = vrot.slane %v2253, 4
      %v2255 = vadd.f32 %v2253, %v2254
      %v2256 = vrot.slane %v2255, 2
      %v2257 = vadd.f32 %v2255, %v2256
      %v2258 = vrot.slane %v2257, 1
      %v2259 = vadd.f32 %v2257, %v2258
      %v2260 = vmul.f32 %v2199, %v2199
      %v2261 = vmul.f32 %v2200, %v2200
      %v2262 = vmul.f32 %v2201, %v2201
      %v2263 = vmul.f32 %v2202, %v2202
      %v2264 = vmul.f32 %v2203, %v2203
      %v2265 = vmul.f32 %v2204, %v2204
      %v2266 = vmul.f32 %v2205, %v2205
      %v2267 = vmul.f32 %v2206, %v2206
      %v2268 = vadd.f32 %v2260, %v2261
      %v2269 = vadd.f32 %v2268, %v2262
      %v2270 = vadd.f32 %v2269, %v2263
      %v2271 = vadd.f32 %v2270, %v2264
      %v2272 = vadd.f32 %v2271, %v2265
      %v2273 = vadd.f32 %v2272, %v2266
      %v2274 = vadd.f32 %v2273, %v2267
      %v2275 = vrot.slane %v2274, 4
      %v2276 = vadd.f32 %v2274, %v2275
      %v2277 = vrot.slane %v2276, 2
      %v2278 = vadd.f32 %v2276, %v2277
      %v2279 = vrot.slane %v2278, 1
      %v2280 = vadd.f32 %v2278, %v2279
      %vm2281 = vcmask 1040384
      %v2282 = vsel %vm2281, %v2259, %v2280
      %vm2283 = vcmask 1041408
      %v2284 = vsel %vm2283, %v2282, 0.0
      %2285 = vst [vmem:[%s316] sm:$0xff] %v2284
      %v2286 = vld [vmem:[%s1125] sm:$0xf]
      %v2287 = vld [vmem:[%s1125 + $0x8] sm:$0xf]
      %v2288 = vld [vmem:[%s1125 + $0x10] sm:$0xf]
      %v2289 = vld [vmem:[%s1125 + $0x18] sm:$0xf]
      %v2290 = vld [vmem:[%s1125 + $0x20] sm:$0xf]
      %v2291 = vld [vmem:[%s1125 + $0x28] sm:$0xf]
      %v2292 = vld [vmem:[%s1125 + $0x30] sm:$0xf]
      %v2293 = vld [vmem:[%s1125 + $0x38] sm:$0xf]
      %v2294 = vld [vmem:[%s2] sm:$0xf]
      %v2295 = vld [vmem:[%s2 + $0x4] sm:$0xf]
      %v2296 = vld [vmem:[%s2 + $0x8] sm:$0xf]
      %v2297 = vld [vmem:[%s2 + $0xc] sm:$0xf]
      %v2298 = vld [vmem:[%s2 + $0x10] sm:$0xf]
      %v2299 = vld [vmem:[%s2 + $0x14] sm:$0xf]
      %v2300 = vld [vmem:[%s2 + $0x18] sm:$0xf]
      %v2301 = vld [vmem:[%s2 + $0x1c] sm:$0xf]
      %v2302 = vld [vmem:[%s2 + $0x20] sm:$0xf]
      %v2303 = vld [vmem:[%s2 + $0x24] sm:$0xf]
      %v2304 = vld [vmem:[%s2 + $0x28] sm:$0xf]
      %v2305 = vld [vmem:[%s2 + $0x2c] sm:$0xf]
      %v2306 = vld [vmem:[%s2 + $0x30] sm:$0xf]
      %v2307 = vld [vmem:[%s2 + $0x34] sm:$0xf]
      %v2308 = vld [vmem:[%s2 + $0x38] sm:$0xf]
      %v2309 = vld [vmem:[%s2 + $0x3c] sm:$0xf]
      %v2318 = vunpack.c.l.b16 %v2286
      %v2319 = vunpack.c.l.b16 %v2287
      %v2320 = vunpack.c.l.b16 %v2288
      %v2321 = vunpack.c.l.b16 %v2289
      %v2322 = vunpack.c.l.b16 %v2290
      %v2323 = vunpack.c.l.b16 %v2291
      %v2324 = vunpack.c.l.b16 %v2292
      %v2325 = vunpack.c.l.b16 %v2293
      %v2326 = vpack.c.b16 %v2319, %v2318
      %v2327 = vpack.c.b16 %v2321, %v2320
      %v2328 = vpack.c.b16 %v2323, %v2322
      %v2329 = vpack.c.b16 %v2325, %v2324
      %v2350 = vunpack.c.l.b16 %v2294
      %v2351 = vunpack.c.l.b16 %v2295
      %v2352 = vunpack.c.l.b16 %v2296
      %v2353 = vunpack.c.l.b16 %v2297
      %v2354 = vunpack.c.l.b16 %v2298
      %v2355 = vunpack.c.l.b16 %v2299
      %v2356 = vunpack.c.l.b16 %v2300
      %v2357 = vunpack.c.l.b16 %v2301
      %v2358 = vunpack.c.l.b16 %v2302
      %v2359 = vunpack.c.l.b16 %v2303
      %v2360 = vunpack.c.l.b16 %v2304
      %v2361 = vunpack.c.l.b16 %v2305
      %v2362 = vunpack.c.l.b16 %v2306
      %v2363 = vunpack.c.l.b16 %v2307
      %v2364 = vunpack.c.l.b16 %v2308
      %v2365 = vunpack.c.l.b16 %v2309
      %v2366 = vpack.c.b16 %v2351, %v2350
      %v2367 = vpack.c.b16 %v2353, %v2352
      %v2368 = vpack.c.b16 %v2355, %v2354
      %v2369 = vpack.c.b16 %v2357, %v2356
      %v2370 = vpack.c.b16 %v2359, %v2358
      %v2371 = vpack.c.b16 %v2361, %v2360
      %v2372 = vpack.c.b16 %v2363, %v2362
      %v2373 = vpack.c.b16 %v2365, %v2364
      %2382 = vmatprep.subr.bf16.mxu0 0
      %2383 = vmatpush1.bf16.msra.mxu0 %v2373
      %2384 = vmatprep.subr.bf16.mxu0 0
      %2385 = vmatpush1.bf16.msra.mxu0 %v2372
      %2386 = vmatprep.subr.bf16.mxu0 0
      %2387 = vmatpush1.bf16.msra.mxu0 %v2371
      %2388 = vmatprep.subr.bf16.mxu0 0
      %2389 = vmatpush1.bf16.msra.mxu0 %v2370
      %2390 = vmatprep.subr.bf16.mxu0 0
      %2391 = vmatpush1.bf16.msra.mxu0 %v2369
      %2392 = vmatprep.subr.bf16.mxu0 0
      %2393 = vmatpush1.bf16.msra.mxu0 %v2368
      %2394 = vmatprep.subr.bf16.mxu0 0
      %2395 = vmatpush1.bf16.msra.mxu0 %v2367
      %2396 = vmatprep.subr.bf16.mxu0 0
      %2397 = vmatpush1.bf16.msra.mxu0 %v2366
      %2398 = vmatprep.subr.bf16.mxu0 0
      %2399 = vmatpush2.bf16.msra.mxu0 0
      %2400 = vmatprep.subr.bf16.mxu0 0
      %2401 = vmatpush2.bf16.msra.mxu0 0
      %2402 = vmatprep.subr.bf16.mxu0 0
      %2403 = vmatpush2.bf16.msra.mxu0 0
      %2404 = vmatprep.subr.bf16.mxu0 0
      %2405 = vmatpush2.bf16.msra.mxu0 0
      %2406 = vmatprep.subr.bf16.mxu0 0
      %2407 = vmatpush2.bf16.msra.mxu0 0
      %2408 = vmatprep.subr.bf16.mxu0 0
      %2409 = vmatpush2.bf16.msra.mxu0 0
      %2410 = vmatprep.subr.bf16.mxu0 0
      %2411 = vmatpush2.bf16.msra.mxu0 0
      %2412 = vmatprep.subr.bf16.mxu0 0
      %2413 = vmatpush2.bf16.msra.mxu0 0
      %2414 = vmatprep.mubr.bf16.mxu0 0
      %2415 = vmatmul.mubr.bf16.gmra.mxu0 %v2326
      %v2416 = vpop.f32.mrf.mxu0
      %v2417 = vadd.f32 0.0, %v2416
      %v2418 = vpop.f32.mrf.mxu0
      %v2419 = vpop.f32.mrf.mxu0
      %v2420 = vadd.f32 0.0, %v2419
      %v2421 = vpop.f32.mrf.mxu0
      %2422 = vmatprep.mubr.bf16.mxu0 0
      %2423 = vmatmul.mubr.bf16.gmra.mxu0 %v2327
      %v2424 = vpop.f32.mrf.mxu0
      %v2425 = vadd.f32 0.0, %v2424
      %v2426 = vpop.f32.mrf.mxu0
      %v2427 = vpop.f32.mrf.mxu0
      %v2428 = vadd.f32 0.0, %v2427
      %v2429 = vpop.f32.mrf.mxu0
      %2430 = vmatprep.mubr.bf16.mxu0 0
      %2431 = vmatmul.mubr.bf16.gmra.mxu0 %v2328
      %v2432 = vpop.f32.mrf.mxu0
      %v2433 = vadd.f32 0.0, %v2432
      %v2434 = vpop.f32.mrf.mxu0
      %v2435 = vpop.f32.mrf.mxu0
      %v2436 = vadd.f32 0.0, %v2435
      %v2437 = vpop.f32.mrf.mxu0
      %2438 = vmatprep.mubr.bf16.mxu0 0
      %2439 = vmatmul.mubr.bf16.gmra.mxu0 %v2329
      %v2440 = vpop.f32.mrf.mxu0
      %v2441 = vadd.f32 0.0, %v2440
      %v2442 = vpop.f32.mrf.mxu0
      %v2443 = vpop.f32.mrf.mxu0
      %v2444 = vadd.f32 0.0, %v2443
      %v2445 = vpop.f32.mrf.mxu0
      %2446 = vdwg.mxu0
      %v2447 = vpack.c.bf16 %v2420, %v2417
      %v2448 = vpack.c.bf16 %v2428, %v2425
      %v2449 = vpack.c.bf16 %v2436, %v2433
      %v2450 = vpack.c.bf16 %v2444, %v2441
      %v2455 = vunpack.c.l.b16 %v2447
      %v2456 = vunpack.c.h.b16 %v2447
      %v2457 = vunpack.c.l.b16 %v2448
      %v2458 = vunpack.c.h.b16 %v2448
      %v2459 = vunpack.c.l.b16 %v2449
      %v2460 = vunpack.c.h.b16 %v2449
      %v2461 = vunpack.c.l.b16 %v2450
      %v2462 = vunpack.c.h.b16 %v2450
      %v2463 = vpack.c.b16 %v2455, %v2455
      %v2464 = vpack.c.b16 %v2456, %v2456
      %v2465 = vpack.c.b16 %v2457, %v2457
      %v2466 = vpack.c.b16 %v2458, %v2458
      %v2467 = vpack.c.b16 %v2459, %v2459
      %v2468 = vpack.c.b16 %v2460, %v2460
      %v2469 = vpack.c.b16 %v2461, %v2461
      %v2470 = vpack.c.b16 %v2462, %v2462
      %2479 = vst [vmem:[%s326] sm:$0xf] %v2463
      %2480 = vst [vmem:[%s326 + $0x4] sm:$0xf] %v2464
      %2481 = vst [vmem:[%s326 + $0x8] sm:$0xf] %v2465
      %2482 = vst [vmem:[%s326 + $0xc] sm:$0xf] %v2466
      %2483 = vst [vmem:[%s326 + $0x10] sm:$0xf] %v2467
      %2484 = vst [vmem:[%s326 + $0x14] sm:$0xf] %v2468
      %2485 = vst [vmem:[%s326 + $0x18] sm:$0xf] %v2469
      %2486 = vst [vmem:[%s326 + $0x1c] sm:$0xf] %v2470
      %v2487 = vadd.f32 %v2417, %v2420
      %v2488 = vadd.f32 %v2487, %v2425
      %v2489 = vadd.f32 %v2488, %v2428
      %v2490 = vadd.f32 %v2489, %v2433
      %v2491 = vadd.f32 %v2490, %v2436
      %v2492 = vadd.f32 %v2491, %v2441
      %v2493 = vadd.f32 %v2492, %v2444
      %v2494 = vrot.slane %v2493, 4
      %v2495 = vadd.f32 %v2493, %v2494
      %v2496 = vrot.slane %v2495, 2
      %v2497 = vadd.f32 %v2495, %v2496
      %v2498 = vrot.slane %v2497, 1
      %v2499 = vadd.f32 %v2497, %v2498
      %v2500 = vmul.f32 %v2417, %v2417
      %v2501 = vmul.f32 %v2420, %v2420
      %v2502 = vmul.f32 %v2425, %v2425
      %v2503 = vmul.f32 %v2428, %v2428
      %v2504 = vmul.f32 %v2433, %v2433
      %v2505 = vmul.f32 %v2436, %v2436
      %v2506 = vmul.f32 %v2441, %v2441
      %v2507 = vmul.f32 %v2444, %v2444
      %v2508 = vadd.f32 %v2500, %v2501
      %v2509 = vadd.f32 %v2508, %v2502
      %v2510 = vadd.f32 %v2509, %v2503
      %v2511 = vadd.f32 %v2510, %v2504
      %v2512 = vadd.f32 %v2511, %v2505
      %v2513 = vadd.f32 %v2512, %v2506
      %v2514 = vadd.f32 %v2513, %v2507
      %v2515 = vrot.slane %v2514, 4
      %v2516 = vadd.f32 %v2514, %v2515
      %v2517 = vrot.slane %v2516, 2
      %v2518 = vadd.f32 %v2516, %v2517
      %v2519 = vrot.slane %v2518, 1
      %v2520 = vadd.f32 %v2518, %v2519
      %v2521 = vsel %vm2281, %v2499, %v2520
      %v2522 = vsel %vm2283, %v2521, 0.0
      %2523 = vst [vmem:[%s332] sm:$0xff] %v2522
      %s2524 = smul.u32 8, %s23
      %p2525 = scmp.lt.s32.totalorder %s22, 1
      %s2526 = scalar_select %p2525, %s22, 1
      %p2527 = scmp.lt.s32.totalorder %s2524, 7
      %s2528 = scalar_select %p2527, %s2524, 7
      %s2529 = smul.addr %s2526, 8
      %s2530 = sadd.s32 %s2528, %s2529
      %s2531 = smul.addr %s2530, 4
      %s2532 = scalar_lea.vmem %s3, %s2531
      %s2533 = sadd.s32 %s22, %s23
      %p2534 = scmp.lt.s32.totalorder %s2533, 1
      %s2535 = scalar_select %p2534, %s2533, 1
      %s2536 = smul.addr %s2535, 8
      %s2537 = scalar_lea.vmem %s4, %s2536
      %s2538 = smul.u32 8, %s23
      %p2539 = scmp.lt.s32.totalorder %s22, 1
      %s2540 = scalar_select %p2539, %s22, 1
      %p2541 = scmp.lt.s32.totalorder %s2538, 7
      %s2542 = scalar_select %p2541, %s2538, 7
      %s2543 = smul.addr %s2540, 8
      %s2544 = sadd.s32 %s2542, %s2543
      %s2545 = smul.addr %s2544, 4
      %s2546 = scalar_lea.vmem %s5, %s2545
      %s2547 = sadd.s32 %s22, %s23
      %p2548 = scmp.lt.s32.totalorder %s2547, 1
      %s2549 = scalar_select %p2548, %s2547, 1
      %s2550 = smul.addr %s2549, 8
      %s2551 = scalar_lea.vmem %s6, %s2550
      // Predicated region
      $region33: #{basic_block_forward.4} parent=31 // pred_check
        %p2552 = pneg %p118
      $region34: #{basic_block_forward.4} parent=31 // pred_check_branch
        %2554 = sbr.rel (%p2552) target = $region36
      $region35: #{basic_block_forward.4} parent=31 // pred_region
        %s2555 = smul.u32 8, %s23
      $region36: #{basic_block_forward.4} parent=31 // pred_fallthru
        _
      // Predicated region
      $region37: #{basic_block_forward.4} parent=31 // pred_check
        %p2556 = pneg %p146
      $region38: #{basic_block_forward.4} parent=31 // pred_check_branch
        %2558 = sbr.rel (%p2556) target = $region40
      $region39: #{basic_block_forward.4} parent=31 // pred_region
        %s2559 = sadd.s32 %s22, %s23
      $region40: #{basic_block_forward.4} parent=31 // pred_fallthru
        _
      // Predicated region
      $region41: #{basic_block_forward.4} parent=31 // pred_check
        %p2560 = pneg %p174
      $region42: #{basic_block_forward.4} parent=31 // pred_check_branch
        %2562 = sbr.rel (%p2560) target = $region44
      $region43: #{basic_block_forward.4} parent=31 // pred_region
        %s2563 = smul.u32 8, %s23
      $region44: #{basic_block_forward.4} parent=31 // pred_fallthru
        _
      // Predicated region
      $region45: #{basic_block_forward.4} parent=31 // pred_check
        %p2564 = pneg %p202
      $region46: #{basic_block_forward.4} parent=31 // pred_check_branch
        %2566 = sbr.rel (%p2564) target = $region48
      $region47: #{basic_block_forward.4} parent=31 // pred_region
        %s2567 = sadd.s32 %s22, %s23
      $region48: #{basic_block_forward.4} parent=31 // pred_fallthru
        _
    $region32: #{basic_block_forward.4} parent=5 // pred_fallthru
      _
    %p2568 = scmp.le.s32.totalorder 2, %s13
    // Predicated region
    $region49: #{basic_block_forward.4} parent=5 // pred_check
      %p2569 = pneg %p2568
    $region50: #{basic_block_forward.4} parent=5 // pred_check_branch
      %2571 = sbr.rel (%p2569) target = $region52
    $region51: #{basic_block_forward.4} parent=5 // pred_region
      %s2572 = ssub.s32 %s13, 2
      // Predicated region
      $region53: #{basic_block_forward.4} parent=51 // pred_check
        %p2573 = pneg %p124
      $region54: #{basic_block_forward.4} parent=51 // pred_check_branch
        %2575 = sbr.rel (%p2573) target = $region56
      $region55: #{basic_block_forward.4} parent=51 // pred_region
        %s2576 = smul.u32 8, %s25
        %p2577 = scmp.lt.s32.totalorder %s24, 1
        %s2578 = scalar_select %p2577, %s24, 1
        %p2579 = scmp.lt.s32.totalorder %s2576, 7
        %s2580 = scalar_select %p2579, %s2576, 7
        %s2581 = smul.addr %s2578, 8
        %s2582 = sadd.s32 %s2580, %s2581
        %s2583 = smul.addr %s2582, 4
        %s2584 = scalar_lea.vmem %s3, %s2583
      $region56: #{basic_block_forward.4} parent=51 // pred_fallthru
        _
      // Predicated region
      $region57: #{basic_block_forward.4} parent=51 // pred_check
        %p2585 = pneg %p152
      $region58: #{basic_block_forward.4} parent=51 // pred_check_branch
        %2587 = sbr.rel (%p2585) target = $region60
      $region59: #{basic_block_forward.4} parent=51 // pred_region
        %s2588 = sadd.s32 %s24, %s25
        %p2589 = scmp.lt.s32.totalorder %s2588, 1
        %s2590 = scalar_select %p2589, %s2588, 1
        %s2591 = smul.addr %s2590, 8
        %s2592 = scalar_lea.vmem %s4, %s2591
      $region60: #{basic_block_forward.4} parent=51 // pred_fallthru
        _
      // Predicated region
      $region61: #{basic_block_forward.4} parent=51 // pred_check
        %p2593 = pneg %p180
      $region62: #{basic_block_forward.4} parent=51 // pred_check_branch
        %2595 = sbr.rel (%p2593) target = $region64
      $region63: #{basic_block_forward.4} parent=51 // pred_region
        %s2596 = smul.u32 8, %s25
        %p2597 = scmp.lt.s32.totalorder %s24, 1
        %s2598 = scalar_select %p2597, %s24, 1
        %p2599 = scmp.lt.s32.totalorder %s2596, 7
        %s2600 = scalar_select %p2599, %s2596, 7
        %s2601 = smul.addr %s2598, 8
        %s2602 = sadd.s32 %s2600, %s2601
        %s2603 = smul.addr %s2602, 4
        %s2604 = scalar_lea.vmem %s5, %s2603
      $region64: #{basic_block_forward.4} parent=51 // pred_fallthru
        _
      // Predicated region
      $region65: #{basic_block_forward.4} parent=51 // pred_check
        %p2605 = pneg %p208
      $region66: #{basic_block_forward.4} parent=51 // pred_check_branch
        %2607 = sbr.rel (%p2605) target = $region68
      $region67: #{basic_block_forward.4} parent=51 // pred_region
        %s2608 = sadd.s32 %s24, %s25
        %p2609 = scmp.lt.s32.totalorder %s2608, 1
        %s2610 = scalar_select %p2609, %s2608, 1
        %s2611 = smul.addr %s2610, 8
        %s2612 = scalar_lea.vmem %s6, %s2611
      $region68: #{basic_block_forward.4} parent=51 // pred_fallthru
        _
    $region52: #{basic_block_forward.4} parent=5 // pred_fallthru
      _
  $region6: #{basic_block_forward.4} parent=0 // loop_footer
    %s17 = sadd.s32 1, %s13
  $region7: #{basic_block_forward.4} parent=0 // loop_footer_branch
    %12 = sbr.rel target = $region3
  $region8: #{basic_block_forward.4} parent=0 // loop_exit
    _

// kernel: basic_block_forward.7
$region0: #{basic_block_forward.7}
  #allocation0 [shape = 'u32[]', space=smem, size = 0x4, offset = 0x4, fixed_abs, tag = 'smem constant byte address 0x4 - core index']
  #allocation1 [shape = 'u32[144,128]{1,0:T(1,128)}', space=vmem, size = 0x12000, scoped, tag = 'internal scratch']
  %s0 = inlined_call_operand.vmem [shape: bf16[128,128], index: 0, kind: input, shape index: {}]
  %s1 = inlined_call_operand.vmem [shape: bf16[128,128], index: 1, kind: input, shape index: {}]
  %s2 = inlined_call_operand.vmem [shape: f32[1,128], index: 2, kind: input, shape index: {}]
  %s3 = inlined_call_operand.vmem [shape: f32[1,128], index: 3, kind: input, shape index: {}]
  %s4 = inlined_call_operand.vmem [shape: f32[1,128], index: 4, kind: input, shape index: {}]
  %s5 = inlined_call_operand.vmem [shape: f32[1,128], index: 5, kind: input, shape index: {}]
  %s6 = inlined_call_operand.vmem [shape: bf16[128,128], index: 6, kind: output, shape index: {}]
  %s7 = sld [smem:[#allocation0]]
  $region34: #{basic_block_forward.7} parent=0
    _
  %s9 = ssub.s32 1, %s7
  %s10 = scalar_select 0, %s9, %s7
  // Predicated region
  $region2: #{basic_block_forward.7} parent=0 // pred_check
    _
  $region3: #{basic_block_forward.7} parent=0 // pred_check_branch
    %12 = sbr.rel (0) target = $region5
  $region4: #{basic_block_forward.7} parent=0 // pred_region
    _
  $region5: #{basic_block_forward.7} parent=0 // pred_fallthru
    _
  // Predicated region
  $region6: #{basic_block_forward.7} parent=0 // pred_check
    _
  $region7: #{basic_block_forward.7} parent=0 // pred_check_branch
    %14 = sbr.rel (0) target = $region9
  $region8: #{basic_block_forward.7} parent=0 // pred_region
    _
  $region9: #{basic_block_forward.7} parent=0 // pred_fallthru
    _
  // Predicated region
  $region10: #{basic_block_forward.7} parent=0 // pred_check
    _
  $region11: #{basic_block_forward.7} parent=0 // pred_check_branch
    %16 = sbr.rel (0) target = $region13
  $region12: #{basic_block_forward.7} parent=0 // pred_region
    _
  $region13: #{basic_block_forward.7} parent=0 // pred_fallthru
    _
  // Predicated region
  $region14: #{basic_block_forward.7} parent=0 // pred_check
    _
  $region15: #{basic_block_forward.7} parent=0 // pred_check_branch
    %18 = sbr.rel (0) target = $region17
  $region16: #{basic_block_forward.7} parent=0 // pred_region
    _
  $region17: #{basic_block_forward.7} parent=0 // pred_fallthru
    _
  // Predicated region
  $region18: #{basic_block_forward.7} parent=0 // pred_check
    _
  $region19: #{basic_block_forward.7} parent=0 // pred_check_branch
    %20 = sbr.rel (0) target = $region21
  $region20: #{basic_block_forward.7} parent=0 // pred_region
    _
  $region21: #{basic_block_forward.7} parent=0 // pred_fallthru
    _
  // Predicated region
  $region22: #{basic_block_forward.7} parent=0 // pred_check
    _
  $region23: #{basic_block_forward.7} parent=0 // pred_check_branch
    %22 = sbr.rel (0) target = $region25
  $region24: #{basic_block_forward.7} parent=0 // pred_region
    _
  $region25: #{basic_block_forward.7} parent=0 // pred_fallthru
    _
  %v23 = vld [vmem:[%s0] sm:$0xf]
  %v24 = vld [vmem:[%s0 + $0x4] sm:$0xf]
  %v25 = vld [vmem:[%s0 + $0x8] sm:$0xf]
  %v26 = vld [vmem:[%s0 + $0xc] sm:$0xf]
  %v27 = vld [vmem:[%s0 + $0x10] sm:$0xf]
  %v28 = vld [vmem:[%s0 + $0x14] sm:$0xf]
  %v29 = vld [vmem:[%s0 + $0x18] sm:$0xf]
  %v30 = vld [vmem:[%s0 + $0x1c] sm:$0xf]
  %v31 = vld [vmem:[%s0 + $0x20] sm:$0xf]
  %v32 = vld [vmem:[%s0 + $0x24] sm:$0xf]
  %v33 = vld [vmem:[%s0 + $0x28] sm:$0xf]
  %v34 = vld [vmem:[%s0 + $0x2c] sm:$0xf]
  %v35 = vld [vmem:[%s0 + $0x30] sm:$0xf]
  %v36 = vld [vmem:[%s0 + $0x34] sm:$0xf]
  %v37 = vld [vmem:[%s0 + $0x38] sm:$0xf]
  %v38 = vld [vmem:[%s0 + $0x3c] sm:$0xf]
  %v39 = vunpack.c.l.bf16 %v23
  %v40 = vunpack.c.l.bf16 %v24
  %v41 = vunpack.c.l.bf16 %v25
  %v42 = vunpack.c.l.bf16 %v26
  %v43 = vunpack.c.l.bf16 %v27
  %v44 = vunpack.c.l.bf16 %v28
  %v45 = vunpack.c.l.bf16 %v29
  %v46 = vunpack.c.l.bf16 %v30
  %v47 = vunpack.c.l.bf16 %v31
  %v48 = vunpack.c.l.bf16 %v32
  %v49 = vunpack.c.l.bf16 %v33
  %v50 = vunpack.c.l.bf16 %v34
  %v51 = vunpack.c.l.bf16 %v35
  %v52 = vunpack.c.l.bf16 %v36
  %v53 = vunpack.c.l.bf16 %v37
  %v54 = vunpack.c.l.bf16 %v38
  %v55 = vld [vmem:[%s2] sm:$0x1]
  %v57 = vlaneseq
  %v58 = vshrl.u32 %v57, 7
  %v59 = vsub.s32 0, %v58
  %v60 = vrot.slane %v55, %v59
  %v62 = vmul.f32 %v39, %v60
  %v63 = vmul.f32 %v40, %v60
  %v64 = vmul.f32 %v41, %v60
  %v65 = vmul.f32 %v42, %v60
  %v66 = vmul.f32 %v43, %v60
  %v67 = vmul.f32 %v44, %v60
  %v68 = vmul.f32 %v45, %v60
  %v69 = vmul.f32 %v46, %v60
  %v70 = vmul.f32 %v47, %v60
  %v71 = vmul.f32 %v48, %v60
  %v72 = vmul.f32 %v49, %v60
  %v73 = vmul.f32 %v50, %v60
  %v74 = vmul.f32 %v51, %v60
  %v75 = vmul.f32 %v52, %v60
  %v76 = vmul.f32 %v53, %v60
  %v77 = vmul.f32 %v54, %v60
  %v78 = vld [vmem:[%s3] sm:$0x1]
  %v80 = vlaneseq
  %v81 = vshrl.u32 %v80, 7
  %v82 = vsub.s32 0, %v81
  %v83 = vrot.slane %v78, %v82
  %v85 = vadd.f32 %v62, %v83
  %v86 = vadd.f32 %v63, %v83
  %v87 = vadd.f32 %v64, %v83
  %v88 = vadd.f32 %v65, %v83
  %v89 = vadd.f32 %v66, %v83
  %v90 = vadd.f32 %v67, %v83
  %v91 = vadd.f32 %v68, %v83
  %v92 = vadd.f32 %v69, %v83
  %v93 = vadd.f32 %v70, %v83
  %v94 = vadd.f32 %v71, %v83
  %v95 = vadd.f32 %v72, %v83
  %v96 = vadd.f32 %v73, %v83
  %v97 = vadd.f32 %v74, %v83
  %v98 = vadd.f32 %v75, %v83
  %v99 = vadd.f32 %v76, %v83
  %v100 = vadd.f32 %v77, %v83
  %v101 = vld [vmem:[%s1] sm:$0xf]
  %v102 = vld [vmem:[%s1 + $0x4] sm:$0xf]
  %v103 = vld [vmem:[%s1 + $0x8] sm:$0xf]
  %v104 = vld [vmem:[%s1 + $0xc] sm:$0xf]
  %v105 = vld [vmem:[%s1 + $0x10] sm:$0xf]
  %v106 = vld [vmem:[%s1 + $0x14] sm:$0xf]
  %v107 = vld [vmem:[%s1 + $0x18] sm:$0xf]
  %v108 = vld [vmem:[%s1 + $0x1c] sm:$0xf]
  %v109 = vld [vmem:[%s1 + $0x20] sm:$0xf]
  %v110 = vld [vmem:[%s1 + $0x24] sm:$0xf]
  %v111 = vld [vmem:[%s1 + $0x28] sm:$0xf]
  %v112 = vld [vmem:[%s1 + $0x2c] sm:$0xf]
  %v113 = vld [vmem:[%s1 + $0x30] sm:$0xf]
  %v114 = vld [vmem:[%s1 + $0x34] sm:$0xf]
  %v115 = vld [vmem:[%s1 + $0x38] sm:$0xf]
  %v116 = vld [vmem:[%s1 + $0x3c] sm:$0xf]
  %v117 = vunpack.c.l.bf16 %v101
  %v118 = vunpack.c.l.bf16 %v102
  %v119 = vunpack.c.l.bf16 %v103
  %v120 = vunpack.c.l.bf16 %v104
  %v121 = vunpack.c.l.bf16 %v105
  %v122 = vunpack.c.l.bf16 %v106
  %v123 = vunpack.c.l.bf16 %v107
  %v124 = vunpack.c.l.bf16 %v108
  %v125 = vunpack.c.l.bf16 %v109
  %v126 = vunpack.c.l.bf16 %v110
  %v127 = vunpack.c.l.bf16 %v111
  %v128 = vunpack.c.l.bf16 %v112
  %v129 = vunpack.c.l.bf16 %v113
  %v130 = vunpack.c.l.bf16 %v114
  %v131 = vunpack.c.l.bf16 %v115
  %v132 = vunpack.c.l.bf16 %v116
  %v133 = vld [vmem:[%s4] sm:$0x1]
  %v135 = vlaneseq
  %v136 = vshrl.u32 %v135, 7
  %v137 = vsub.s32 0, %v136
  %v138 = vrot.slane %v133, %v137
  %v140 = vmul.f32 %v117, %v138
  %v141 = vmul.f32 %v118, %v138
  %v142 = vmul.f32 %v119, %v138
  %v143 = vmul.f32 %v120, %v138
  %v144 = vmul.f32 %v121, %v138
  %v145 = vmul.f32 %v122, %v138
  %v146 = vmul.f32 %v123, %v138
  %v147 = vmul.f32 %v124, %v138
  %v148 = vmul.f32 %v125, %v138
  %v149 = vmul.f32 %v126, %v138
  %v150 = vmul.f32 %v127, %v138
  %v151 = vmul.f32 %v128, %v138
  %v152 = vmul.f32 %v129, %v138
  %v153 = vmul.f32 %v130, %v138
  %v154 = vmul.f32 %v131, %v138
  %v155 = vmul.f32 %v132, %v138
  %v156 = vld [vmem:[%s5] sm:$0x1]
  %v158 = vlaneseq
  %v159 = vshrl.u32 %v158, 7
  %v160 = vsub.s32 0, %v159
  %v161 = vrot.slane %v156, %v160
  %v163 = vadd.f32 %v140, %v161
  %v164 = vadd.f32 %v141, %v161
  %v165 = vadd.f32 %v142, %v161
  %v166 = vadd.f32 %v143, %v161
  %v167 = vadd.f32 %v144, %v161
  %v168 = vadd.f32 %v145, %v161
  %v169 = vadd.f32 %v146, %v161
  %v170 = vadd.f32 %v147, %v161
  %v171 = vadd.f32 %v148, %v161
  %v172 = vadd.f32 %v149, %v161
  %v173 = vadd.f32 %v150, %v161
  %v174 = vadd.f32 %v151, %v161
  %v175 = vadd.f32 %v152, %v161
  %v176 = vadd.f32 %v153, %v161
  %v177 = vadd.f32 %v154, %v161
  %v178 = vadd.f32 %v155, %v161
  %v179 = vadd.f32 %v85, %v163
  %v180 = vadd.f32 %v86, %v164
  %v181 = vadd.f32 %v87, %v165
  %v182 = vadd.f32 %v88, %v166
  %v183 = vadd.f32 %v89, %v167
  %v184 = vadd.f32 %v90, %v168
  %v185 = vadd.f32 %v91, %v169
  %v186 = vadd.f32 %v92, %v170
  %v187 = vadd.f32 %v93, %v171
  %v188 = vadd.f32 %v94, %v172
  %v189 = vadd.f32 %v95, %v173
  %v190 = vadd.f32 %v96, %v174
  %v191 = vadd.f32 %v97, %v175
  %v192 = vadd.f32 %v98, %v176
  %v193 = vadd.f32 %v99, %v177
  %v194 = vadd.f32 %v100, %v178
  %v195 = vmax.f32 %v179, 0.0
  %v196 = vmax.f32 %v180, 0.0
  %v197 = vmax.f32 %v181, 0.0
  %v198 = vmax.f32 %v182, 0.0
  %v199 = vmax.f32 %v183, 0.0
  %v200 = vmax.f32 %v184, 0.0
  %v201 = vmax.f32 %v185, 0.0
  %v202 = vmax.f32 %v186, 0.0
  %v203 = vmax.f32 %v187, 0.0
  %v204 = vmax.f32 %v188, 0.0
  %v205 = vmax.f32 %v189, 0.0
  %v206 = vmax.f32 %v190, 0.0
  %v207 = vmax.f32 %v191, 0.0
  %v208 = vmax.f32 %v192, 0.0
  %v209 = vmax.f32 %v193, 0.0
  %v210 = vmax.f32 %v194, 0.0
  %v211 = vpack.c.bf16 %v196, %v195
  %v212 = vpack.c.bf16 %v198, %v197
  %v213 = vpack.c.bf16 %v200, %v199
  %v214 = vpack.c.bf16 %v202, %v201
  %v215 = vpack.c.bf16 %v204, %v203
  %v216 = vpack.c.bf16 %v206, %v205
  %v217 = vpack.c.bf16 %v208, %v207
  %v218 = vpack.c.bf16 %v210, %v209
  %v227 = vunpack.c.l.b16 %v211
  %v228 = vunpack.c.h.b16 %v211
  %v229 = vunpack.c.l.b16 %v212
  %v230 = vunpack.c.h.b16 %v212
  %v231 = vunpack.c.l.b16 %v213
  %v232 = vunpack.c.h.b16 %v213
  %v233 = vunpack.c.l.b16 %v214
  %v234 = vunpack.c.h.b16 %v214
  %v235 = vunpack.c.l.b16 %v215
  %v236 = vunpack.c.h.b16 %v215
  %v237 = vunpack.c.l.b16 %v216
  %v238 = vunpack.c.h.b16 %v216
  %v239 = vunpack.c.l.b16 %v217
  %v240 = vunpack.c.h.b16 %v217
  %v241 = vunpack.c.l.b16 %v218
  %v242 = vunpack.c.h.b16 %v218
  %v243 = vpack.c.b16 %v227, %v227
  %v244 = vpack.c.b16 %v228, %v228
  %v245 = vpack.c.b16 %v229, %v229
  %v246 = vpack.c.b16 %v230, %v230
  %v247 = vpack.c.b16 %v231, %v231
  %v248 = vpack.c.b16 %v232, %v232
  %v249 = vpack.c.b16 %v233, %v233
  %v250 = vpack.c.b16 %v234, %v234
  %v251 = vpack.c.b16 %v235, %v235
  %v252 = vpack.c.b16 %v236, %v236
  %v253 = vpack.c.b16 %v237, %v237
  %v254 = vpack.c.b16 %v238, %v238
  %v255 = vpack.c.b16 %v239, %v239
  %v256 = vpack.c.b16 %v240, %v240
  %v257 = vpack.c.b16 %v241, %v241
  %v258 = vpack.c.b16 %v242, %v242
  %275 = vst [vmem:[%s6] sm:$0xf] %v243
  %276 = vst [vmem:[%s6 + $0x4] sm:$0xf] %v244
  %277 = vst [vmem:[%s6 + $0x8] sm:$0xf] %v245
  %278 = vst [vmem:[%s6 + $0xc] sm:$0xf] %v246
  %279 = vst [vmem:[%s6 + $0x10] sm:$0xf] %v247
  %280 = vst [vmem:[%s6 + $0x14] sm:$0xf] %v248
  %281 = vst [vmem:[%s6 + $0x18] sm:$0xf] %v249
  %282 = vst [vmem:[%s6 + $0x1c] sm:$0xf] %v250
  %283 = vst [vmem:[%s6 + $0x20] sm:$0xf] %v251
  %284 = vst [vmem:[%s6 + $0x24] sm:$0xf] %v252
  %285 = vst [vmem:[%s6 + $0x28] sm:$0xf] %v253
  %286 = vst [vmem:[%s6 + $0x2c] sm:$0xf] %v254
  %287 = vst [vmem:[%s6 + $0x30] sm:$0xf] %v255
  %288 = vst [vmem:[%s6 + $0x34] sm:$0xf] %v256
  %289 = vst [vmem:[%s6 + $0x38] sm:$0xf] %v257
  %290 = vst [vmem:[%s6 + $0x3c] sm:$0xf] %v258
  // Predicated region
  $region26: #{basic_block_forward.7} parent=0 // pred_check
    _
  $region27: #{basic_block_forward.7} parent=0 // pred_check_branch
    %292 = sbr.rel (0) target = $region29
  $region28: #{basic_block_forward.7} parent=0 // pred_region
    _
  $region29: #{basic_block_forward.7} parent=0 // pred_fallthru
    _
  // Predicated region
  $region30: #{basic_block_forward.7} parent=0 // pred_check
    _
  $region31: #{basic_block_forward.7} parent=0 // pred_check_branch
    %294 = sbr.rel (0) target = $region33
  $region32: #{basic_block_forward.7} parent=0 // pred_region
    _
  $region33: #{basic_block_forward.7} parent=0 // pred_fallthru
    _

// kernel: basic_block_forward.6
$region0: #{basic_block_forward.6}
  #allocation0 [shape = 'u32[]', space=smem, size = 0x4, offset = 0x4, fixed_abs, tag = 'smem constant byte address 0x4 - core index']
  #allocation1 [shape = 'u32[144,128]{1,0:T(1,128)}', space=vmem, size = 0x12000, scoped, tag = 'internal scratch']
  %s0 = inlined_call_operand.vmem [shape: bf16[2,10,10,128], index: 0, kind: input, shape index: {}]
  %s1 = inlined_call_operand.vmem [shape: bf16[9,128,128], index: 1, kind: input, shape index: {}]
  %s2 = inlined_call_operand.vmem [shape: bf16[2,64,128], index: 2, kind: output, shape index: {0}]
  %s3 = inlined_call_operand.vmem [shape: f32[2,8,128], index: 3, kind: output, shape index: {1}]
  %4 = xla_tuple %s2, %s3
  %s5 = sld [smem:[#allocation0]]
  $region49: #{basic_block_forward.6} parent=0
    _
  %s7 = ssub.s32 1, %s5
  %s8 = scalar_select 0, %s7, %s5
  loop: start=0, step=1, limit=4
  $region2: #{basic_block_forward.6} parent=0 // loop_pre_header
    _
  $region3: #{basic_block_forward.6} parent=0 // loop_header
    %s10 = sphi 0, %s14
    %p11 = scmp.ge.s32.totalorder %s10, 4
    %s17 = sphi 0, %s29
    %s18 = sphi 0, %s25
    %s19 = sphi 0, %s17
    %s20 = sphi 0, %s18
    %s21 = sphi 0, %s19
    %s22 = sphi 0, %s20
    %s32 = sphi 0, %s34
    %s35 = sphi 0, %s32
    %s36 = sphi 0, %s35
    %s52 = sphi 0, %s36
    %s56 = sphi 0, %s56
    %s58 = sphi 0, %s56
    %s59 = sphi 0, %s58
    %s73 = sphi 0, %s59
    %s81 = sphi 0, %s83
    %s84 = sphi 0, %s81
    %s85 = sphi 0, %s84
    %s101 = sphi 0, %s85
    %s109 = sphi 0, %s111
    %s112 = sphi 0, %s109
    %s113 = sphi 0, %s112
    %s129 = sphi 0, %s113
  $region4: #{basic_block_forward.6} parent=0 // loop_header_branch
    %13 = sbr.rel (%p11) target = $region8
  $region5: #{basic_block_forward.6} parent=0 // loop_body
    %s15 = ssub.s32 %s10, 1
    %s16 = ssub.s32 %s10, 2
    %s23 = sadd.s32 1, %s18
    %p24 = scmp.ge.s32.totalorder %s23, 1
    %s25 = scalar_select %p24, 0, %s23
    %s26 = sadd.s32 1, %s17
    %s27 = scalar_select %p24, %s26, %s17
    %p28 = scmp.ge.s32.totalorder %s27, 2
    %s29 = scalar_select %p28, 0, %s27
    %s30 = ssub.s32 %s17, %s29
    %p31 = scmp.eq.s32.totalorder %s30, 0
    %s33 = sadd.s32 %s32, 1
    %s34 = scalar_select %p31, %s32, %s33
    %p37 = pneg %p31
    %p38 = scmp.eq.s32.totalorder %s10, 1
    %p39 = por %p37, %p38
    %p40 = scmp.ne.s32.totalorder %s32, %s35
    %p41 = scmp.eq.s32.totalorder %s10, 0
    %p42 = por %p40, %p41
    %p43 = scmp.ne.s32.totalorder %s32, %s35
    %p44 = scmp.eq.s32.totalorder %s15, 1
    %p45 = por %p43, %p44
    %p46 = scmp.ne.s32.totalorder %s35, %s36
    %p47 = scmp.eq.s32.totalorder %s15, 0
    %p48 = por %p46, %p47
    %p49 = scmp.ne.s32.totalorder %s35, %s36
    %p50 = scmp.eq.s32.totalorder %s16, 1
    %p51 = por %p49, %p50
    %p53 = scmp.ne.s32.totalorder %s36, %s52
    %p54 = scmp.eq.s32.totalorder %s16, 0
    %p55 = por %p53, %p54
    %s57 = sadd.s32 %s56, 1
    %p60 = scmp.eq.s32.totalorder %s10, 1
    %p61 = scmp.ne.s32.totalorder %s56, %s58
    %p62 = scmp.eq.s32.totalorder %s10, 0
    %p63 = por %p61, %p62
    %p64 = scmp.ne.s32.totalorder %s56, %s58
    %p65 = scmp.eq.s32.totalorder %s15, 1
    %p66 = por %p64, %p65
    %p67 = scmp.ne.s32.totalorder %s58, %s59
    %p68 = scmp.eq.s32.totalorder %s15, 0
    %p69 = por %p67, %p68
    %p70 = scmp.ne.s32.totalorder %s58, %s59
    %p71 = scmp.eq.s32.totalorder %s16, 1
    %p72 = por %p70, %p71
    %p74 = scmp.ne.s32.totalorder %s59, %s73
    %p75 = scmp.eq.s32.totalorder %s16, 0
    %p76 = por %p74, %p75
    %s77 = ssub.s32 %s17, %s29
    %s78 = ssub.s32 %s18, %s25
    %s79 = sor.u32 %s77, %s78
    %p80 = scmp.eq.s32.totalorder %s79, 0
    %s82 = sadd.s32 %s81, 1
    %s83 = scalar_select %p80, %s81, %s82
    %p86 = pneg %p80
    %p87 = scmp.eq.s32.totalorder %s10, 1
    %p88 = por %p86, %p87
    %p89 = scmp.ne.s32.totalorder %s81, %s84
    %p90 = scmp.eq.s32.totalorder %s10, 0
    %p91 = por %p89, %p90
    %p92 = scmp.ne.s32.totalorder %s81, %s84
    %p93 = scmp.eq.s32.totalorder %s15, 1
    %p94 = por %p92, %p93
    %p95 = scmp.ne.s32.totalorder %s84, %s85
    %p96 = scmp.eq.s32.totalorder %s15, 0
    %p97 = por %p95, %p96
    %p98 = scmp.ne.s32.totalorder %s84, %s85
    %p99 = scmp.eq.s32.totalorder %s16, 1
    %p100 = por %p98, %p99
    %p102 = scmp.ne.s32.totalorder %s85, %s101
    %p103 = scmp.eq.s32.totalorder %s16, 0
    %p104 = por %p102, %p103
    %s105 = sadd.s32 %s17, %s18
    %s106 = sadd.s32 %s29, %s25
    %s107 = ssub.s32 %s105, %s106
    %p108 = scmp.eq.s32.totalorder %s107, 0
    %s110 = sadd.s32 %s109, 1
    %s111 = scalar_select %p108, %s109, %s110
    %p114 = pneg %p108
    %p115 = scmp.eq.s32.totalorder %s10, 1
    %p116 = por %p114, %p115
    %p117 = scmp.ne.s32.totalorder %s109, %s112
    %p118 = scmp.eq.s32.totalorder %s10, 0
    %p119 = por %p117, %p118
    %p120 = scmp.ne.s32.totalorder %s109, %s112
    %p121 = scmp.eq.s32.totalorder %s15, 1
    %p122 = por %p120, %p121
    %p123 = scmp.ne.s32.totalorder %s112, %s113
    %p124 = scmp.eq.s32.totalorder %s15, 0
    %p125 = por %p123, %p124
    %p126 = scmp.ne.s32.totalorder %s112, %s113
    %p127 = scmp.eq.s32.totalorder %s16, 1
    %p128 = por %p126, %p127
    %p130 = scmp.ne.s32.totalorder %s113, %s129
    %p131 = scmp.eq.s32.totalorder %s16, 0
    %p132 = por %p130, %p131
    %p133 = scmp.le.s32.totalorder 1, %s10
    %p134 = scmp.lt.s32.totalorder %s10, 3
    %p135 = pnand %p133, %p134
    %p136 = pneg %p135
    // Predicated region
    $region9: #{basic_block_forward.6} parent=5 // pred_check
      _
    $region10: #{basic_block_forward.6} parent=5 // pred_check_branch
      %138 = sbr.rel (%p135) target = $region12
    $region11: #{basic_block_forward.6} parent=5 // pred_region
      %s139 = ssub.s32 %s10, 1
      // Predicated region
      $region13: #{basic_block_forward.6} parent=11 // pred_check
        %p140 = pneg %p69
      $region14: #{basic_block_forward.6} parent=11 // pred_check_branch
        %142 = sbr.rel (%p140) target = $region16
      $region15: #{basic_block_forward.6} parent=11 // pred_region
        _
      $region16: #{basic_block_forward.6} parent=11 // pred_fallthru
        _
    $region12: #{basic_block_forward.6} parent=5 // pred_fallthru
      _
    %p143 = scmp.lt.s32.totalorder %s10, 2
    // Predicated region
    $region17: #{basic_block_forward.6} parent=5 // pred_check
      %p144 = pneg %p143
    $region18: #{basic_block_forward.6} parent=5 // pred_check_branch
      %146 = sbr.rel (%p144) target = $region20
    $region19: #{basic_block_forward.6} parent=5 // pred_region
      // Predicated region
      $region21: #{basic_block_forward.6} parent=19 // pred_check
        %p147 = pneg %p42
      $region22: #{basic_block_forward.6} parent=19 // pred_check_branch
        %149 = sbr.rel (%p147) target = $region24
      $region23: #{basic_block_forward.6} parent=19 // pred_region
        %p150 = scmp.lt.s32.totalorder %s17, 1
        %s151 = scalar_select %p150, %s17, 1
        %s152 = smul.addr %s151, 20
        %s153 = smul.addr %s152, 4
        %s154 = scalar_lea.vmem %s0, %s153
      $region24: #{basic_block_forward.6} parent=19 // pred_fallthru
        _
    $region20: #{basic_block_forward.6} parent=5 // pred_fallthru
      _
    %p155 = scmp.le.s32.totalorder 1, %s10
    %p156 = scmp.lt.s32.totalorder %s10, 3
    %p157 = pnand %p155, %p156
    %p158 = pneg %p157
    // Predicated region
    $region25: #{basic_block_forward.6} parent=5 // pred_check
      _
    $region26: #{basic_block_forward.6} parent=5 // pred_check_branch
      %160 = sbr.rel (%p157) target = $region28
    $region27: #{basic_block_forward.6} parent=5 // pred_region
      %s161 = ssub.s32 %s10, 1
      %p162 = scmp.lt.s32.totalorder %s19, 1
      %s163 = scalar_select %p162, %s19, 1
      %s164 = smul.addr %s163, 20
      %s165 = smul.addr %s164, 4
      %s166 = scalar_lea.vmem %s0, %s165
      %p167 = pneg %p48
      %p168 = pneg %p45
      %p169 = pneg %p69
      %p170 = pneg %p66
      %p171 = pneg %p97
      %p172 = pneg %p94
      %s173 = smul.u32 8, %s20
      %p174 = scmp.lt.s32.totalorder %s19, 1
      %s175 = scalar_select %p174, %s19, 1
      %p176 = scmp.lt.s32.totalorder %s173, 7
      %s177 = scalar_select %p176, %s173, 7
      %s178 = smul.addr %s175, 8
      %s179 = sadd.s32 %s177, %s178
      %s180 = smul.addr %s179, 4
      %s181 = scalar_lea.vmem %s2, %s180
      %p182 = pneg %p125
      %p183 = pneg %p122
      %s184 = sadd.s32 %s19, %s20
      %p185 = scmp.lt.s32.totalorder %s184, 1
      %s186 = scalar_select %p185, %s184, 1
      %s187 = smul.addr %s186, 8
      %s188 = scalar_lea.vmem %s3, %s187
      %p189 = scmp.lt.s32.totalorder %s19, 1
      %s190 = scalar_select %p189, %s19, 1
      %s191 = smul.addr %s190, 20
      %s192 = smul.addr %s191, 4
      %s193 = scalar_lea.vmem %s0, %s192
      %s194 = smul.u32 8, %s20
      %p195 = scmp.lt.s32.totalorder %s19, 1
      %s196 = scalar_select %p195, %s19, 1
      %p197 = scmp.lt.s32.totalorder %s194, 7
      %s198 = scalar_select %p197, %s194, 7
      %s199 = smul.addr %s196, 8
      %s200 = sadd.s32 %s198, %s199
      %s201 = smul.addr %s200, 4
      %s202 = scalar_lea.vmem %s2, %s201
      %s203 = smul.u32 8, %s20
      %s204 = sadd.s32 %s19, %s20
      %p205 = scmp.lt.s32.totalorder %s204, 1
      %s206 = scalar_select %p205, %s204, 1
      %s207 = smul.addr %s206, 8
      %s208 = scalar_lea.vmem %s3, %s207
      %s209 = sadd.s32 %s19, %s20
      %s211 = smul.u32 %s20, 8
      %s212 = smul.u32 %s211, 2
      %s213 = smul.addr %s212, 4
      %s214 = scalar_lea.vmem %s193, %s213
      %v215 = vld [vmem:[%s214] sm:$0xf]
      %v216 = vld [vmem:[%s214 + $0x8] sm:$0xf]
      %v217 = vld [vmem:[%s214 + $0x10] sm:$0xf]
      %v218 = vld [vmem:[%s214 + $0x18] sm:$0xf]
      %v219 = vld [vmem:[%s214 + $0x20] sm:$0xf]
      %v220 = vld [vmem:[%s214 + $0x28] sm:$0xf]
      %v221 = vld [vmem:[%s214 + $0x30] sm:$0xf]
      %v222 = vld [vmem:[%s214 + $0x38] sm:$0xf]
      %v223 = vld [vmem:[%s1] sm:$0xf]
      %v224 = vld [vmem:[%s1 + $0x4] sm:$0xf]
      %v225 = vld [vmem:[%s1 + $0x8] sm:$0xf]
      %v226 = vld [vmem:[%s1 + $0xc] sm:$0xf]
      %v227 = vld [vmem:[%s1 + $0x10] sm:$0xf]
      %v228 = vld [vmem:[%s1 + $0x14] sm:$0xf]
      %v229 = vld [vmem:[%s1 + $0x18] sm:$0xf]
      %v230 = vld [vmem:[%s1 + $0x1c] sm:$0xf]
      %v231 = vld [vmem:[%s1 + $0x20] sm:$0xf]
      %v232 = vld [vmem:[%s1 + $0x24] sm:$0xf]
      %v233 = vld [vmem:[%s1 + $0x28] sm:$0xf]
      %v234 = vld [vmem:[%s1 + $0x2c] sm:$0xf]
      %v235 = vld [vmem:[%s1 + $0x30] sm:$0xf]
      %v236 = vld [vmem:[%s1 + $0x34] sm:$0xf]
      %v237 = vld [vmem:[%s1 + $0x38] sm:$0xf]
      %v238 = vld [vmem:[%s1 + $0x3c] sm:$0xf]
      %v239 = vld [vmem:[%s214 + $0x4] sm:$0x1]
      %v240 = vld [vmem:[%s214 + $0xc] sm:$0x1]
      %v241 = vld [vmem:[%s214 + $0x14] sm:$0x1]
      %v242 = vld [vmem:[%s214 + $0x1c] sm:$0x1]
      %v243 = vld [vmem:[%s214 + $0x24] sm:$0x1]
      %v244 = vld [vmem:[%s214 + $0x2c] sm:$0x1]
      %v245 = vld [vmem:[%s214 + $0x34] sm:$0x1]
      %v246 = vld [vmem:[%s214 + $0x3c] sm:$0x1]
      %vm247 = vsmask.f32 3328
      %vm248 = vsmask.f32 7440
      %vm249 = vmor %vm247, %vm248
      %v251 = vshrl.u32 %v215, 16
      %v253 = vrot.slane %v251, 4
      %v254 = vshll.u32 %v215, 16
      %v256 = vrot.slane %v254, 5
      %v257 = vor.u32 %v253, %v256
      %v258 = vrot.slane %v257, 4
      %v260 = vshll.u32 %v239, 16
      %v262 = vrot.slane %v260, 5
      %v263 = vsel %vm249, %v258, %v262
      %v265 = vshrl.u32 %v216, 16
      %v267 = vrot.slane %v265, 4
      %v268 = vshll.u32 %v216, 16
      %v270 = vrot.slane %v268, 5
      %v271 = vor.u32 %v267, %v270
      %v272 = vrot.slane %v271, 4
      %v274 = vshll.u32 %v240, 16
      %v276 = vrot.slane %v274, 5
      %v277 = vsel %vm249, %v272, %v276
      %v279 = vshrl.u32 %v217, 16
      %v281 = vrot.slane %v279, 4
      %v282 = vshll.u32 %v217, 16
      %v284 = vrot.slane %v282, 5
      %v285 = vor.u32 %v281, %v284
      %v286 = vrot.slane %v285, 4
      %v288 = vshll.u32 %v241, 16
      %v290 = vrot.slane %v288, 5
      %v291 = vsel %vm249, %v286, %v290
      %v293 = vshrl.u32 %v218, 16
      %v295 = vrot.slane %v293, 4
      %v296 = vshll.u32 %v218, 16
      %v298 = vrot.slane %v296, 5
      %v299 = vor.u32 %v295, %v298
      %v300 = vrot.slane %v299, 4
      %v302 = vshll.u32 %v242, 16
      %v304 = vrot.slane %v302, 5
      %v305 = vsel %vm249, %v300, %v304
      %v307 = vshrl.u32 %v219, 16
      %v309 = vrot.slane %v307, 4
      %v310 = vshll.u32 %v219, 16
      %v312 = vrot.slane %v310, 5
      %v313 = vor.u32 %v309, %v312
      %v314 = vrot.slane %v313, 4
      %v316 = vshll.u32 %v243, 16
      %v318 = vrot.slane %v316, 5
      %v319 = vsel %vm249, %v314, %v318
      %v321 = vshrl.u32 %v220, 16
      %v323 = vrot.slane %v321, 4
      %v324 = vshll.u32 %v220, 16
      %v326 = vrot.slane %v324, 5
      %v327 = vor.u32 %v323, %v326
      %v328 = vrot.slane %v327, 4
      %v330 = vshll.u32 %v244, 16
      %v332 = vrot.slane %v330, 5
      %v333 = vsel %vm249, %v328, %v332
      %v335 = vshrl.u32 %v221, 16
      %v337 = vrot.slane %v335, 4
      %v338 = vshll.u32 %v221, 16
      %v340 = vrot.slane %v338, 5
      %v341 = vor.u32 %v337, %v340
      %v342 = vrot.slane %v341, 4
      %v344 = vshll.u32 %v245, 16
      %v346 = vrot.slane %v344, 5
      %v347 = vsel %vm249, %v342, %v346
      %v349 = vshrl.u32 %v222, 16
      %v351 = vrot.slane %v349, 4
      %v352 = vshll.u32 %v222, 16
      %v354 = vrot.slane %v352, 5
      %v355 = vor.u32 %v351, %v354
      %v356 = vrot.slane %v355, 4
      %v358 = vshll.u32 %v246, 16
      %v360 = vrot.slane %v358, 5
      %v361 = vsel %vm249, %v356, %v360
      %s362 = scalar_lea.vmem %s1, 64
      %v363 = vld [vmem:[%s362] sm:$0xf]
      %v364 = vld [vmem:[%s362 + $0x4] sm:$0xf]
      %v365 = vld [vmem:[%s362 + $0x8] sm:$0xf]
      %v366 = vld [vmem:[%s362 + $0xc] sm:$0xf]
      %v367 = vld [vmem:[%s362 + $0x10] sm:$0xf]
      %v368 = vld [vmem:[%s362 + $0x14] sm:$0xf]
      %v369 = vld [vmem:[%s362 + $0x18] sm:$0xf]
      %v370 = vld [vmem:[%s362 + $0x1c] sm:$0xf]
      %v371 = vld [vmem:[%s362 + $0x20] sm:$0xf]
      %v372 = vld [vmem:[%s362 + $0x24] sm:$0xf]
      %v373 = vld [vmem:[%s362 + $0x28] sm:$0xf]
      %v374 = vld [vmem:[%s362 + $0x2c] sm:$0xf]
      %v375 = vld [vmem:[%s362 + $0x30] sm:$0xf]
      %v376 = vld [vmem:[%s362 + $0x34] sm:$0xf]
      %v377 = vld [vmem:[%s362 + $0x38] sm:$0xf]
      %v378 = vld [vmem:[%s362 + $0x3c] sm:$0xf]
      %v379 = vunpack.c.l.b16 %v263
      %v380 = vunpack.c.l.b16 %v277
      %v381 = vunpack.c.l.b16 %v291
      %v382 = vunpack.c.l.b16 %v305
      %v383 = vunpack.c.l.b16 %v319
      %v384 = vunpack.c.l.b16 %v333
      %v385 = vunpack.c.l.b16 %v347
      %v386 = vunpack.c.l.b16 %v361
      %v387 = vpack.c.b16 %v380, %v379
      %v388 = vpack.c.b16 %v382, %v381
      %v389 = vpack.c.b16 %v384, %v383
      %v390 = vpack.c.b16 %v386, %v385
      %v411 = vunpack.c.l.b16 %v363
      %v412 = vunpack.c.l.b16 %v364
      %v413 = vunpack.c.l.b16 %v365
      %v414 = vunpack.c.l.b16 %v366
      %v415 = vunpack.c.l.b16 %v367
      %v416 = vunpack.c.l.b16 %v368
      %v417 = vunpack.c.l.b16 %v369
      %v418 = vunpack.c.l.b16 %v370
      %v419 = vunpack.c.l.b16 %v371
      %v420 = vunpack.c.l.b16 %v372
      %v421 = vunpack.c.l.b16 %v373
      %v422 = vunpack.c.l.b16 %v374
      %v423 = vunpack.c.l.b16 %v375
      %v424 = vunpack.c.l.b16 %v376
      %v425 = vunpack.c.l.b16 %v377
      %v426 = vunpack.c.l.b16 %v378
      %v427 = vpack.c.b16 %v412, %v411
      %v428 = vpack.c.b16 %v414, %v413
      %v429 = vpack.c.b16 %v416, %v415
      %v430 = vpack.c.b16 %v418, %v417
      %v431 = vpack.c.b16 %v420, %v419
      %v432 = vpack.c.b16 %v422, %v421
      %v433 = vpack.c.b16 %v424, %v423
      %v434 = vpack.c.b16 %v426, %v425
      %443 = vmatprep.subr.bf16.mxu0 0
      %444 = vmatpush1.bf16.msra.mxu0 %v434
      %445 = vmatprep.subr.bf16.mxu0 0
      %446 = vmatpush1.bf16.msra.mxu0 %v433
      %447 = vmatprep.subr.bf16.mxu0 0
      %448 = vmatpush1.bf16.msra.mxu0 %v432
      %449 = vmatprep.subr.bf16.mxu0 0
      %450 = vmatpush1.bf16.msra.mxu0 %v431
      %451 = vmatprep.subr.bf16.mxu0 0
      %452 = vmatpush1.bf16.msra.mxu0 %v430
      %453 = vmatprep.subr.bf16.mxu0 0
      %454 = vmatpush1.bf16.msra.mxu0 %v429
      %455 = vmatprep.subr.bf16.mxu0 0
      %456 = vmatpush1.bf16.msra.mxu0 %v428
      %457 = vmatprep.subr.bf16.mxu0 0
      %458 = vmatpush1.bf16.msra.mxu0 %v427
      %459 = vmatprep.subr.bf16.mxu0 0
      %460 = vmatpush2.bf16.msra.mxu0 0
      %461 = vmatprep.subr.bf16.mxu0 0
      %462 = vmatpush2.bf16.msra.mxu0 0
      %463 = vmatprep.subr.bf16.mxu0 0
      %464 = vmatpush2.bf16.msra.mxu0 0
      %465 = vmatprep.subr.bf16.mxu0 0
      %466 = vmatpush2.bf16.msra.mxu0 0
      %467 = vmatprep.subr.bf16.mxu0 0
      %468 = vmatpush2.bf16.msra.mxu0 0
      %469 = vmatprep.subr.bf16.mxu0 0
      %470 = vmatpush2.bf16.msra.mxu0 0
      %471 = vmatprep.subr.bf16.mxu0 0
      %472 = vmatpush2.bf16.msra.mxu0 0
      %473 = vmatprep.subr.bf16.mxu0 0
      %474 = vmatpush2.bf16.msra.mxu0 0
      %475 = vmatprep.mubr.bf16.mxu0 0
      %476 = vmatmul.mubr.bf16.gmra.mxu0 %v387
      %v477 = vpop.f32.mrf.mxu0
      %v478 = vadd.f32 0.0, %v477
      %v479 = vpop.f32.mrf.mxu0
      %v480 = vpop.f32.mrf.mxu0
      %v481 = vadd.f32 0.0, %v480
      %v482 = vpop.f32.mrf.mxu0
      %483 = vmatprep.mubr.bf16.mxu0 0
      %484 = vmatmul.mubr.bf16.gmra.mxu0 %v388
      %v485 = vpop.f32.mrf.mxu0
      %v486 = vadd.f32 0.0, %v485
      %v487 = vpop.f32.mrf.mxu0
      %v488 = vpop.f32.mrf.mxu0
      %v489 = vadd.f32 0.0, %v488
      %v490 = vpop.f32.mrf.mxu0
      %491 = vmatprep.mubr.bf16.mxu0 0
      %492 = vmatmul.mubr.bf16.gmra.mxu0 %v389
      %v493 = vpop.f32.mrf.mxu0
      %v494 = vadd.f32 0.0, %v493
      %v495 = vpop.f32.mrf.mxu0
      %v496 = vpop.f32.mrf.mxu0
      %v497 = vadd.f32 0.0, %v496
      %v498 = vpop.f32.mrf.mxu0
      %499 = vmatprep.mubr.bf16.mxu0 0
      %500 = vmatmul.mubr.bf16.gmra.mxu0 %v390
      %v501 = vpop.f32.mrf.mxu0
      %v502 = vadd.f32 0.0, %v501
      %v503 = vpop.f32.mrf.mxu0
      %v504 = vpop.f32.mrf.mxu0
      %v505 = vadd.f32 0.0, %v504
      %v506 = vpop.f32.mrf.mxu0
      %507 = vdwg.mxu0
      %v516 = vunpack.c.l.b16 %v215
      %v517 = vunpack.c.l.b16 %v216
      %v518 = vunpack.c.l.b16 %v217
      %v519 = vunpack.c.l.b16 %v218
      %v520 = vunpack.c.l.b16 %v219
      %v521 = vunpack.c.l.b16 %v220
      %v522 = vunpack.c.l.b16 %v221
      %v523 = vunpack.c.l.b16 %v222
      %v524 = vpack.c.b16 %v517, %v516
      %v525 = vpack.c.b16 %v519, %v518
      %v526 = vpack.c.b16 %v521, %v520
      %v527 = vpack.c.b16 %v523, %v522
      %v548 = vunpack.c.l.b16 %v223
      %v549 = vunpack.c.l.b16 %v224
      %v550 = vunpack.c.l.b16 %v225
      %v551 = vunpack.c.l.b16 %v226
      %v552 = vunpack.c.l.b16 %v227
      %v553 = vunpack.c.l.b16 %v228
      %v554 = vunpack.c.l.b16 %v229
      %v555 = vunpack.c.l.b16 %v230
      %v556 = vunpack.c.l.b16 %v231
      %v557 = vunpack.c.l.b16 %v232
      %v558 = vunpack.c.l.b16 %v233
      %v559 = vunpack.c.l.b16 %v234
      %v560 = vunpack.c.l.b16 %v235
      %v561 = vunpack.c.l.b16 %v236
      %v562 = vunpack.c.l.b16 %v237
      %v563 = vunpack.c.l.b16 %v238
      %v564 = vpack.c.b16 %v549, %v548
      %v565 = vpack.c.b16 %v551, %v550
      %v566 = vpack.c.b16 %v553, %v552
      %v567 = vpack.c.b16 %v555, %v554
      %v568 = vpack.c.b16 %v557, %v556
      %v569 = vpack.c.b16 %v559, %v558
      %v570 = vpack.c.b16 %v561, %v560
      %v571 = vpack.c.b16 %v563, %v562
      %580 = vmatprep.subr.bf16.mxu0 0
      %581 = vmatpush1.bf16.msra.mxu0 %v571
      %582 = vmatprep.subr.bf16.mxu0 0
      %583 = vmatpush1.bf16.msra.mxu0 %v570
      %584 = vmatprep.subr.bf16.mxu0 0
      %585 = vmatpush1.bf16.msra.mxu0 %v569
      %586 = vmatprep.subr.bf16.mxu0 0
      %587 = vmatpush1.bf16.msra.mxu0 %v568
      %588 = vmatprep.subr.bf16.mxu0 0
      %589 = vmatpush1.bf16.msra.mxu0 %v567
      %590 = vmatprep.subr.bf16.mxu0 0
      %591 = vmatpush1.bf16.msra.mxu0 %v566
      %592 = vmatprep.subr.bf16.mxu0 0
      %593 = vmatpush1.bf16.msra.mxu0 %v565
      %594 = vmatprep.subr.bf16.mxu0 0
      %595 = vmatpush1.bf16.msra.mxu0 %v564
      %596 = vmatprep.subr.bf16.mxu0 0
      %597 = vmatpush2.bf16.msra.mxu0 0
      %598 = vmatprep.subr.bf16.mxu0 0
      %599 = vmatpush2.bf16.msra.mxu0 0
      %600 = vmatprep.subr.bf16.mxu0 0
      %601 = vmatpush2.bf16.msra.mxu0 0
      %602 = vmatprep.subr.bf16.mxu0 0
      %603 = vmatpush2.bf16.msra.mxu0 0
      %604 = vmatprep.subr.bf16.mxu0 0
      %605 = vmatpush2.bf16.msra.mxu0 0
      %606 = vmatprep.subr.bf16.mxu0 0
      %607 = vmatpush2.bf16.msra.mxu0 0
      %608 = vmatprep.subr.bf16.mxu0 0
      %609 = vmatpush2.bf16.msra.mxu0 0
      %610 = vmatprep.subr.bf16.mxu0 0
      %611 = vmatpush2.bf16.msra.mxu0 0
      %612 = vmatprep.mubr.bf16.mxu0 0
      %613 = vmatmul.mubr.bf16.gmra.mxu0 %v524
      %v614 = vpop.f32.mrf.mxu0
      %v615 = vadd.f32 %v478, %v614
      %v616 = vpop.f32.mrf.mxu0
      %v617 = vpop.f32.mrf.mxu0
      %v618 = vadd.f32 %v481, %v617
      %v619 = vpop.f32.mrf.mxu0
      %620 = vmatprep.mubr.bf16.mxu0 0
      %621 = vmatmul.mubr.bf16.gmra.mxu0 %v525
      %v622 = vpop.f32.mrf.mxu0
      %v623 = vadd.f32 %v486, %v622
      %v624 = vpop.f32.mrf.mxu0
      %v625 = vpop.f32.mrf.mxu0
      %v626 = vadd.f32 %v489, %v625
      %v627 = vpop.f32.mrf.mxu0
      %628 = vmatprep.mubr.bf16.mxu0 0
      %629 = vmatmul.mubr.bf16.gmra.mxu0 %v526
      %v630 = vpop.f32.mrf.mxu0
      %v631 = vadd.f32 %v494, %v630
      %v632 = vpop.f32.mrf.mxu0
      %v633 = vpop.f32.mrf.mxu0
      %v634 = vadd.f32 %v497, %v633
      %v635 = vpop.f32.mrf.mxu0
      %636 = vmatprep.mubr.bf16.mxu0 0
      %637 = vmatmul.mubr.bf16.gmra.mxu0 %v527
      %v638 = vpop.f32.mrf.mxu0
      %v639 = vadd.f32 %v502, %v638
      %v640 = vpop.f32.mrf.mxu0
      %v641 = vpop.f32.mrf.mxu0
      %v642 = vadd.f32 %v505, %v641
      %v643 = vpop.f32.mrf.mxu0
      %644 = vdwg.mxu0
      %v645 = vld [vmem:[%s214] sm:$0xe]
      %v646 = vld [vmem:[%s214 + $0x8] sm:$0xe]
      %v647 = vld [vmem:[%s214 + $0x10] sm:$0xe]
      %v648 = vld [vmem:[%s214 + $0x18] sm:$0xe]
      %v649 = vld [vmem:[%s214 + $0x20] sm:$0xe]
      %v650 = vld [vmem:[%s214 + $0x28] sm:$0xe]
      %v651 = vld [vmem:[%s214 + $0x30] sm:$0xe]
      %v652 = vld [vmem:[%s214 + $0x38] sm:$0xe]
      %vm669 = vcmask 1042432
      %vm670 = vcmask 1046532
      %vm671 = vmor %vm669, %vm670
      %v672 = vrot.slane %v645, 5
      %v673 = vrot.slane %v672, 4
      %v674 = vrot.slane %v239, 5
      %v675 = vsel %vm671, %v673, %v674
      %v676 = vrot.slane %v646, 5
      %v677 = vrot.slane %v676, 4
      %v678 = vrot.slane %v240, 5
      %v679 = vsel %vm671, %v677, %v678
      %v680 = vrot.slane %v647, 5
      %v681 = vrot.slane %v680, 4
      %v682 = vrot.slane %v241, 5
      %v683 = vsel %vm671, %v681, %v682
      %v684 = vrot.slane %v648, 5
      %v685 = vrot.slane %v684, 4
      %v686 = vrot.slane %v242, 5
      %v687 = vsel %vm671, %v685, %v686
      %v688 = vrot.slane %v649, 5
      %v689 = vrot.slane %v688, 4
      %v690 = vrot.slane %v243, 5
      %v691 = vsel %vm671, %v689, %v690
      %v692 = vrot.slane %v650, 5
      %v693 = vrot.slane %v692, 4
      %v694 = vrot.slane %v244, 5
      %v695 = vsel %vm671, %v693, %v694
      %v696 = vrot.slane %v651, 5
      %v697 = vrot.slane %v696, 4
      %v698 = vrot.slane %v245, 5
      %v699 = vsel %vm671, %v697, %v698
      %v700 = vrot.slane %v652, 5
      %v701 = vrot.slane %v700, 4
      %v702 = vrot.slane %v246, 5
      %v703 = vsel %vm671, %v701, %v702
      %s704 = scalar_lea.vmem %s1, 128
      %v705 = vld [vmem:[%s704] sm:$0xf]
      %v706 = vld [vmem:[%s704 + $0x4] sm:$0xf]
      %v707 = vld [vmem:[%s704 + $0x8] sm:$0xf]
      %v708 = vld [vmem:[%s704 + $0xc] sm:$0xf]
      %v709 = vld [vmem:[%s704 + $0x10] sm:$0xf]
      %v710 = vld [vmem:[%s704 + $0x14] sm:$0xf]
      %v711 = vld [vmem:[%s704 + $0x18] sm:$0xf]
      %v712 = vld [vmem:[%s704 + $0x1c] sm:$0xf]
      %v713 = vld [vmem:[%s704 + $0x20] sm:$0xf]
      %v714 = vld [vmem:[%s704 + $0x24] sm:$0xf]
      %v715 = vld [vmem:[%s704 + $0x28] sm:$0xf]
      %v716 = vld [vmem:[%s704 + $0x2c] sm:$0xf]
      %v717 = vld [vmem:[%s704 + $0x30] sm:$0xf]
      %v718 = vld [vmem:[%s704 + $0x34] sm:$0xf]
      %v719 = vld [vmem:[%s704 + $0x38] sm:$0xf]
      %v720 = vld [vmem:[%s704 + $0x3c] sm:$0xf]
      %v721 = vunpack.c.l.b16 %v675
      %v722 = vunpack.c.l.b16 %v679
      %v723 = vunpack.c.l.b16 %v683
      %v724 = vunpack.c.l.b16 %v687
      %v725 = vunpack.c.l.b16 %v691
      %v726 = vunpack.c.l.b16 %v695
      %v727 = vunpack.c.l.b16 %v699
      %v728 = vunpack.c.l.b16 %v703
      %v729 = vpack.c.b16 %v722, %v721
      %v730 = vpack.c.b16 %v724, %v723
      %v731 = vpack.c.b16 %v726, %v725
      %v732 = vpack.c.b16 %v728, %v727
      %v753 = vunpack.c.l.b16 %v705
      %v754 = vunpack.c.l.b16 %v706
      %v755 = vunpack.c.l.b16 %v707
      %v756 = vunpack.c.l.b16 %v708
      %v757 = vunpack.c.l.b16 %v709
      %v758 = vunpack.c.l.b16 %v710
      %v759 = vunpack.c.l.b16 %v711
      %v760 = vunpack.c.l.b16 %v712
      %v761 = vunpack.c.l.b16 %v713
      %v762 = vunpack.c.l.b16 %v714
      %v763 = vunpack.c.l.b16 %v715
      %v764 = vunpack.c.l.b16 %v716
      %v765 = vunpack.c.l.b16 %v717
      %v766 = vunpack.c.l.b16 %v718
      %v767 = vunpack.c.l.b16 %v719
      %v768 = vunpack.c.l.b16 %v720
      %v769 = vpack.c.b16 %v754, %v753
      %v770 = vpack.c.b16 %v756, %v755
      %v771 = vpack.c.b16 %v758, %v757
      %v772 = vpack.c.b16 %v760, %v759
      %v773 = vpack.c.b16 %v762, %v761
      %v774 = vpack.c.b16 %v764, %v763
      %v775 = vpack.c.b16 %v766, %v765
      %v776 = vpack.c.b16 %v768, %v767
      %785 = vmatprep.subr.bf16.mxu0 0
      %786 = vmatpush1.bf16.msra.mxu0 %v776
      %787 = vmatprep.subr.bf16.mxu0 0
      %788 = vmatpush1.bf16.msra.mxu0 %v775
      %789 = vmatprep.subr.bf16.mxu0 0
      %790 = vmatpush1.bf16.msra.mxu0 %v774
      %791 = vmatprep.subr.bf16.mxu0 0
      %792 = vmatpush1.bf16.msra.mxu0 %v773
      %793 = vmatprep.subr.bf16.mxu0 0
      %794 = vmatpush1.bf16.msra.mxu0 %v772
      %795 = vmatprep.subr.bf16.mxu0 0
      %796 = vmatpush1.bf16.msra.mxu0 %v771
      %797 = vmatprep.subr.bf16.mxu0 0
      %798 = vmatpush1.bf16.msra.mxu0 %v770
      %799 = vmatprep.subr.bf16.mxu0 0
      %800 = vmatpush1.bf16.msra.mxu0 %v769
      %801 = vmatprep.subr.bf16.mxu0 0
      %802 = vmatpush2.bf16.msra.mxu0 0
      %803 = vmatprep.subr.bf16.mxu0 0
      %804 = vmatpush2.bf16.msra.mxu0 0
      %805 = vmatprep.subr.bf16.mxu0 0
      %806 = vmatpush2.bf16.msra.mxu0 0
      %807 = vmatprep.subr.bf16.mxu0 0
      %808 = vmatpush2.bf16.msra.mxu0 0
      %809 = vmatprep.subr.bf16.mxu0 0
      %810 = vmatpush2.bf16.msra.mxu0 0
      %811 = vmatprep.subr.bf16.mxu0 0
      %812 = vmatpush2.bf16.msra.mxu0 0
      %813 = vmatprep.subr.bf16.mxu0 0
      %814 = vmatpush2.bf16.msra.mxu0 0
      %815 = vmatprep.subr.bf16.mxu0 0
      %816 = vmatpush2.bf16.msra.mxu0 0
      %817 = vmatprep.mubr.bf16.mxu0 0
      %818 = vmatmul.mubr.bf16.gmra.mxu0 %v729
      %v819 = vpop.f32.mrf.mxu0
      %v820 = vadd.f32 0.0, %v819
      %v821 = vpop.f32.mrf.mxu0
      %v822 = vpop.f32.mrf.mxu0
      %v823 = vadd.f32 0.0, %v822
      %v824 = vpop.f32.mrf.mxu0
      %825 = vmatprep.mubr.bf16.mxu0 0
      %826 = vmatmul.mubr.bf16.gmra.mxu0 %v730
      %v827 = vpop.f32.mrf.mxu0
      %v828 = vadd.f32 0.0, %v827
      %v829 = vpop.f32.mrf.mxu0
      %v830 = vpop.f32.mrf.mxu0
      %v831 = vadd.f32 0.0, %v830
      %v832 = vpop.f32.mrf.mxu0
      %833 = vmatprep.mubr.bf16.mxu0 0
      %834 = vmatmul.mubr.bf16.gmra.mxu0 %v731
      %v835 = vpop.f32.mrf.mxu0
      %v836 = vadd.f32 0.0, %v835
      %v837 = vpop.f32.mrf.mxu0
      %v838 = vpop.f32.mrf.mxu0
      %v839 = vadd.f32 0.0, %v838
      %v840 = vpop.f32.mrf.mxu0
      %841 = vmatprep.mubr.bf16.mxu0 0
      %842 = vmatmul.mubr.bf16.gmra.mxu0 %v732
      %v843 = vpop.f32.mrf.mxu0
      %v844 = vadd.f32 0.0, %v843
      %v845 = vpop.f32.mrf.mxu0
      %v846 = vpop.f32.mrf.mxu0
      %v847 = vadd.f32 0.0, %v846
      %v848 = vpop.f32.mrf.mxu0
      %849 = vdwg.mxu0
      %v850 = vadd.f32 %v615, %v820
      %v851 = vadd.f32 %v618, %v823
      %v852 = vadd.f32 %v623, %v828
      %v853 = vadd.f32 %v626, %v831
      %v854 = vadd.f32 %v631, %v836
      %v855 = vadd.f32 %v634, %v839
      %v856 = vadd.f32 %v639, %v844
      %v857 = vadd.f32 %v642, %v847
      %s858 = sadd.s32 %s211, 1
      %s859 = smul.u32 %s858, 2
      %s860 = smul.addr %s859, 4
      %s861 = scalar_lea.vmem %s193, %s860
      %v862 = vld [vmem:[%s861] sm:$0xf]
      %v863 = vld [vmem:[%s861 + $0x8] sm:$0xf]
      %v864 = vld [vmem:[%s861 + $0x10] sm:$0xf]
      %v865 = vld [vmem:[%s861 + $0x18] sm:$0xf]
      %v866 = vld [vmem:[%s861 + $0x20] sm:$0xf]
      %v867 = vld [vmem:[%s861 + $0x28] sm:$0xf]
      %v868 = vld [vmem:[%s861 + $0x30] sm:$0xf]
      %v869 = vld [vmem:[%s861 + $0x38] sm:$0xf]
      %s870 = scalar_lea.vmem %s1, 192
      %v871 = vld [vmem:[%s870] sm:$0xf]
      %v872 = vld [vmem:[%s870 + $0x4] sm:$0xf]
      %v873 = vld [vmem:[%s870 + $0x8] sm:$0xf]
      %v874 = vld [vmem:[%s870 + $0xc] sm:$0xf]
      %v875 = vld [vmem:[%s870 + $0x10] sm:$0xf]
      %v876 = vld [vmem:[%s870 + $0x14] sm:$0xf]
      %v877 = vld [vmem:[%s870 + $0x18] sm:$0xf]
      %v878 = vld [vmem:[%s870 + $0x1c] sm:$0xf]
      %v879 = vld [vmem:[%s870 + $0x20] sm:$0xf]
      %v880 = vld [vmem:[%s870 + $0x24] sm:$0xf]
      %v881 = vld [vmem:[%s870 + $0x28] sm:$0xf]
      %v882 = vld [vmem:[%s870 + $0x2c] sm:$0xf]
      %v883 = vld [vmem:[%s870 + $0x30] sm:$0xf]
      %v884 = vld [vmem:[%s870 + $0x34] sm:$0xf]
      %v885 = vld [vmem:[%s870 + $0x38] sm:$0xf]
      %v886 = vld [vmem:[%s870 + $0x3c] sm:$0xf]
      %v895 = vunpack.c.l.b16 %v862
      %v896 = vunpack.c.l.b16 %v863
      %v897 = vunpack.c.l.b16 %v864
      %v898 = vunpack.c.l.b16 %v865
      %v899 = vunpack.c.l.b16 %v866
      %v900 = vunpack.c.l.b16 %v867
      %v901 = vunpack.c.l.b16 %v868
      %v902 = vunpack.c.l.b16 %v869
      %v903 = vpack.c.b16 %v896, %v895
      %v904 = vpack.c.b16 %v898, %v897
      %v905 = vpack.c.b16 %v900, %v899
      %v906 = vpack.c.b16 %v902, %v901
      %v927 = vunpack.c.l.b16 %v871
      %v928 = vunpack.c.l.b16 %v872
      %v929 = vunpack.c.l.b16 %v873
      %v930 = vunpack.c.l.b16 %v874
      %v931 = vunpack.c.l.b16 %v875
      %v932 = vunpack.c.l.b16 %v876
      %v933 = vunpack.c.l.b16 %v877
      %v934 = vunpack.c.l.b16 %v878
      %v935 = vunpack.c.l.b16 %v879
      %v936 = vunpack.c.l.b16 %v880
      %v937 = vunpack.c.l.b16 %v881
      %v938 = vunpack.c.l.b16 %v882
      %v939 = vunpack.c.l.b16 %v883
      %v940 = vunpack.c.l.b16 %v884
      %v941 = vunpack.c.l.b16 %v885
      %v942 = vunpack.c.l.b16 %v886
      %v943 = vpack.c.b16 %v928, %v927
      %v944 = vpack.c.b16 %v930, %v929
      %v945 = vpack.c.b16 %v932, %v931
      %v946 = vpack.c.b16 %v934, %v933
      %v947 = vpack.c.b16 %v936, %v935
      %v948 = vpack.c.b16 %v938, %v937
      %v949 = vpack.c.b16 %v940, %v939
      %v950 = vpack.c.b16 %v942, %v941
      %959 = vmatprep.subr.bf16.mxu0 0
      %960 = vmatpush1.bf16.msra.mxu0 %v950
      %961 = vmatprep.subr.bf16.mxu0 0
      %962 = vmatpush1.bf16.msra.mxu0 %v949
      %963 = vmatprep.subr.bf16.mxu0 0
      %964 = vmatpush1.bf16.msra.mxu0 %v948
      %965 = vmatprep.subr.bf16.mxu0 0
      %966 = vmatpush1.bf16.msra.mxu0 %v947
      %967 = vmatprep.subr.bf16.mxu0 0
      %968 = vmatpush1.bf16.msra.mxu0 %v946
      %969 = vmatprep.subr.bf16.mxu0 0
      %970 = vmatpush1.bf16.msra.mxu0 %v945
      %971 = vmatprep.subr.bf16.mxu0 0
      %972 = vmatpush1.bf16.msra.mxu0 %v944
      %973 = vmatprep.subr.bf16.mxu0 0
      %974 = vmatpush1.bf16.msra.mxu0 %v943
      %975 = vmatprep.subr.bf16.mxu0 0
      %976 = vmatpush2.bf16.msra.mxu0 0
      %977 = vmatprep.subr.bf16.mxu0 0
      %978 = vmatpush2.bf16.msra.mxu0 0
      %979 = vmatprep.subr.bf16.mxu0 0
      %980 = vmatpush2.bf16.msra.mxu0 0
      %981 = vmatprep.subr.bf16.mxu0 0
      %982 = vmatpush2.bf16.msra.mxu0 0
      %983 = vmatprep.subr.bf16.mxu0 0
      %984 = vmatpush2.bf16.msra.mxu0 0
      %985 = vmatprep.subr.bf16.mxu0 0
      %986 = vmatpush2.bf16.msra.mxu0 0
      %987 = vmatprep.subr.bf16.mxu0 0
      %988 = vmatpush2.bf16.msra.mxu0 0
      %989 = vmatprep.subr.bf16.mxu0 0
      %990 = vmatpush2.bf16.msra.mxu0 0
      %991 = vmatprep.mubr.bf16.mxu0 0
      %992 = vmatmul.mubr.bf16.gmra.mxu0 %v903
      %v993 = vpop.f32.mrf.mxu0
      %v994 = vadd.f32 0.0, %v993
      %v995 = vpop.f32.mrf.mxu0
      %v996 = vpop.f32.mrf.mxu0
      %v997 = vadd.f32 0.0, %v996
      %v998 = vpop.f32.mrf.mxu0
      %999 = vmatprep.mubr.bf16.mxu0 0
      %1000 = vmatmul.mubr.bf16.gmra.mxu0 %v904
      %v1001 = vpop.f32.mrf.mxu0
      %v1002 = vadd.f32 0.0, %v1001
      %v1003 = vpop.f32.mrf.mxu0
      %v1004 = vpop.f32.mrf.mxu0
      %v1005 = vadd.f32 0.0, %v1004
      %v1006 = vpop.f32.mrf.mxu0
      %1007 = vmatprep.mubr.bf16.mxu0 0
      %1008 = vmatmul.mubr.bf16.gmra.mxu0 %v905
      %v1009 = vpop.f32.mrf.mxu0
      %v1010 = vadd.f32 0.0, %v1009
      %v1011 = vpop.f32.mrf.mxu0
      %v1012 = vpop.f32.mrf.mxu0
      %v1013 = vadd.f32 0.0, %v1012
      %v1014 = vpop.f32.mrf.mxu0
      %1015 = vmatprep.mubr.bf16.mxu0 0
      %1016 = vmatmul.mubr.bf16.gmra.mxu0 %v906
      %v1017 = vpop.f32.mrf.mxu0
      %v1018 = vadd.f32 0.0, %v1017
      %v1019 = vpop.f32.mrf.mxu0
      %v1020 = vpop.f32.mrf.mxu0
      %v1021 = vadd.f32 0.0, %v1020
      %v1022 = vpop.f32.mrf.mxu0
      %1023 = vdwg.mxu0
      %v1024 = vadd.f32 %v850, %v994
      %v1025 = vadd.f32 %v851, %v997
      %v1026 = vadd.f32 %v852, %v1002
      %v1027 = vadd.f32 %v853, %v1005
      %v1028 = vadd.f32 %v854, %v1010
      %v1029 = vadd.f32 %v855, %v1013
      %v1030 = vadd.f32 %v856, %v1018
      %v1031 = vadd.f32 %v857, %v1021
      %v1032 = vld [vmem:[%s861] sm:$0xf]
      %v1033 = vld [vmem:[%s861 + $0x4] sm:$0x1]
      %v1034 = vld [vmem:[%s861 + $0x8] sm:$0xf]
      %v1035 = vld [vmem:[%s861 + $0xc] sm:$0x1]
      %v1036 = vld [vmem:[%s861 + $0x10] sm:$0xf]
      %v1037 = vld [vmem:[%s861 + $0x14] sm:$0x1]
      %v1038 = vld [vmem:[%s861 + $0x18] sm:$0xf]
      %v1039 = vld [vmem:[%s861 + $0x1c] sm:$0x1]
      %v1040 = vld [vmem:[%s861 + $0x20] sm:$0xf]
      %v1041 = vld [vmem:[%s861 + $0x24] sm:$0x1]
      %v1042 = vld [vmem:[%s861 + $0x28] sm:$0xf]
      %v1043 = vld [vmem:[%s861 + $0x2c] sm:$0x1]
      %v1044 = vld [vmem:[%s861 + $0x30] sm:$0xf]
      %v1045 = vld [vmem:[%s861 + $0x34] sm:$0x1]
      %v1046 = vld [vmem:[%s861 + $0x38] sm:$0xf]
      %v1047 = vld [vmem:[%s861 + $0x3c] sm:$0x1]
      %v1049 = vshrl.u32 %v1032, 16
      %v1051 = vrot.slane %v1049, 4
      %v1052 = vshll.u32 %v1032, 16
      %v1054 = vrot.slane %v1052, 5
      %v1055 = vor.u32 %v1051, %v1054
      %v1056 = vrot.slane %v1055, 4
      %v1058 = vshll.u32 %v1033, 16
      %v1060 = vrot.slane %v1058, 5
      %v1061 = vsel %vm249, %v1056, %v1060
      %v1063 = vshrl.u32 %v1034, 16
      %v1065 = vrot.slane %v1063, 4
      %v1066 = vshll.u32 %v1034, 16
      %v1068 = vrot.slane %v1066, 5
      %v1069 = vor.u32 %v1065, %v1068
      %v1070 = vrot.slane %v1069, 4
      %v1072 = vshll.u32 %v1035, 16
      %v1074 = vrot.slane %v1072, 5
      %v1075 = vsel %vm249, %v1070, %v1074
      %v1077 = vshrl.u32 %v1036, 16
      %v1079 = vrot.slane %v1077, 4
      %v1080 = vshll.u32 %v1036, 16
      %v1082 = vrot.slane %v1080, 5
      %v1083 = vor.u32 %v1079, %v1082
      %v1084 = vrot.slane %v1083, 4
      %v1086 = vshll.u32 %v1037, 16
      %v1088 = vrot.slane %v1086, 5
      %v1089 = vsel %vm249, %v1084, %v1088
      %v1091 = vshrl.u32 %v1038, 16
      %v1093 = vrot.slane %v1091, 4
      %v1094 = vshll.u32 %v1038, 16
      %v1096 = vrot.slane %v1094, 5
      %v1097 = vor.u32 %v1093, %v1096
      %v1098 = vrot.slane %v1097, 4
      %v1100 = vshll.u32 %v1039, 16
      %v1102 = vrot.slane %v1100, 5
      %v1103 = vsel %vm249, %v1098, %v1102
      %v1105 = vshrl.u32 %v1040, 16
      %v1107 = vrot.slane %v1105, 4
      %v1108 = vshll.u32 %v1040, 16
      %v1110 = vrot.slane %v1108, 5
      %v1111 = vor.u32 %v1107, %v1110
      %v1112 = vrot.slane %v1111, 4
      %v1114 = vshll.u32 %v1041, 16
      %v1116 = vrot.slane %v1114, 5
      %v1117 = vsel %vm249, %v1112, %v1116
      %v1119 = vshrl.u32 %v1042, 16
      %v1121 = vrot.slane %v1119, 4
      %v1122 = vshll.u32 %v1042, 16
      %v1124 = vrot.slane %v1122, 5
      %v1125 = vor.u32 %v1121, %v1124
      %v1126 = vrot.slane %v1125, 4
      %v1128 = vshll.u32 %v1043, 16
      %v1130 = vrot.slane %v1128, 5
      %v1131 = vsel %vm249, %v1126, %v1130
      %v1133 = vshrl.u32 %v1044, 16
      %v1135 = vrot.slane %v1133, 4
      %v1136 = vshll.u32 %v1044, 16
      %v1138 = vrot.slane %v1136, 5
      %v1139 = vor.u32 %v1135, %v1138
      %v1140 = vrot.slane %v1139, 4
      %v1142 = vshll.u32 %v1045, 16
      %v1144 = vrot.slane %v1142, 5
      %v1145 = vsel %vm249, %v1140, %v1144
      %v1147 = vshrl.u32 %v1046, 16
      %v1149 = vrot.slane %v1147, 4
      %v1150 = vshll.u32 %v1046, 16
      %v1152 = vrot.slane %v1150, 5
      %v1153 = vor.u32 %v1149, %v1152
      %v1154 = vrot.slane %v1153, 4
      %v1156 = vshll.u32 %v1047, 16
      %v1158 = vrot.slane %v1156, 5
      %v1159 = vsel %vm249, %v1154, %v1158
      %s1160 = scalar_lea.vmem %s1, 256
      %v1161 = vld [vmem:[%s1160] sm:$0xf]
      %v1162 = vld [vmem:[%s1160 + $0x4] sm:$0xf]
      %v1163 = vld [vmem:[%s1160 + $0x8] sm:$0xf]
      %v1164 = vld [vmem:[%s1160 + $0xc] sm:$0xf]
      %v1165 = vld [vmem:[%s1160 + $0x10] sm:$0xf]
      %v1166 = vld [vmem:[%s1160 + $0x14] sm:$0xf]
      %v1167 = vld [vmem:[%s1160 + $0x18] sm:$0xf]
      %v1168 = vld [vmem:[%s1160 + $0x1c] sm:$0xf]
      %v1169 = vld [vmem:[%s1160 + $0x20] sm:$0xf]
      %v1170 = vld [vmem:[%s1160 + $0x24] sm:$0xf]
      %v1171 = vld [vmem:[%s1160 + $0x28] sm:$0xf]
      %v1172 = vld [vmem:[%s1160 + $0x2c] sm:$0xf]
      %v1173 = vld [vmem:[%s1160 + $0x30] sm:$0xf]
      %v1174 = vld [vmem:[%s1160 + $0x34] sm:$0xf]
      %v1175 = vld [vmem:[%s1160 + $0x38] sm:$0xf]
      %v1176 = vld [vmem:[%s1160 + $0x3c] sm:$0xf]
      %v1177 = vunpack.c.l.b16 %v1061
      %v1178 = vunpack.c.l.b16 %v1075
      %v1179 = vunpack.c.l.b16 %v1089
      %v1180 = vunpack.c.l.b16 %v1103
      %v1181 = vunpack.c.l.b16 %v1117
      %v1182 = vunpack.c.l.b16 %v1131
      %v1183 = vunpack.c.l.b16 %v1145
      %v1184 = vunpack.c.l.b16 %v1159
      %v1185 = vpack.c.b16 %v1178, %v1177
      %v1186 = vpack.c.b16 %v1180, %v1179
      %v1187 = vpack.c.b16 %v1182, %v1181
      %v1188 = vpack.c.b16 %v1184, %v1183
      %v1209 = vunpack.c.l.b16 %v1161
      %v1210 = vunpack.c.l.b16 %v1162
      %v1211 = vunpack.c.l.b16 %v1163
      %v1212 = vunpack.c.l.b16 %v1164
      %v1213 = vunpack.c.l.b16 %v1165
      %v1214 = vunpack.c.l.b16 %v1166
      %v1215 = vunpack.c.l.b16 %v1167
      %v1216 = vunpack.c.l.b16 %v1168
      %v1217 = vunpack.c.l.b16 %v1169
      %v1218 = vunpack.c.l.b16 %v1170
      %v1219 = vunpack.c.l.b16 %v1171
      %v1220 = vunpack.c.l.b16 %v1172
      %v1221 = vunpack.c.l.b16 %v1173
      %v1222 = vunpack.c.l.b16 %v1174
      %v1223 = vunpack.c.l.b16 %v1175
      %v1224 = vunpack.c.l.b16 %v1176
      %v1225 = vpack.c.b16 %v1210, %v1209
      %v1226 = vpack.c.b16 %v1212, %v1211
      %v1227 = vpack.c.b16 %v1214, %v1213
      %v1228 = vpack.c.b16 %v1216, %v1215
      %v1229 = vpack.c.b16 %v1218, %v1217
      %v1230 = vpack.c.b16 %v1220, %v1219
      %v1231 = vpack.c.b16 %v1222, %v1221
      %v1232 = vpack.c.b16 %v1224, %v1223
      %1241 = vmatprep.subr.bf16.mxu0 0
      %1242 = vmatpush1.bf16.msra.mxu0 %v1232
      %1243 = vmatprep.subr.bf16.mxu0 0
      %1244 = vmatpush1.bf16.msra.mxu0 %v1231
      %1245 = vmatprep.subr.bf16.mxu0 0
      %1246 = vmatpush1.bf16.msra.mxu0 %v1230
      %1247 = vmatprep.subr.bf16.mxu0 0
      %1248 = vmatpush1.bf16.msra.mxu0 %v1229
      %1249 = vmatprep.subr.bf16.mxu0 0
      %1250 = vmatpush1.bf16.msra.mxu0 %v1228
      %1251 = vmatprep.subr.bf16.mxu0 0
      %1252 = vmatpush1.bf16.msra.mxu0 %v1227
      %1253 = vmatprep.subr.bf16.mxu0 0
      %1254 = vmatpush1.bf16.msra.mxu0 %v1226
      %1255 = vmatprep.subr.bf16.mxu0 0
      %1256 = vmatpush1.bf16.msra.mxu0 %v1225
      %1257 = vmatprep.subr.bf16.mxu0 0
      %1258 = vmatpush2.bf16.msra.mxu0 0
      %1259 = vmatprep.subr.bf16.mxu0 0
      %1260 = vmatpush2.bf16.msra.mxu0 0
      %1261 = vmatprep.subr.bf16.mxu0 0
      %1262 = vmatpush2.bf16.msra.mxu0 0
      %1263 = vmatprep.subr.bf16.mxu0 0
      %1264 = vmatpush2.bf16.msra.mxu0 0
      %1265 = vmatprep.subr.bf16.mxu0 0
      %1266 = vmatpush2.bf16.msra.mxu0 0
      %1267 = vmatprep.subr.bf16.mxu0 0
      %1268 = vmatpush2.bf16.msra.mxu0 0
      %1269 = vmatprep.subr.bf16.mxu0 0
      %1270 = vmatpush2.bf16.msra.mxu0 0
      %1271 = vmatprep.subr.bf16.mxu0 0
      %1272 = vmatpush2.bf16.msra.mxu0 0
      %1273 = vmatprep.mubr.bf16.mxu0 0
      %1274 = vmatmul.mubr.bf16.gmra.mxu0 %v1185
      %v1275 = vpop.f32.mrf.mxu0
      %v1276 = vadd.f32 0.0, %v1275
      %v1277 = vpop.f32.mrf.mxu0
      %v1278 = vpop.f32.mrf.mxu0
      %v1279 = vadd.f32 0.0, %v1278
      %v1280 = vpop.f32.mrf.mxu0
      %1281 = vmatprep.mubr.bf16.mxu0 0
      %1282 = vmatmul.mubr.bf16.gmra.mxu0 %v1186
      %v1283 = vpop.f32.mrf.mxu0
      %v1284 = vadd.f32 0.0, %v1283
      %v1285 = vpop.f32.mrf.mxu0
      %v1286 = vpop.f32.mrf.mxu0
      %v1287 = vadd.f32 0.0, %v1286
      %v1288 = vpop.f32.mrf.mxu0
      %1289 = vmatprep.mubr.bf16.mxu0 0
      %1290 = vmatmul.mubr.bf16.gmra.mxu0 %v1187
      %v1291 = vpop.f32.mrf.mxu0
      %v1292 = vadd.f32 0.0, %v1291
      %v1293 = vpop.f32.mrf.mxu0
      %v1294 = vpop.f32.mrf.mxu0
      %v1295 = vadd.f32 0.0, %v1294
      %v1296 = vpop.f32.mrf.mxu0
      %1297 = vmatprep.mubr.bf16.mxu0 0
      %1298 = vmatmul.mubr.bf16.gmra.mxu0 %v1188
      %v1299 = vpop.f32.mrf.mxu0
      %v1300 = vadd.f32 0.0, %v1299
      %v1301 = vpop.f32.mrf.mxu0
      %v1302 = vpop.f32.mrf.mxu0
      %v1303 = vadd.f32 0.0, %v1302
      %v1304 = vpop.f32.mrf.mxu0
      %1305 = vdwg.mxu0
      %v1306 = vadd.f32 %v1024, %v1276
      %v1307 = vadd.f32 %v1025, %v1279
      %v1308 = vadd.f32 %v1026, %v1284
      %v1309 = vadd.f32 %v1027, %v1287
      %v1310 = vadd.f32 %v1028, %v1292
      %v1311 = vadd.f32 %v1029, %v1295
      %v1312 = vadd.f32 %v1030, %v1300
      %v1313 = vadd.f32 %v1031, %v1303
      %v1314 = vld [vmem:[%s861] sm:$0xe]
      %v1315 = vld [vmem:[%s861 + $0x8] sm:$0xe]
      %v1316 = vld [vmem:[%s861 + $0x10] sm:$0xe]
      %v1317 = vld [vmem:[%s861 + $0x18] sm:$0xe]
      %v1318 = vld [vmem:[%s861 + $0x20] sm:$0xe]
      %v1319 = vld [vmem:[%s861 + $0x28] sm:$0xe]
      %v1320 = vld [vmem:[%s861 + $0x30] sm:$0xe]
      %v1321 = vld [vmem:[%s861 + $0x38] sm:$0xe]
      %v1338 = vrot.slane %v1314, 5
      %v1339 = vrot.slane %v1338, 4
      %v1340 = vrot.slane %v1033, 5
      %v1341 = vsel %vm671, %v1339, %v1340
      %v1342 = vrot.slane %v1315, 5
      %v1343 = vrot.slane %v1342, 4
      %v1344 = vrot.slane %v1035, 5
      %v1345 = vsel %vm671, %v1343, %v1344
      %v1346 = vrot.slane %v1316, 5
      %v1347 = vrot.slane %v1346, 4
      %v1348 = vrot.slane %v1037, 5
      %v1349 = vsel %vm671, %v1347, %v1348
      %v1350 = vrot.slane %v1317, 5
      %v1351 = vrot.slane %v1350, 4
      %v1352 = vrot.slane %v1039, 5
      %v1353 = vsel %vm671, %v1351, %v1352
      %v1354 = vrot.slane %v1318, 5
      %v1355 = vrot.slane %v1354, 4
      %v1356 = vrot.slane %v1041, 5
      %v1357 = vsel %vm671, %v1355, %v1356
      %v1358 = vrot.slane %v1319, 5
      %v1359 = vrot.slane %v1358, 4
      %v1360 = vrot.slane %v1043, 5
      %v1361 = vsel %vm671, %v1359, %v1360
      %v1362 = vrot.slane %v1320, 5
      %v1363 = vrot.slane %v1362, 4
      %v1364 = vrot.slane %v1045, 5
      %v1365 = vsel %vm671, %v1363, %v1364
      %v1366 = vrot.slane %v1321, 5
      %v1367 = vrot.slane %v1366, 4
      %v1368 = vrot.slane %v1047, 5
      %v1369 = vsel %vm671, %v1367, %v1368
      %s1370 = scalar_lea.vmem %s1, 320
      %v1371 = vld [vmem:[%s1370] sm:$0xf]
      %v1372 = vld [vmem:[%s1370 + $0x4] sm:$0xf]
      %v1373 = vld [vmem:[%s1370 + $0x8] sm:$0xf]
      %v1374 = vld [vmem:[%s1370 + $0xc] sm:$0xf]
      %v1375 = vld [vmem:[%s1370 + $0x10] sm:$0xf]
      %v1376 = vld [vmem:[%s1370 + $0x14] sm:$0xf]
      %v1377 = vld [vmem:[%s1370 + $0x18] sm:$0xf]
      %v1378 = vld [vmem:[%s1370 + $0x1c] sm:$0xf]
      %v1379 = vld [vmem:[%s1370 + $0x20] sm:$0xf]
      %v1380 = vld [vmem:[%s1370 + $0x24] sm:$0xf]
      %v1381 = vld [vmem:[%s1370 + $0x28] sm:$0xf]
      %v1382 = vld [vmem:[%s1370 + $0x2c] sm:$0xf]
      %v1383 = vld [vmem:[%s1370 + $0x30] sm:$0xf]
      %v1384 = vld [vmem:[%s1370 + $0x34] sm:$0xf]
      %v1385 = vld [vmem:[%s1370 + $0x38] sm:$0xf]
      %v1386 = vld [vmem:[%s1370 + $0x3c] sm:$0xf]
      %v1387 = vunpack.c.l.b16 %v1341
      %v1388 = vunpack.c.l.b16 %v1345
      %v1389 = vunpack.c.l.b16 %v1349
      %v1390 = vunpack.c.l.b16 %v1353
      %v1391 = vunpack.c.l.b16 %v1357
      %v1392 = vunpack.c.l.b16 %v1361
      %v1393 = vunpack.c.l.b16 %v1365
      %v1394 = vunpack.c.l.b16 %v1369
      %v1395 = vpack.c.b16 %v1388, %v1387
      %v1396 = vpack.c.b16 %v1390, %v1389
      %v1397 = vpack.c.b16 %v1392, %v1391
      %v1398 = vpack.c.b16 %v1394, %v1393
      %v1419 = vunpack.c.l.b16 %v1371
      %v1420 = vunpack.c.l.b16 %v1372
      %v1421 = vunpack.c.l.b16 %v1373
      %v1422 = vunpack.c.l.b16 %v1374
      %v1423 = vunpack.c.l.b16 %v1375
      %v1424 = vunpack.c.l.b16 %v1376
      %v1425 = vunpack.c.l.b16 %v1377
      %v1426 = vunpack.c.l.b16 %v1378
      %v1427 = vunpack.c.l.b16 %v1379
      %v1428 = vunpack.c.l.b16 %v1380
      %v1429 = vunpack.c.l.b16 %v1381
      %v1430 = vunpack.c.l.b16 %v1382
      %v1431 = vunpack.c.l.b16 %v1383
      %v1432 = vunpack.c.l.b16 %v1384
      %v1433 = vunpack.c.l.b16 %v1385
      %v1434 = vunpack.c.l.b16 %v1386
      %v1435 = vpack.c.b16 %v1420, %v1419
      %v1436 = vpack.c.b16 %v1422, %v1421
      %v1437 = vpack.c.b16 %v1424, %v1423
      %v1438 = vpack.c.b16 %v1426, %v1425
      %v1439 = vpack.c.b16 %v1428, %v1427
      %v1440 = vpack.c.b16 %v1430, %v1429
      %v1441 = vpack.c.b16 %v1432, %v1431
      %v1442 = vpack.c.b16 %v1434, %v1433
      %1451 = vmatprep.subr.bf16.mxu0 0
      %1452 = vmatpush1.bf16.msra.mxu0 %v1442
      %1453 = vmatprep.subr.bf16.mxu0 0
      %1454 = vmatpush1.bf16.msra.mxu0 %v1441
      %1455 = vmatprep.subr.bf16.mxu0 0
      %1456 = vmatpush1.bf16.msra.mxu0 %v1440
      %1457 = vmatprep.subr.bf16.mxu0 0
      %1458 = vmatpush1.bf16.msra.mxu0 %v1439
      %1459 = vmatprep.subr.bf16.mxu0 0
      %1460 = vmatpush1.bf16.msra.mxu0 %v1438
      %1461 = vmatprep.subr.bf16.mxu0 0
      %1462 = vmatpush1.bf16.msra.mxu0 %v1437
      %1463 = vmatprep.subr.bf16.mxu0 0
      %1464 = vmatpush1.bf16.msra.mxu0 %v1436
      %1465 = vmatprep.subr.bf16.mxu0 0
      %1466 = vmatpush1.bf16.msra.mxu0 %v1435
      %1467 = vmatprep.subr.bf16.mxu0 0
      %1468 = vmatpush2.bf16.msra.mxu0 0
      %1469 = vmatprep.subr.bf16.mxu0 0
      %1470 = vmatpush2.bf16.msra.mxu0 0
      %1471 = vmatprep.subr.bf16.mxu0 0
      %1472 = vmatpush2.bf16.msra.mxu0 0
      %1473 = vmatprep.subr.bf16.mxu0 0
      %1474 = vmatpush2.bf16.msra.mxu0 0
      %1475 = vmatprep.subr.bf16.mxu0 0
      %1476 = vmatpush2.bf16.msra.mxu0 0
      %1477 = vmatprep.subr.bf16.mxu0 0
      %1478 = vmatpush2.bf16.msra.mxu0 0
      %1479 = vmatprep.subr.bf16.mxu0 0
      %1480 = vmatpush2.bf16.msra.mxu0 0
      %1481 = vmatprep.subr.bf16.mxu0 0
      %1482 = vmatpush2.bf16.msra.mxu0 0
      %1483 = vmatprep.mubr.bf16.mxu0 0
      %1484 = vmatmul.mubr.bf16.gmra.mxu0 %v1395
      %v1485 = vpop.f32.mrf.mxu0
      %v1486 = vadd.f32 0.0, %v1485
      %v1487 = vpop.f32.mrf.mxu0
      %v1488 = vpop.f32.mrf.mxu0
      %v1489 = vadd.f32 0.0, %v1488
      %v1490 = vpop.f32.mrf.mxu0
      %1491 = vmatprep.mubr.bf16.mxu0 0
      %1492 = vmatmul.mubr.bf16.gmra.mxu0 %v1396
      %v1493 = vpop.f32.mrf.mxu0
      %v1494 = vadd.f32 0.0, %v1493
      %v1495 = vpop.f32.mrf.mxu0
      %v1496 = vpop.f32.mrf.mxu0
      %v1497 = vadd.f32 0.0, %v1496
      %v1498 = vpop.f32.mrf.mxu0
      %1499 = vmatprep.mubr.bf16.mxu0 0
      %1500 = vmatmul.mubr.bf16.gmra.mxu0 %v1397
      %v1501 = vpop.f32.mrf.mxu0
      %v1502 = vadd.f32 0.0, %v1501
      %v1503 = vpop.f32.mrf.mxu0
      %v1504 = vpop.f32.mrf.mxu0
      %v1505 = vadd.f32 0.0, %v1504
      %v1506 = vpop.f32.mrf.mxu0
      %1507 = vmatprep.mubr.bf16.mxu0 0
      %1508 = vmatmul.mubr.bf16.gmra.mxu0 %v1398
      %v1509 = vpop.f32.mrf.mxu0
      %v1510 = vadd.f32 0.0, %v1509
      %v1511 = vpop.f32.mrf.mxu0
      %v1512 = vpop.f32.mrf.mxu0
      %v1513 = vadd.f32 0.0, %v1512
      %v1514 = vpop.f32.mrf.mxu0
      %1515 = vdwg.mxu0
      %v1516 = vadd.f32 %v1306, %v1486
      %v1517 = vadd.f32 %v1307, %v1489
      %v1518 = vadd.f32 %v1308, %v1494
      %v1519 = vadd.f32 %v1309, %v1497
      %v1520 = vadd.f32 %v1310, %v1502
      %v1521 = vadd.f32 %v1311, %v1505
      %v1522 = vadd.f32 %v1312, %v1510
      %v1523 = vadd.f32 %v1313, %v1513
      %s1524 = sadd.s32 %s211, 2
      %s1525 = smul.u32 %s1524, 2
      %s1526 = smul.addr %s1525, 4
      %s1527 = scalar_lea.vmem %s193, %s1526
      %v1528 = vld [vmem:[%s1527] sm:$0xf]
      %v1529 = vld [vmem:[%s1527 + $0x8] sm:$0xf]
      %v1530 = vld [vmem:[%s1527 + $0x10] sm:$0xf]
      %v1531 = vld [vmem:[%s1527 + $0x18] sm:$0xf]
      %v1532 = vld [vmem:[%s1527 + $0x20] sm:$0xf]
      %v1533 = vld [vmem:[%s1527 + $0x28] sm:$0xf]
      %v1534 = vld [vmem:[%s1527 + $0x30] sm:$0xf]
      %v1535 = vld [vmem:[%s1527 + $0x38] sm:$0xf]
      %s1536 = scalar_lea.vmem %s1, 384
      %v1537 = vld [vmem:[%s1536] sm:$0xf]
      %v1538 = vld [vmem:[%s1536 + $0x4] sm:$0xf]
      %v1539 = vld [vmem:[%s1536 + $0x8] sm:$0xf]
      %v1540 = vld [vmem:[%s1536 + $0xc] sm:$0xf]
      %v1541 = vld [vmem:[%s1536 + $0x10] sm:$0xf]
      %v1542 = vld [vmem:[%s1536 + $0x14] sm:$0xf]
      %v1543 = vld [vmem:[%s1536 + $0x18] sm:$0xf]
      %v1544 = vld [vmem:[%s1536 + $0x1c] sm:$0xf]
      %v1545 = vld [vmem:[%s1536 + $0x20] sm:$0xf]
      %v1546 = vld [vmem:[%s1536 + $0x24] sm:$0xf]
      %v1547 = vld [vmem:[%s1536 + $0x28] sm:$0xf]
      %v1548 = vld [vmem:[%s1536 + $0x2c] sm:$0xf]
      %v1549 = vld [vmem:[%s1536 + $0x30] sm:$0xf]
      %v1550 = vld [vmem:[%s1536 + $0x34] sm:$0xf]
      %v1551 = vld [vmem:[%s1536 + $0x38] sm:$0xf]
      %v1552 = vld [vmem:[%s1536 + $0x3c] sm:$0xf]
      %v1561 = vunpack.c.l.b16 %v1528
      %v1562 = vunpack.c.l.b16 %v1529
      %v1563 = vunpack.c.l.b16 %v1530
      %v1564 = vunpack.c.l.b16 %v1531
      %v1565 = vunpack.c.l.b16 %v1532
      %v1566 = vunpack.c.l.b16 %v1533
      %v1567 = vunpack.c.l.b16 %v1534
      %v1568 = vunpack.c.l.b16 %v1535
      %v1569 = vpack.c.b16 %v1562, %v1561
      %v1570 = vpack.c.b16 %v1564, %v1563
      %v1571 = vpack.c.b16 %v1566, %v1565
      %v1572 = vpack.c.b16 %v1568, %v1567
      %v1593 = vunpack.c.l.b16 %v1537
      %v1594 = vunpack.c.l.b16 %v1538
      %v1595 = vunpack.c.l.b16 %v1539
      %v1596 = vunpack.c.l.b16 %v1540
      %v1597 = vunpack.c.l.b16 %v1541
      %v1598 = vunpack.c.l.b16 %v1542
      %v1599 = vunpack.c.l.b16 %v1543
      %v1600 = vunpack.c.l.b16 %v1544
      %v1601 = vunpack.c.l.b16 %v1545
      %v1602 = vunpack.c.l.b16 %v1546
      %v1603 = vunpack.c.l.b16 %v1547
      %v1604 = vunpack.c.l.b16 %v1548
      %v1605 = vunpack.c.l.b16 %v1549
      %v1606 = vunpack.c.l.b16 %v1550
      %v1607 = vunpack.c.l.b16 %v1551
      %v1608 = vunpack.c.l.b16 %v1552
      %v1609 = vpack.c.b16 %v1594, %v1593
      %v1610 = vpack.c.b16 %v1596, %v1595
      %v1611 = vpack.c.b16 %v1598, %v1597
      %v1612 = vpack.c.b16 %v1600, %v1599
      %v1613 = vpack.c.b16 %v1602, %v1601
      %v1614 = vpack.c.b16 %v1604, %v1603
      %v1615 = vpack.c.b16 %v1606, %v1605
      %v1616 = vpack.c.b16 %v1608, %v1607
      %1625 = vmatprep.subr.bf16.mxu0 0
      %1626 = vmatpush1.bf16.msra.mxu0 %v1616
      %1627 = vmatprep.subr.bf16.mxu0 0
      %1628 = vmatpush1.bf16.msra.mxu0 %v1615
      %1629 = vmatprep.subr.bf16.mxu0 0
      %1630 = vmatpush1.bf16.msra.mxu0 %v1614
      %1631 = vmatprep.subr.bf16.mxu0 0
      %1632 = vmatpush1.bf16.msra.mxu0 %v1613
      %1633 = vmatprep.subr.bf16.mxu0 0
      %1634 = vmatpush1.bf16.msra.mxu0 %v1612
      %1635 = vmatprep.subr.bf16.mxu0 0
      %1636 = vmatpush1.bf16.msra.mxu0 %v1611
      %1637 = vmatprep.subr.bf16.mxu0 0
      %1638 = vmatpush1.bf16.msra.mxu0 %v1610
      %1639 = vmatprep.subr.bf16.mxu0 0
      %1640 = vmatpush1.bf16.msra.mxu0 %v1609
      %1641 = vmatprep.subr.bf16.mxu0 0
      %1642 = vmatpush2.bf16.msra.mxu0 0
      %1643 = vmatprep.subr.bf16.mxu0 0
      %1644 = vmatpush2.bf16.msra.mxu0 0
      %1645 = vmatprep.subr.bf16.mxu0 0
      %1646 = vmatpush2.bf16.msra.mxu0 0
      %1647 = vmatprep.subr.bf16.mxu0 0
      %1648 = vmatpush2.bf16.msra.mxu0 0
      %1649 = vmatprep.subr.bf16.mxu0 0
      %1650 = vmatpush2.bf16.msra.mxu0 0
      %1651 = vmatprep.subr.bf16.mxu0 0
      %1652 = vmatpush2.bf16.msra.mxu0 0
      %1653 = vmatprep.subr.bf16.mxu0 0
      %1654 = vmatpush2.bf16.msra.mxu0 0
      %1655 = vmatprep.subr.bf16.mxu0 0
      %1656 = vmatpush2.bf16.msra.mxu0 0
      %1657 = vmatprep.mubr.bf16.mxu0 0
      %1658 = vmatmul.mubr.bf16.gmra.mxu0 %v1569
      %v1659 = vpop.f32.mrf.mxu0
      %v1660 = vadd.f32 0.0, %v1659
      %v1661 = vpop.f32.mrf.mxu0
      %v1662 = vpop.f32.mrf.mxu0
      %v1663 = vadd.f32 0.0, %v1662
      %v1664 = vpop.f32.mrf.mxu0
      %1665 = vmatprep.mubr.bf16.mxu0 0
      %1666 = vmatmul.mubr.bf16.gmra.mxu0 %v1570
      %v1667 = vpop.f32.mrf.mxu0
      %v1668 = vadd.f32 0.0, %v1667
      %v1669 = vpop.f32.mrf.mxu0
      %v1670 = vpop.f32.mrf.mxu0
      %v1671 = vadd.f32 0.0, %v1670
      %v1672 = vpop.f32.mrf.mxu0
      %1673 = vmatprep.mubr.bf16.mxu0 0
      %1674 = vmatmul.mubr.bf16.gmra.mxu0 %v1571
      %v1675 = vpop.f32.mrf.mxu0
      %v1676 = vadd.f32 0.0, %v1675
      %v1677 = vpop.f32.mrf.mxu0
      %v1678 = vpop.f32.mrf.mxu0
      %v1679 = vadd.f32 0.0, %v1678
      %v1680 = vpop.f32.mrf.mxu0
      %1681 = vmatprep.mubr.bf16.mxu0 0
      %1682 = vmatmul.mubr.bf16.gmra.mxu0 %v1572
      %v1683 = vpop.f32.mrf.mxu0
      %v1684 = vadd.f32 0.0, %v1683
      %v1685 = vpop.f32.mrf.mxu0
      %v1686 = vpop.f32.mrf.mxu0
      %v1687 = vadd.f32 0.0, %v1686
      %v1688 = vpop.f32.mrf.mxu0
      %1689 = vdwg.mxu0
      %v1690 = vadd.f32 %v1516, %v1660
      %v1691 = vadd.f32 %v1517, %v1663
      %v1692 = vadd.f32 %v1518, %v1668
      %v1693 = vadd.f32 %v1519, %v1671
      %v1694 = vadd.f32 %v1520, %v1676
      %v1695 = vadd.f32 %v1521, %v1679
      %v1696 = vadd.f32 %v1522, %v1684
      %v1697 = vadd.f32 %v1523, %v1687
      %v1698 = vld [vmem:[%s1527] sm:$0xf]
      %v1699 = vld [vmem:[%s1527 + $0x4] sm:$0x1]
      %v1700 = vld [vmem:[%s1527 + $0x8] sm:$0xf]
      %v1701 = vld [vmem:[%s1527 + $0xc] sm:$0x1]
      %v1702 = vld [vmem:[%s1527 + $0x10] sm:$0xf]
      %v1703 = vld [vmem:[%s1527 + $0x14] sm:$0x1]
      %v1704 = vld [vmem:[%s1527 + $0x18] sm:$0xf]
      %v1705 = vld [vmem:[%s1527 + $0x1c] sm:$0x1]
      %v1706 = vld [vmem:[%s1527 + $0x20] sm:$0xf]
      %v1707 = vld [vmem:[%s1527 + $0x24] sm:$0x1]
      %v1708 = vld [vmem:[%s1527 + $0x28] sm:$0xf]
      %v1709 = vld [vmem:[%s1527 + $0x2c] sm:$0x1]
      %v1710 = vld [vmem:[%s1527 + $0x30] sm:$0xf]
      %v1711 = vld [vmem:[%s1527 + $0x34] sm:$0x1]
      %v1712 = vld [vmem:[%s1527 + $0x38] sm:$0xf]
      %v1713 = vld [vmem:[%s1527 + $0x3c] sm:$0x1]
      %v1715 = vshrl.u32 %v1698, 16
      %v1717 = vrot.slane %v1715, 4
      %v1718 = vshll.u32 %v1698, 16
      %v1720 = vrot.slane %v1718, 5
      %v1721 = vor.u32 %v1717, %v1720
      %v1722 = vrot.slane %v1721, 4
      %v1724 = vshll.u32 %v1699, 16
      %v1726 = vrot.slane %v1724, 5
      %v1727 = vsel %vm249, %v1722, %v1726
      %v1729 = vshrl.u32 %v1700, 16
      %v1731 = vrot.slane %v1729, 4
      %v1732 = vshll.u32 %v1700, 16
      %v1734 = vrot.slane %v1732, 5
      %v1735 = vor.u32 %v1731, %v1734
      %v1736 = vrot.slane %v1735, 4
      %v1738 = vshll.u32 %v1701, 16
      %v1740 = vrot.slane %v1738, 5
      %v1741 = vsel %vm249, %v1736, %v1740
      %v1743 = vshrl.u32 %v1702, 16
      %v1745 = vrot.slane %v1743, 4
      %v1746 = vshll.u32 %v1702, 16
      %v1748 = vrot.slane %v1746, 5
      %v1749 = vor.u32 %v1745, %v1748
      %v1750 = vrot.slane %v1749, 4
      %v1752 = vshll.u32 %v1703, 16
      %v1754 = vrot.slane %v1752, 5
      %v1755 = vsel %vm249, %v1750, %v1754
      %v1757 = vshrl.u32 %v1704, 16
      %v1759 = vrot.slane %v1757, 4
      %v1760 = vshll.u32 %v1704, 16
      %v1762 = vrot.slane %v1760, 5
      %v1763 = vor.u32 %v1759, %v1762
      %v1764 = vrot.slane %v1763, 4
      %v1766 = vshll.u32 %v1705, 16
      %v1768 = vrot.slane %v1766, 5
      %v1769 = vsel %vm249, %v1764, %v1768
      %v1771 = vshrl.u32 %v1706, 16
      %v1773 = vrot.slane %v1771, 4
      %v1774 = vshll.u32 %v1706, 16
      %v1776 = vrot.slane %v1774, 5
      %v1777 = vor.u32 %v1773, %v1776
      %v1778 = vrot.slane %v1777, 4
      %v1780 = vshll.u32 %v1707, 16
      %v1782 = vrot.slane %v1780, 5
      %v1783 = vsel %vm249, %v1778, %v1782
      %v1785 = vshrl.u32 %v1708, 16
      %v1787 = vrot.slane %v1785, 4
      %v1788 = vshll.u32 %v1708, 16
      %v1790 = vrot.slane %v1788, 5
      %v1791 = vor.u32 %v1787, %v1790
      %v1792 = vrot.slane %v1791, 4
      %v1794 = vshll.u32 %v1709, 16
      %v1796 = vrot.slane %v1794, 5
      %v1797 = vsel %vm249, %v1792, %v1796
      %v1799 = vshrl.u32 %v1710, 16
      %v1801 = vrot.slane %v1799, 4
      %v1802 = vshll.u32 %v1710, 16
      %v1804 = vrot.slane %v1802, 5
      %v1805 = vor.u32 %v1801, %v1804
      %v1806 = vrot.slane %v1805, 4
      %v1808 = vshll.u32 %v1711, 16
      %v1810 = vrot.slane %v1808, 5
      %v1811 = vsel %vm249, %v1806, %v1810
      %v1813 = vshrl.u32 %v1712, 16
      %v1815 = vrot.slane %v1813, 4
      %v1816 = vshll.u32 %v1712, 16
      %v1818 = vrot.slane %v1816, 5
      %v1819 = vor.u32 %v1815, %v1818
      %v1820 = vrot.slane %v1819, 4
      %v1822 = vshll.u32 %v1713, 16
      %v1824 = vrot.slane %v1822, 5
      %v1825 = vsel %vm249, %v1820, %v1824
      %s1826 = scalar_lea.vmem %s1, 448
      %v1827 = vld [vmem:[%s1826] sm:$0xf]
      %v1828 = vld [vmem:[%s1826 + $0x4] sm:$0xf]
      %v1829 = vld [vmem:[%s1826 + $0x8] sm:$0xf]
      %v1830 = vld [vmem:[%s1826 + $0xc] sm:$0xf]
      %v1831 = vld [vmem:[%s1826 + $0x10] sm:$0xf]
      %v1832 = vld [vmem:[%s1826 + $0x14] sm:$0xf]
      %v1833 = vld [vmem:[%s1826 + $0x18] sm:$0xf]
      %v1834 = vld [vmem:[%s1826 + $0x1c] sm:$0xf]
      %v1835 = vld [vmem:[%s1826 + $0x20] sm:$0xf]
      %v1836 = vld [vmem:[%s1826 + $0x24] sm:$0xf]
      %v1837 = vld [vmem:[%s1826 + $0x28] sm:$0xf]
      %v1838 = vld [vmem:[%s1826 + $0x2c] sm:$0xf]
      %v1839 = vld [vmem:[%s1826 + $0x30] sm:$0xf]
      %v1840 = vld [vmem:[%s1826 + $0x34] sm:$0xf]
      %v1841 = vld [vmem:[%s1826 + $0x38] sm:$0xf]
      %v1842 = vld [vmem:[%s1826 + $0x3c] sm:$0xf]
      %v1843 = vunpack.c.l.b16 %v1727
      %v1844 = vunpack.c.l.b16 %v1741
      %v1845 = vunpack.c.l.b16 %v1755
      %v1846 = vunpack.c.l.b16 %v1769
      %v1847 = vunpack.c.l.b16 %v1783
      %v1848 = vunpack.c.l.b16 %v1797
      %v1849 = vunpack.c.l.b16 %v1811
      %v1850 = vunpack.c.l.b16 %v1825
      %v1851 = vpack.c.b16 %v1844, %v1843
      %v1852 = vpack.c.b16 %v1846, %v1845
      %v1853 = vpack.c.b16 %v1848, %v1847
      %v1854 = vpack.c.b16 %v1850, %v1849
      %v1875 = vunpack.c.l.b16 %v1827
      %v1876 = vunpack.c.l.b16 %v1828
      %v1877 = vunpack.c.l.b16 %v1829
      %v1878 = vunpack.c.l.b16 %v1830
      %v1879 = vunpack.c.l.b16 %v1831
      %v1880 = vunpack.c.l.b16 %v1832
      %v1881 = vunpack.c.l.b16 %v1833
      %v1882 = vunpack.c.l.b16 %v1834
      %v1883 = vunpack.c.l.b16 %v1835
      %v1884 = vunpack.c.l.b16 %v1836
      %v1885 = vunpack.c.l.b16 %v1837
      %v1886 = vunpack.c.l.b16 %v1838
      %v1887 = vunpack.c.l.b16 %v1839
      %v1888 = vunpack.c.l.b16 %v1840
      %v1889 = vunpack.c.l.b16 %v1841
      %v1890 = vunpack.c.l.b16 %v1842
      %v1891 = vpack.c.b16 %v1876, %v1875
      %v1892 = vpack.c.b16 %v1878, %v1877
      %v1893 = vpack.c.b16 %v1880, %v1879
      %v1894 = vpack.c.b16 %v1882, %v1881
      %v1895 = vpack.c.b16 %v1884, %v1883
      %v1896 = vpack.c.b16 %v1886, %v1885
      %v1897 = vpack.c.b16 %v1888, %v1887
      %v1898 = vpack.c.b16 %v1890, %v1889
      %1907 = vmatprep.subr.bf16.mxu0 0
      %1908 = vmatpush1.bf16.msra.mxu0 %v1898
      %1909 = vmatprep.subr.bf16.mxu0 0
      %1910 = vmatpush1.bf16.msra.mxu0 %v1897
      %1911 = vmatprep.subr.bf16.mxu0 0
      %1912 = vmatpush1.bf16.msra.mxu0 %v1896
      %1913 = vmatprep.subr.bf16.mxu0 0
      %1914 = vmatpush1.bf16.msra.mxu0 %v1895
      %1915 = vmatprep.subr.bf16.mxu0 0
      %1916 = vmatpush1.bf16.msra.mxu0 %v1894
      %1917 = vmatprep.subr.bf16.mxu0 0
      %1918 = vmatpush1.bf16.msra.mxu0 %v1893
      %1919 = vmatprep.subr.bf16.mxu0 0
      %1920 = vmatpush1.bf16.msra.mxu0 %v1892
      %1921 = vmatprep.subr.bf16.mxu0 0
      %1922 = vmatpush1.bf16.msra.mxu0 %v1891
      %1923 = vmatprep.subr.bf16.mxu0 0
      %1924 = vmatpush2.bf16.msra.mxu0 0
      %1925 = vmatprep.subr.bf16.mxu0 0
      %1926 = vmatpush2.bf16.msra.mxu0 0
      %1927 = vmatprep.subr.bf16.mxu0 0
      %1928 = vmatpush2.bf16.msra.mxu0 0
      %1929 = vmatprep.subr.bf16.mxu0 0
      %1930 = vmatpush2.bf16.msra.mxu0 0
      %1931 = vmatprep.subr.bf16.mxu0 0
      %1932 = vmatpush2.bf16.msra.mxu0 0
      %1933 = vmatprep.subr.bf16.mxu0 0
      %1934 = vmatpush2.bf16.msra.mxu0 0
      %1935 = vmatprep.subr.bf16.mxu0 0
      %1936 = vmatpush2.bf16.msra.mxu0 0
      %1937 = vmatprep.subr.bf16.mxu0 0
      %1938 = vmatpush2.bf16.msra.mxu0 0
      %1939 = vmatprep.mubr.bf16.mxu0 0
      %1940 = vmatmul.mubr.bf16.gmra.mxu0 %v1851
      %v1941 = vpop.f32.mrf.mxu0
      %v1942 = vadd.f32 0.0, %v1941
      %v1943 = vpop.f32.mrf.mxu0
      %v1944 = vpop.f32.mrf.mxu0
      %v1945 = vadd.f32 0.0, %v1944
      %v1946 = vpop.f32.mrf.mxu0
      %1947 = vmatprep.mubr.bf16.mxu0 0
      %1948 = vmatmul.mubr.bf16.gmra.mxu0 %v1852
      %v1949 = vpop.f32.mrf.mxu0
      %v1950 = vadd.f32 0.0, %v1949
      %v1951 = vpop.f32.mrf.mxu0
      %v1952 = vpop.f32.mrf.mxu0
      %v1953 = vadd.f32 0.0, %v1952
      %v1954 = vpop.f32.mrf.mxu0
      %1955 = vmatprep.mubr.bf16.mxu0 0
      %1956 = vmatmul.mubr.bf16.gmra.mxu0 %v1853
      %v1957 = vpop.f32.mrf.mxu0
      %v1958 = vadd.f32 0.0, %v1957
      %v1959 = vpop.f32.mrf.mxu0
      %v1960 = vpop.f32.mrf.mxu0
      %v1961 = vadd.f32 0.0, %v1960
      %v1962 = vpop.f32.mrf.mxu0
      %1963 = vmatprep.mubr.bf16.mxu0 0
      %1964 = vmatmul.mubr.bf16.gmra.mxu0 %v1854
      %v1965 = vpop.f32.mrf.mxu0
      %v1966 = vadd.f32 0.0, %v1965
      %v1967 = vpop.f32.mrf.mxu0
      %v1968 = vpop.f32.mrf.mxu0
      %v1969 = vadd.f32 0.0, %v1968
      %v1970 = vpop.f32.mrf.mxu0
      %1971 = vdwg.mxu0
      %v1972 = vadd.f32 %v1690, %v1942
      %v1973 = vadd.f32 %v1691, %v1945
      %v1974 = vadd.f32 %v1692, %v1950
      %v1975 = vadd.f32 %v1693, %v1953
      %v1976 = vadd.f32 %v1694, %v1958
      %v1977 = vadd.f32 %v1695, %v1961
      %v1978 = vadd.f32 %v1696, %v1966
      %v1979 = vadd.f32 %v1697, %v1969
      %v1980 = vld [vmem:[%s1527] sm:$0xe]
      %v1981 = vld [vmem:[%s1527 + $0x8] sm:$0xe]
      %v1982 = vld [vmem:[%s1527 + $0x10] sm:$0xe]
      %v1983 = vld [vmem:[%s1527 + $0x18] sm:$0xe]
      %v1984 = vld [vmem:[%s1527 + $0x20] sm:$0xe]
      %v1985 = vld [vmem:[%s1527 + $0x28] sm:$0xe]
      %v1986 = vld [vmem:[%s1527 + $0x30] sm:$0xe]
      %v1987 = vld [vmem:[%s1527 + $0x38] sm:$0xe]
      %v2004 = vrot.slane %v1980, 5
      %v2005 = vrot.slane %v2004, 4
      %v2006 = vrot.slane %v1699, 5
      %v2007 = vsel %vm671, %v2005, %v2006
      %v2008 = vrot.slane %v1981, 5
      %v2009 = vrot.slane %v2008, 4
      %v2010 = vrot.slane %v1701, 5
      %v2011 = vsel %vm671, %v2009, %v2010
      %v2012 = vrot.slane %v1982, 5
      %v2013 = vrot.slane %v2012, 4
      %v2014 = vrot.slane %v1703, 5
      %v2015 = vsel %vm671, %v2013, %v2014
      %v2016 = vrot.slane %v1983, 5
      %v2017 = vrot.slane %v2016, 4
      %v2018 = vrot.slane %v1705, 5
      %v2019 = vsel %vm671, %v2017, %v2018
      %v2020 = vrot.slane %v1984, 5
      %v2021 = vrot.slane %v2020, 4
      %v2022 = vrot.slane %v1707, 5
      %v2023 = vsel %vm671, %v2021, %v2022
      %v2024 = vrot.slane %v1985, 5
      %v2025 = vrot.slane %v2024, 4
      %v2026 = vrot.slane %v1709, 5
      %v2027 = vsel %vm671, %v2025, %v2026
      %v2028 = vrot.slane %v1986, 5
      %v2029 = vrot.slane %v2028, 4
      %v2030 = vrot.slane %v1711, 5
      %v2031 = vsel %vm671, %v2029, %v2030
      %v2032 = vrot.slane %v1987, 5
      %v2033 = vrot.slane %v2032, 4
      %v2034 = vrot.slane %v1713, 5
      %v2035 = vsel %vm671, %v2033, %v2034
      %s2036 = scalar_lea.vmem %s1, 512
      %v2037 = vld [vmem:[%s2036] sm:$0xf]
      %v2038 = vld [vmem:[%s2036 + $0x4] sm:$0xf]
      %v2039 = vld [vmem:[%s2036 + $0x8] sm:$0xf]
      %v2040 = vld [vmem:[%s2036 + $0xc] sm:$0xf]
      %v2041 = vld [vmem:[%s2036 + $0x10] sm:$0xf]
      %v2042 = vld [vmem:[%s2036 + $0x14] sm:$0xf]
      %v2043 = vld [vmem:[%s2036 + $0x18] sm:$0xf]
      %v2044 = vld [vmem:[%s2036 + $0x1c] sm:$0xf]
      %v2045 = vld [vmem:[%s2036 + $0x20] sm:$0xf]
      %v2046 = vld [vmem:[%s2036 + $0x24] sm:$0xf]
      %v2047 = vld [vmem:[%s2036 + $0x28] sm:$0xf]
      %v2048 = vld [vmem:[%s2036 + $0x2c] sm:$0xf]
      %v2049 = vld [vmem:[%s2036 + $0x30] sm:$0xf]
      %v2050 = vld [vmem:[%s2036 + $0x34] sm:$0xf]
      %v2051 = vld [vmem:[%s2036 + $0x38] sm:$0xf]
      %v2052 = vld [vmem:[%s2036 + $0x3c] sm:$0xf]
      %v2053 = vunpack.c.l.b16 %v2007
      %v2054 = vunpack.c.l.b16 %v2011
      %v2055 = vunpack.c.l.b16 %v2015
      %v2056 = vunpack.c.l.b16 %v2019
      %v2057 = vunpack.c.l.b16 %v2023
      %v2058 = vunpack.c.l.b16 %v2027
      %v2059 = vunpack.c.l.b16 %v2031
      %v2060 = vunpack.c.l.b16 %v2035
      %v2061 = vpack.c.b16 %v2054, %v2053
      %v2062 = vpack.c.b16 %v2056, %v2055
      %v2063 = vpack.c.b16 %v2058, %v2057
      %v2064 = vpack.c.b16 %v2060, %v2059
      %v2085 = vunpack.c.l.b16 %v2037
      %v2086 = vunpack.c.l.b16 %v2038
      %v2087 = vunpack.c.l.b16 %v2039
      %v2088 = vunpack.c.l.b16 %v2040
      %v2089 = vunpack.c.l.b16 %v2041
      %v2090 = vunpack.c.l.b16 %v2042
      %v2091 = vunpack.c.l.b16 %v2043
      %v2092 = vunpack.c.l.b16 %v2044
      %v2093 = vunpack.c.l.b16 %v2045
      %v2094 = vunpack.c.l.b16 %v2046
      %v2095 = vunpack.c.l.b16 %v2047
      %v2096 = vunpack.c.l.b16 %v2048
      %v2097 = vunpack.c.l.b16 %v2049
      %v2098 = vunpack.c.l.b16 %v2050
      %v2099 = vunpack.c.l.b16 %v2051
      %v2100 = vunpack.c.l.b16 %v2052
      %v2101 = vpack.c.b16 %v2086, %v2085
      %v2102 = vpack.c.b16 %v2088, %v2087
      %v2103 = vpack.c.b16 %v2090, %v2089
      %v2104 = vpack.c.b16 %v2092, %v2091
      %v2105 = vpack.c.b16 %v2094, %v2093
      %v2106 = vpack.c.b16 %v2096, %v2095
      %v2107 = vpack.c.b16 %v2098, %v2097
      %v2108 = vpack.c.b16 %v2100, %v2099
      %2117 = vmatprep.subr.bf16.mxu0 0
      %2118 = vmatpush1.bf16.msra.mxu0 %v2108
      %2119 = vmatprep.subr.bf16.mxu0 0
      %2120 = vmatpush1.bf16.msra.mxu0 %v2107
      %2121 = vmatprep.subr.bf16.mxu0 0
      %2122 = vmatpush1.bf16.msra.mxu0 %v2106
      %2123 = vmatprep.subr.bf16.mxu0 0
      %2124 = vmatpush1.bf16.msra.mxu0 %v2105
      %2125 = vmatprep.subr.bf16.mxu0 0
      %2126 = vmatpush1.bf16.msra.mxu0 %v2104
      %2127 = vmatprep.subr.bf16.mxu0 0
      %2128 = vmatpush1.bf16.msra.mxu0 %v2103
      %2129 = vmatprep.subr.bf16.mxu0 0
      %2130 = vmatpush1.bf16.msra.mxu0 %v2102
      %2131 = vmatprep.subr.bf16.mxu0 0
      %2132 = vmatpush1.bf16.msra.mxu0 %v2101
      %2133 = vmatprep.subr.bf16.mxu0 0
      %2134 = vmatpush2.bf16.msra.mxu0 0
      %2135 = vmatprep.subr.bf16.mxu0 0
      %2136 = vmatpush2.bf16.msra.mxu0 0
      %2137 = vmatprep.subr.bf16.mxu0 0
      %2138 = vmatpush2.bf16.msra.mxu0 0
      %2139 = vmatprep.subr.bf16.mxu0 0
      %2140 = vmatpush2.bf16.msra.mxu0 0
      %2141 = vmatprep.subr.bf16.mxu0 0
      %2142 = vmatpush2.bf16.msra.mxu0 0
      %2143 = vmatprep.subr.bf16.mxu0 0
      %2144 = vmatpush2.bf16.msra.mxu0 0
      %2145 = vmatprep.subr.bf16.mxu0 0
      %2146 = vmatpush2.bf16.msra.mxu0 0
      %2147 = vmatprep.subr.bf16.mxu0 0
      %2148 = vmatpush2.bf16.msra.mxu0 0
      %2149 = vmatprep.mubr.bf16.mxu0 0
      %2150 = vmatmul.mubr.bf16.gmra.mxu0 %v2061
      %v2151 = vpop.f32.mrf.mxu0
      %v2152 = vadd.f32 0.0, %v2151
      %v2153 = vpop.f32.mrf.mxu0
      %v2154 = vpop.f32.mrf.mxu0
      %v2155 = vadd.f32 0.0, %v2154
      %v2156 = vpop.f32.mrf.mxu0
      %2157 = vmatprep.mubr.bf16.mxu0 0
      %2158 = vmatmul.mubr.bf16.gmra.mxu0 %v2062
      %v2159 = vpop.f32.mrf.mxu0
      %v2160 = vadd.f32 0.0, %v2159
      %v2161 = vpop.f32.mrf.mxu0
      %v2162 = vpop.f32.mrf.mxu0
      %v2163 = vadd.f32 0.0, %v2162
      %v2164 = vpop.f32.mrf.mxu0
      %2165 = vmatprep.mubr.bf16.mxu0 0
      %2166 = vmatmul.mubr.bf16.gmra.mxu0 %v2063
      %v2167 = vpop.f32.mrf.mxu0
      %v2168 = vadd.f32 0.0, %v2167
      %v2169 = vpop.f32.mrf.mxu0
      %v2170 = vpop.f32.mrf.mxu0
      %v2171 = vadd.f32 0.0, %v2170
      %v2172 = vpop.f32.mrf.mxu0
      %2173 = vmatprep.mubr.bf16.mxu0 0
      %2174 = vmatmul.mubr.bf16.gmra.mxu0 %v2064
      %v2175 = vpop.f32.mrf.mxu0
      %v2176 = vadd.f32 0.0, %v2175
      %v2177 = vpop.f32.mrf.mxu0
      %v2178 = vpop.f32.mrf.mxu0
      %v2179 = vadd.f32 0.0, %v2178
      %v2180 = vpop.f32.mrf.mxu0
      %2181 = vdwg.mxu0
      %v2182 = vadd.f32 %v1972, %v2152
      %v2183 = vadd.f32 %v1973, %v2155
      %v2184 = vadd.f32 %v1974, %v2160
      %v2185 = vadd.f32 %v1975, %v2163
      %v2186 = vadd.f32 %v1976, %v2168
      %v2187 = vadd.f32 %v1977, %v2171
      %v2188 = vadd.f32 %v1978, %v2176
      %v2189 = vadd.f32 %v1979, %v2179
      %v2190 = vpack.c.bf16 %v2183, %v2182
      %v2191 = vpack.c.bf16 %v2185, %v2184
      %v2192 = vpack.c.bf16 %v2187, %v2186
      %v2193 = vpack.c.bf16 %v2189, %v2188
      %v2198 = vunpack.c.l.b16 %v2190
      %v2199 = vunpack.c.h.b16 %v2190
      %v2200 = vunpack.c.l.b16 %v2191
      %v2201 = vunpack.c.h.b16 %v2191
      %v2202 = vunpack.c.l.b16 %v2192
      %v2203 = vunpack.c.h.b16 %v2192
      %v2204 = vunpack.c.l.b16 %v2193
      %v2205 = vunpack.c.h.b16 %v2193
      %v2206 = vpack.c.b16 %v2198, %v2198
      %v2207 = vpack.c.b16 %v2199, %v2199
      %v2208 = vpack.c.b16 %v2200, %v2200
      %v2209 = vpack.c.b16 %v2201, %v2201
      %v2210 = vpack.c.b16 %v2202, %v2202
      %v2211 = vpack.c.b16 %v2203, %v2203
      %v2212 = vpack.c.b16 %v2204, %v2204
      %v2213 = vpack.c.b16 %v2205, %v2205
      %2222 = vst [vmem:[%s202] sm:$0xf] %v2206
      %2223 = vst [vmem:[%s202 + $0x4] sm:$0xf] %v2207
      %2224 = vst [vmem:[%s202 + $0x8] sm:$0xf] %v2208
      %2225 = vst [vmem:[%s202 + $0xc] sm:$0xf] %v2209
      %2226 = vst [vmem:[%s202 + $0x10] sm:$0xf] %v2210
      %2227 = vst [vmem:[%s202 + $0x14] sm:$0xf] %v2211
      %2228 = vst [vmem:[%s202 + $0x18] sm:$0xf] %v2212
      %2229 = vst [vmem:[%s202 + $0x1c] sm:$0xf] %v2213
      %v2230 = vadd.f32 %v2182, %v2183
      %v2231 = vadd.f32 %v2230, %v2184
      %v2232 = vadd.f32 %v2231, %v2185
      %v2233 = vadd.f32 %v2232, %v2186
      %v2234 = vadd.f32 %v2233, %v2187
      %v2235 = vadd.f32 %v2234, %v2188
      %v2236 = vadd.f32 %v2235, %v2189
      %v2237 = vrot.slane %v2236, 4
      %v2238 = vadd.f32 %v2236, %v2237
      %v2239 = vrot.slane %v2238, 2
      %v2240 = vadd.f32 %v2238, %v2239
      %v2241 = vrot.slane %v2240, 1
      %v2242 = vadd.f32 %v2240, %v2241
      %v2243 = vmul.f32 %v2182, %v2182
      %v2244 = vmul.f32 %v2183, %v2183
      %v2245 = vmul.f32 %v2184, %v2184
      %v2246 = vmul.f32 %v2185, %v2185
      %v2247 = vmul.f32 %v2186, %v2186
      %v2248 = vmul.f32 %v2187, %v2187
      %v2249 = vmul.f32 %v2188, %v2188
      %v2250 = vmul.f32 %v2189, %v2189
      %v2251 = vadd.f32 %v2243, %v2244
      %v2252 = vadd.f32 %v2251, %v2245
      %v2253 = vadd.f32 %v2252, %v2246
      %v2254 = vadd.f32 %v2253, %v2247
      %v2255 = vadd.f32 %v2254, %v2248
      %v2256 = vadd.f32 %v2255, %v2249
      %v2257 = vadd.f32 %v2256, %v2250
      %v2258 = vrot.slane %v2257, 4
      %v2259 = vadd.f32 %v2257, %v2258
      %v2260 = vrot.slane %v2259, 2
      %v2261 = vadd.f32 %v2259, %v2260
      %v2262 = vrot.slane %v2261, 1
      %v2263 = vadd.f32 %v2261, %v2262
      %vm2264 = vcmask 1040384
      %v2265 = vsel %vm2264, %v2242, %v2263
      %vm2266 = vcmask 1041408
      %v2267 = vsel %vm2266, %v2265, 0.0
      %2268 = vst [vmem:[%s208] sm:$0xff] %v2267
      %s2269 = smul.u32 8, %s20
      %p2270 = scmp.lt.s32.totalorder %s19, 1
      %s2271 = scalar_select %p2270, %s19, 1
      %p2272 = scmp.lt.s32.totalorder %s2269, 7
      %s2273 = scalar_select %p2272, %s2269, 7
      %s2274 = smul.addr %s2271, 8
      %s2275 = sadd.s32 %s2273, %s2274
      %s2276 = smul.addr %s2275, 4
      %s2277 = scalar_lea.vmem %s2, %s2276
      %s2278 = sadd.s32 %s19, %s20
      %p2279 = scmp.lt.s32.totalorder %s2278, 1
      %s2280 = scalar_select %p2279, %s2278, 1
      %s2281 = smul.addr %s2280, 8
      %s2282 = scalar_lea.vmem %s3, %s2281
      // Predicated region
      $region29: #{basic_block_forward.6} parent=27 // pred_check
        %p2283 = pneg %p94
      $region30: #{basic_block_forward.6} parent=27 // pred_check_branch
        %2285 = sbr.rel (%p2283) target = $region32
      $region31: #{basic_block_forward.6} parent=27 // pred_region
        %s2286 = smul.u32 8, %s20
      $region32: #{basic_block_forward.6} parent=27 // pred_fallthru
        _
      // Predicated region
      $region33: #{basic_block_forward.6} parent=27 // pred_check
        %p2287 = pneg %p122
      $region34: #{basic_block_forward.6} parent=27 // pred_check_branch
        %2289 = sbr.rel (%p2287) target = $region36
      $region35: #{basic_block_forward.6} parent=27 // pred_region
        %s2290 = sadd.s32 %s19, %s20
      $region36: #{basic_block_forward.6} parent=27 // pred_fallthru
        _
    $region28: #{basic_block_forward.6} parent=5 // pred_fallthru
      _
    %p2291 = scmp.le.s32.totalorder 2, %s10
    // Predicated region
    $region37: #{basic_block_forward.6} parent=5 // pred_check
      %p2292 = pneg %p2291
    $region38: #{basic_block_forward.6} parent=5 // pred_check_branch
      %2294 = sbr.rel (%p2292) target = $region40
    $region39: #{basic_block_forward.6} parent=5 // pred_region
      %s2295 = ssub.s32 %s10, 2
      // Predicated region
      $region41: #{basic_block_forward.6} parent=39 // pred_check
        %p2296 = pneg %p100
      $region42: #{basic_block_forward.6} parent=39 // pred_check_branch
        %2298 = sbr.rel (%p2296) target = $region44
      $region43: #{basic_block_forward.6} parent=39 // pred_region
        %s2299 = smul.u32 8, %s22
        %p2300 = scmp.lt.s32.totalorder %s21, 1
        %s2301 = scalar_select %p2300, %s21, 1
        %p2302 = scmp.lt.s32.totalorder %s2299, 7
        %s2303 = scalar_select %p2302, %s2299, 7
        %s2304 = smul.addr %s2301, 8
        %s2305 = sadd.s32 %s2303, %s2304
        %s2306 = smul.addr %s2305, 4
        %s2307 = scalar_lea.vmem %s2, %s2306
      $region44: #{basic_block_forward.6} parent=39 // pred_fallthru
        _
      // Predicated region
      $region45: #{basic_block_forward.6} parent=39 // pred_check
        %p2308 = pneg %p128
      $region46: #{basic_block_forward.6} parent=39 // pred_check_branch
        %2310 = sbr.rel (%p2308) target = $region48
      $region47: #{basic_block_forward.6} parent=39 // pred_region
        %s2311 = sadd.s32 %s21, %s22
        %p2312 = scmp.lt.s32.totalorder %s2311, 1
        %s2313 = scalar_select %p2312, %s2311, 1
        %s2314 = smul.addr %s2313, 8
        %s2315 = scalar_lea.vmem %s3, %s2314
      $region48: #{basic_block_forward.6} parent=39 // pred_fallthru
        _
    $region40: #{basic_block_forward.6} parent=5 // pred_fallthru
      _
  $region6: #{basic_block_forward.6} parent=0 // loop_footer
    %s14 = sadd.s32 1, %s10
  $region7: #{basic_block_forward.6} parent=0 // loop_footer_branch
    %9 = sbr.rel target = $region3
  $region8: #{basic_block_forward.6} parent=0 // loop_exit
    _

</llo_original>
